<compile_context>
chip_gen: v7x
topology: tpu7x:2x2x1
jax: 0.10.0
libtpu: 0.0.40
codegen_flags: <defaults>
</compile_context>

<pallas_src>
import functools

import jax
import jax.numpy as jnp
import numpy as np
from jax.experimental import pallas as pl
from jax.experimental.pallas import tpu as pltpu

EPS = 1e-5
C = 16  # channels everywhere after conv1


# ----------------------------- fused kernel --------------------------------

def model3_kernel(x_ref, t1_ref, t2_ref, t3_ref, t4_ref, fcw_ref, b_ref, o_ref,
                  *, tb):
    """One grid step == `tb` samples; all intermediates stay on-chip.

    Feature-map layout: 2-D (H*tb, W*C) -- spatial-row-major / batch-minor on
    sublanes, (x, channel) flattened on lanes (lane-dense).
    """

    def conv_relu(fmap, ho, t_ref, bias=None):
        # 3x3 VALID conv == 3 accumulated MXU matmuls (one per kernel row dy).
        acc = None
        for dy in range(3):
            lhs = fmap[dy * tb:(dy + ho) * tb, :]                 # (ho*tb, K)
            part = jnp.dot(lhs, t_ref[dy], preferred_element_type=jnp.float32)
            acc = part if acc is None else acc + part
        if bias is not None:
            acc = acc + bias                                      # folded BN bias
        return jnp.maximum(acc, 0.0)                              # ReLU

    def maxpool2(fmap, hp):
        # 2x2 / stride-2 max pool (floor mode).  H is subsampled here via
        # aligned sublane slices; the W subsampling is folded into the next
        # layer's Toeplitz matrix (its odd lane-group rows are zero), so only a
        # pairwise 16-lane-shifted max is needed along lanes.
        lanes = fmap.shape[-1]
        rows = []
        for yp in range(hp):
            r0 = fmap[(2 * yp) * tb:(2 * yp + 1) * tb, :]
            r1 = fmap[(2 * yp + 1) * tb:(2 * yp + 2) * tb, :]
            hm = jnp.maximum(r0, r1)                              # pool along H
            rows.append(jnp.maximum(hm[:, :lanes - C], hm[:, C:]))  # along W
        return jnp.concatenate(rows, axis=0)                      # (hp*tb, lanes-C)

    biases = b_ref[...]                                           # (4, 176)

    x = x_ref[...].reshape(28 * tb, 28)                           # y-major / b-minor
    # convblock1: Conv(1->16) ReLU | MaxPool | (BN1, Dropout folded/identity)
    r1 = conv_relu(x, 26, t1_ref)                                 # (26*tb, 416)
    p1 = maxpool2(r1, 13)                                         # (13*tb, 400)
    # convblock2: Conv ReLU | MaxPool | (BN2 folded forward)
    r2 = conv_relu(p1, 11, t2_ref, biases[0:1, 0:176])            # (11*tb, 176)
    p2 = maxpool2(r2, 5)                                          # (5*tb, 160)
    # convblock3 / convblock4: Conv ReLU (BN folded into next layer's weights)
    r3 = conv_relu(p2, 3, t3_ref, biases[1:2, 0:48])              # (3*tb, 48)
    r4 = conv_relu(r3, 1, t4_ref, biases[2:3, 0:16])              # (tb, 16)

    # flatten (1x1 spatial) -> fc1 (+folded BN4) -> ReLU -> log_softmax
    y = jnp.dot(r4, fcw_ref[...], preferred_element_type=jnp.float32)
    y = jnp.maximum(y + biases[3:4, 0:10], 0.0)
    z = y - jnp.max(y, axis=-1, keepdims=True)
    o_ref[...] = z - jnp.log(jnp.sum(jnp.exp(z), axis=-1, keepdims=True))


# ----------------------------- weight preparation ---------------------------

def _toeplitz_stack(w, wout, groups, stride):
    """(3,3,Cin,Cout) conv weight -> (3, groups*Cin, wout*Cout) per-dy matrices.

    Row (g*Cin + ci) of T[dy] holds w[dy, dx, ci, :] in output column block x
    whenever g == stride*(x+dx); all other rows are zero.  stride == 2 folds
    the previous MaxPool's W-subsampling into the conv.
    """
    cin, cout = w.shape[2], w.shape[3]
    sel = np.zeros((3, wout, groups), np.float32)
    for dx in range(3):
        for x in range(wout):
            sel[dx, x, stride * (x + dx)] = 1.0
    t = jnp.einsum('axg,daio->dgixo', jnp.asarray(sel), w,
                   precision=jax.lax.Precision.HIGHEST)
    return t.reshape(3, groups * cin, wout * cout)


def _prepare(p):
    """Fold eval-mode BatchNorms into the next layer; build Toeplitz stacks."""
    s1, b1 = p['bn1_s'], p['bn1_b']
    s2, b2 = p['bn2_s'], p['bn2_b']
    s3, b3 = p['bn3_s'], p['bn3_b']
    s4, b4 = p['bn4_s'], p['bn4_b']
    scale_in = lambda w, s: w * s[None, None, :, None]
    fold_bias = lambda w, b: (w * b[None, None, :, None]).sum(axis=(0, 1, 2))

    t1 = _toeplitz_stack(p['w1'], 26, 28, 1)                      # (3, 28, 416)
    t2 = _toeplitz_stack(scale_in(p['w2'], s1), 11, 25, 2)        # (3, 400, 176)
    t3 = _toeplitz_stack(scale_in(p['w3'], s2), 3, 10, 2)         # (3, 160, 48)
    t4 = _toeplitz_stack(scale_in(p['w4'], s3), 1, 3, 1)          # (3, 48, 16)

    cb2 = jnp.tile(fold_bias(p['w2'], b1), 11)                    # (176,)
    cb3 = jnp.tile(fold_bias(p['w3'], b2), 3)                     # (48,)
    cb4 = fold_bias(p['w4'], b3)                                  # (16,)
    fcw = s4[:, None] * p['fc1_w']                                # (16, 10)
    fb = p['fc1_b'] + (b4[:, None] * p['fc1_w']).sum(axis=0)      # (10,)

    pad = lambda v: jnp.pad(v, (0, 176 - v.shape[0]))
    bpack = jnp.stack([pad(cb2), pad(cb3), pad(cb4), pad(fb)])    # (4, 176)
    return t1, t2, t3, t4, fcw, bpack


# ----------------------------- wrapper --------------------------------------

def model3_forward(x_nchw, p, *, block_b=8):
    b = x_nchw.shape[0]
    x = x_nchw.astype(jnp.float32).reshape(b, 28, 28)             # channel dim == 1
    bp = pl.cdiv(b, block_b) * block_b
    if bp != b:
        x = jnp.pad(x, ((0, bp - b), (0, 0), (0, 0)))
    x_hbw = jnp.transpose(x, (1, 0, 2))                           # (28, Bp, 28): W in lanes

    t1, t2, t3, t4, fcw, bpack = _prepare(p)

    fixed = lambda a: pl.BlockSpec(a.shape, lambda i, _n=a.ndim: (0,) * _n)
    kernel = functools.partial(model3_kernel, tb=block_b)

    out = pl.pallas_call(
        kernel,
        out_shape=jax.ShapeDtypeStruct((bp, 10), jnp.float32),
        grid=(bp // block_b,),
        in_specs=[pl.BlockSpec((28, block_b, 28), lambda i: (0, i, 0)),
                  fixed(t1), fixed(t2), fixed(t3), fixed(t4),
                  fixed(fcw), fixed(bpack)],
        out_specs=pl.BlockSpec((block_b, 10), lambda i: (i, 0)),
        compiler_params=pltpu.CompilerParams(
            dimension_semantics=("parallel",)),
        cost_estimate=pl.CostEstimate(flops=6_610_000 * bp,
                                      transcendentals=16 * bp,
                                      bytes_accessed=1_100_000 + 3_176 * bp),
    )(x_hbw, t1, t2, t3, t4, fcw, bpack)
    return out[:b]


# ----------------------------- params / reference ---------------------------

def init_params(key):
    ks = jax.random.split(key, 10)

    def conv_w(k, cin, cout):
        fan_in = 3 * 3 * cin
        return jax.random.normal(k, (3, 3, cin, cout), jnp.float32) / jnp.sqrt(fan_in)

    def bn(k, c):
        k1, k2, k3, k4 = jax.random.split(k, 4)
        gamma = 1.0 + 0.1 * jax.random.normal(k1, (c,), jnp.float32)
        beta = 0.1 * jax.random.normal(k2, (c,), jnp.float32)
        mean = 0.1 * jax.random.normal(k3, (c,), jnp.float32)
        var = 1.0 + 0.1 * jnp.abs(jax.random.normal(k4, (c,), jnp.float32))
        scale = gamma / jnp.sqrt(var + EPS)
        bias = beta - mean * scale
        return scale, bias

    p = {'w1': conv_w(ks[0], 1, 16), 'w2': conv_w(ks[1], 16, 16),
         'w3': conv_w(ks[2], 16, 16), 'w4': conv_w(ks[3], 16, 16)}
    for i, k in zip((1, 2, 3, 4), ks[4:8]):
        s, sh = bn(k, 16)
        p[f'bn{i}_s'], p[f'bn{i}_b'] = s, sh
    p['fc1_w'] = jax.random.normal(ks[8], (16, 10), jnp.float32) / jnp.sqrt(16.0)
    p['fc1_b'] = 0.1 * jax.random.normal(ks[9], (10,), jnp.float32)
    return p


def ref_forward(x_nchw, p):
    """Pure-JAX reference (eval-mode semantics) for verification."""
    x = jnp.transpose(x_nchw, (0, 2, 3, 1)).astype(jnp.float32)
    conv = lambda a, w: jax.lax.conv_general_dilated(
        a, w, (1, 1), 'VALID', dimension_numbers=('NHWC', 'HWIO', 'NHWC'),
        precision=jax.lax.Precision.HIGHEST)
    pool = lambda a: jax.lax.reduce_window(
        a, -jnp.inf, jax.lax.max, (1, 2, 2, 1), (1, 2, 2, 1), 'VALID')
    y = pool(jnp.maximum(conv(x, p['w1']), 0.0)) * p['bn1_s'] + p['bn1_b']
    y = pool(jnp.maximum(conv(y, p['w2']), 0.0)) * p['bn2_s'] + p['bn2_b']
    y = jnp.maximum(conv(y, p['w3']), 0.0) * p['bn3_s'] + p['bn3_b']
    y = jnp.maximum(conv(y, p['w4']), 0.0) * p['bn4_s'] + p['bn4_b']
    y = y.reshape(y.shape[0], -1)
    y = jnp.maximum(jnp.dot(y, p['fc1_w'],
                            precision=jax.lax.Precision.HIGHEST) + p['fc1_b'], 0.0)
    return jax.nn.log_softmax(y, axis=-1)


if __name__ == "__main__":
    key = jax.random.PRNGKey(0)
    kx, kp = jax.random.split(key)
    # PyTorch-convention NCHW input; Linear(16, 10) forces 28x28 spatial.
    x = jax.random.normal(kx, (2, 1, 28, 28), jnp.float32)
    params = init_params(kp)

    fwd = jax.jit(model3_forward, static_argnames=("block_b",))
    out = jax.block_until_ready(fwd(x, params))

    ref = ref_forward(x, params)
    assert out.shape == (2, 10)
    assert bool(jnp.all(jnp.isfinite(out)))
    assert jnp.allclose(out, ref, atol=1e-3, rtol=1e-3), \
        "Pallas output mismatch vs JAX reference"
    print("KERNEL_OK")
</pallas_src>

<mosaic_0001>
module attributes {stable_mosaic.version = 11 : i64} {
  func.func @model3_kernel(%arg0: i32, %arg1: memref<28x8x28xf32, #tpu.memory_space<vmem>>, %arg2: memref<3x28x416xf32, #tpu.memory_space<vmem>>, %arg3: memref<3x400x176xf32, #tpu.memory_space<vmem>>, %arg4: memref<3x160x48xf32, #tpu.memory_space<vmem>>, %arg5: memref<3x48x16xf32, #tpu.memory_space<vmem>>, %arg6: memref<16x10xf32, #tpu.memory_space<vmem>>, %arg7: memref<4x176xf32, #tpu.memory_space<vmem>>, %arg8: memref<8x10xf32, #tpu.memory_space<vmem>>) attributes {dimension_semantics = [#tpu.dimension_semantics<parallel>], iteration_bounds = array<i64: 1>, scalar_prefetch = 0 : i64, scratch_operands = 0 : i64, tpu.core_type = #tpu.core_type<tc>, window_params = [{transform_indices = @transform_0, window_bounds = array<i64: 28, 8, 28>}, {pipeline_mode = #tpu.pipeline_mode<synchronous>, transform_indices = @transform_1, window_bounds = array<i64: 3, 28, 416>}, {pipeline_mode = #tpu.pipeline_mode<synchronous>, transform_indices = @transform_2, window_bounds = array<i64: 3, 400, 176>}, {pipeline_mode = #tpu.pipeline_mode<synchronous>, transform_indices = @transform_3, window_bounds = array<i64: 3, 160, 48>}, {pipeline_mode = #tpu.pipeline_mode<synchronous>, transform_indices = @transform_4, window_bounds = array<i64: 3, 48, 16>}, {pipeline_mode = #tpu.pipeline_mode<synchronous>, transform_indices = @transform_5, window_bounds = array<i64: 16, 10>}, {pipeline_mode = #tpu.pipeline_mode<synchronous>, transform_indices = @transform_6, window_bounds = array<i64: 4, 176>}, {transform_indices = @transform_7, window_bounds = array<i64: 8, 10>}]} {
    %c0 = arith.constant 0 : index
    %c0_0 = arith.constant 0 : index
    %0 = vector.load %arg7[%c0, %c0_0] : memref<4x176xf32, #tpu.memory_space<vmem>>, vector<4x176xf32>
    %c0_1 = arith.constant 0 : index
    %c0_2 = arith.constant 0 : index
    %c0_3 = arith.constant 0 : index
    %1 = vector.load %arg1[%c0_1, %c0_2, %c0_3] : memref<28x8x28xf32, #tpu.memory_space<vmem>>, vector<28x8x28xf32>
    %2 = vector.shape_cast %1 : vector<28x8x28xf32> to vector<224x28xf32>
    %3 = vector.extract_strided_slice %2 {offsets = [0, 0], sizes = [208, 28], strides = [1, 1]} : vector<224x28xf32> to vector<208x28xf32>
    %c0_4 = arith.constant 0 : index
    %c0_5 = arith.constant 0 : index
    %c0_6 = arith.constant 0 : index
    %4 = vector.load %arg2[%c0_4, %c0_5, %c0_6] : memref<3x28x416xf32, #tpu.memory_space<vmem>>, vector<1x28x416xf32>
    %5 = vector.shape_cast %4 : vector<1x28x416xf32> to vector<28x416xf32>
    %cst = arith.constant dense<0.000000e+00> : vector<208x416xf32>
    %6 = tpu.matmul %3, %5, %cst {dimension_numbers = #tpu.dot_dimension_numbers<[1], [0], [0], [1], [0, 0, 1, 1], [], []>} : vector<208x28xf32>, vector<28x416xf32>, vector<208x416xf32> -> vector<208x416xf32>
    %7 = vector.extract_strided_slice %2 {offsets = [8, 0], sizes = [208, 28], strides = [1, 1]} : vector<224x28xf32> to vector<208x28xf32>
    %c1 = arith.constant 1 : index
    %c0_7 = arith.constant 0 : index
    %c0_8 = arith.constant 0 : index
    %8 = vector.load %arg2[%c1, %c0_7, %c0_8] : memref<3x28x416xf32, #tpu.memory_space<vmem>>, vector<1x28x416xf32>
    %9 = vector.shape_cast %8 : vector<1x28x416xf32> to vector<28x416xf32>
    %cst_9 = arith.constant dense<0.000000e+00> : vector<208x416xf32>
    %10 = tpu.matmul %7, %9, %cst_9 {dimension_numbers = #tpu.dot_dimension_numbers<[1], [0], [0], [1], [0, 0, 1, 1], [], []>} : vector<208x28xf32>, vector<28x416xf32>, vector<208x416xf32> -> vector<208x416xf32>
    %11 = arith.addf %6, %10 : vector<208x416xf32>
    %12 = vector.extract_strided_slice %2 {offsets = [16, 0], sizes = [208, 28], strides = [1, 1]} : vector<224x28xf32> to vector<208x28xf32>
    %c2 = arith.constant 2 : index
    %c0_10 = arith.constant 0 : index
    %c0_11 = arith.constant 0 : index
    %13 = vector.load %arg2[%c2, %c0_10, %c0_11] : memref<3x28x416xf32, #tpu.memory_space<vmem>>, vector<1x28x416xf32>
    %14 = vector.shape_cast %13 : vector<1x28x416xf32> to vector<28x416xf32>
    %cst_12 = arith.constant dense<0.000000e+00> : vector<208x416xf32>
    %15 = tpu.matmul %12, %14, %cst_12 {dimension_numbers = #tpu.dot_dimension_numbers<[1], [0], [0], [1], [0, 0, 1, 1], [], []>} : vector<208x28xf32>, vector<28x416xf32>, vector<208x416xf32> -> vector<208x416xf32>
    %16 = arith.addf %11, %15 : vector<208x416xf32>
    %cst_13 = arith.constant 0.000000e+00 : f32
    %17 = vector.broadcast %cst_13 : f32 to vector<208x416xf32>
    %18 = arith.maximumf %16, %17 : vector<208x416xf32>
    %19 = vector.extract_strided_slice %18 {offsets = [0, 0], sizes = [8, 416], strides = [1, 1]} : vector<208x416xf32> to vector<8x416xf32>
    %20 = vector.extract_strided_slice %18 {offsets = [8, 0], sizes = [8, 416], strides = [1, 1]} : vector<208x416xf32> to vector<8x416xf32>
    %21 = arith.maximumf %19, %20 : vector<8x416xf32>
    %22 = vector.extract_strided_slice %21 {offsets = [0, 0], sizes = [8, 400], strides = [1, 1]} : vector<8x416xf32> to vector<8x400xf32>
    %23 = vector.extract_strided_slice %21 {offsets = [0, 16], sizes = [8, 400], strides = [1, 1]} : vector<8x416xf32> to vector<8x400xf32>
    %24 = arith.maximumf %22, %23 : vector<8x400xf32>
    %25 = vector.extract_strided_slice %18 {offsets = [16, 0], sizes = [8, 416], strides = [1, 1]} : vector<208x416xf32> to vector<8x416xf32>
    %26 = vector.extract_strided_slice %18 {offsets = [24, 0], sizes = [8, 416], strides = [1, 1]} : vector<208x416xf32> to vector<8x416xf32>
    %27 = arith.maximumf %25, %26 : vector<8x416xf32>
    %28 = vector.extract_strided_slice %27 {offsets = [0, 0], sizes = [8, 400], strides = [1, 1]} : vector<8x416xf32> to vector<8x400xf32>
    %29 = vector.extract_strided_slice %27 {offsets = [0, 16], sizes = [8, 400], strides = [1, 1]} : vector<8x416xf32> to vector<8x400xf32>
    %30 = arith.maximumf %28, %29 : vector<8x400xf32>
    %31 = vector.extract_strided_slice %18 {offsets = [32, 0], sizes = [8, 416], strides = [1, 1]} : vector<208x416xf32> to vector<8x416xf32>
    %32 = vector.extract_strided_slice %18 {offsets = [40, 0], sizes = [8, 416], strides = [1, 1]} : vector<208x416xf32> to vector<8x416xf32>
    %33 = arith.maximumf %31, %32 : vector<8x416xf32>
    %34 = vector.extract_strided_slice %33 {offsets = [0, 0], sizes = [8, 400], strides = [1, 1]} : vector<8x416xf32> to vector<8x400xf32>
    %35 = vector.extract_strided_slice %33 {offsets = [0, 16], sizes = [8, 400], strides = [1, 1]} : vector<8x416xf32> to vector<8x400xf32>
    %36 = arith.maximumf %34, %35 : vector<8x400xf32>
    %37 = vector.extract_strided_slice %18 {offsets = [48, 0], sizes = [8, 416], strides = [1, 1]} : vector<208x416xf32> to vector<8x416xf32>
    %38 = vector.extract_strided_slice %18 {offsets = [56, 0], sizes = [8, 416], strides = [1, 1]} : vector<208x416xf32> to vector<8x416xf32>
    %39 = arith.maximumf %37, %38 : vector<8x416xf32>
    %40 = vector.extract_strided_slice %39 {offsets = [0, 0], sizes = [8, 400], strides = [1, 1]} : vector<8x416xf32> to vector<8x400xf32>
    %41 = vector.extract_strided_slice %39 {offsets = [0, 16], sizes = [8, 400], strides = [1, 1]} : vector<8x416xf32> to vector<8x400xf32>
    %42 = arith.maximumf %40, %41 : vector<8x400xf32>
    %43 = vector.extract_strided_slice %18 {offsets = [64, 0], sizes = [8, 416], strides = [1, 1]} : vector<208x416xf32> to vector<8x416xf32>
    %44 = vector.extract_strided_slice %18 {offsets = [72, 0], sizes = [8, 416], strides = [1, 1]} : vector<208x416xf32> to vector<8x416xf32>
    %45 = arith.maximumf %43, %44 : vector<8x416xf32>
    %46 = vector.extract_strided_slice %45 {offsets = [0, 0], sizes = [8, 400], strides = [1, 1]} : vector<8x416xf32> to vector<8x400xf32>
    %47 = vector.extract_strided_slice %45 {offsets = [0, 16], sizes = [8, 400], strides = [1, 1]} : vector<8x416xf32> to vector<8x400xf32>
    %48 = arith.maximumf %46, %47 : vector<8x400xf32>
    %49 = vector.extract_strided_slice %18 {offsets = [80, 0], sizes = [8, 416], strides = [1, 1]} : vector<208x416xf32> to vector<8x416xf32>
    %50 = vector.extract_strided_slice %18 {offsets = [88, 0], sizes = [8, 416], strides = [1, 1]} : vector<208x416xf32> to vector<8x416xf32>
    %51 = arith.maximumf %49, %50 : vector<8x416xf32>
    %52 = vector.extract_strided_slice %51 {offsets = [0, 0], sizes = [8, 400], strides = [1, 1]} : vector<8x416xf32> to vector<8x400xf32>
    %53 = vector.extract_strided_slice %51 {offsets = [0, 16], sizes = [8, 400], strides = [1, 1]} : vector<8x416xf32> to vector<8x400xf32>
    %54 = arith.maximumf %52, %53 : vector<8x400xf32>
    %55 = vector.extract_strided_slice %18 {offsets = [96, 0], sizes = [8, 416], strides = [1, 1]} : vector<208x416xf32> to vector<8x416xf32>
    %56 = vector.extract_strided_slice %18 {offsets = [104, 0], sizes = [8, 416], strides = [1, 1]} : vector<208x416xf32> to vector<8x416xf32>
    %57 = arith.maximumf %55, %56 : vector<8x416xf32>
    %58 = vector.extract_strided_slice %57 {offsets = [0, 0], sizes = [8, 400], strides = [1, 1]} : vector<8x416xf32> to vector<8x400xf32>
    %59 = vector.extract_strided_slice %57 {offsets = [0, 16], sizes = [8, 400], strides = [1, 1]} : vector<8x416xf32> to vector<8x400xf32>
    %60 = arith.maximumf %58, %59 : vector<8x400xf32>
    %61 = vector.extract_strided_slice %18 {offsets = [112, 0], sizes = [8, 416], strides = [1, 1]} : vector<208x416xf32> to vector<8x416xf32>
    %62 = vector.extract_strided_slice %18 {offsets = [120, 0], sizes = [8, 416], strides = [1, 1]} : vector<208x416xf32> to vector<8x416xf32>
    %63 = arith.maximumf %61, %62 : vector<8x416xf32>
    %64 = vector.extract_strided_slice %63 {offsets = [0, 0], sizes = [8, 400], strides = [1, 1]} : vector<8x416xf32> to vector<8x400xf32>
    %65 = vector.extract_strided_slice %63 {offsets = [0, 16], sizes = [8, 400], strides = [1, 1]} : vector<8x416xf32> to vector<8x400xf32>
    %66 = arith.maximumf %64, %65 : vector<8x400xf32>
    %67 = vector.extract_strided_slice %18 {offsets = [128, 0], sizes = [8, 416], strides = [1, 1]} : vector<208x416xf32> to vector<8x416xf32>
    %68 = vector.extract_strided_slice %18 {offsets = [136, 0], sizes = [8, 416], strides = [1, 1]} : vector<208x416xf32> to vector<8x416xf32>
    %69 = arith.maximumf %67, %68 : vector<8x416xf32>
    %70 = vector.extract_strided_slice %69 {offsets = [0, 0], sizes = [8, 400], strides = [1, 1]} : vector<8x416xf32> to vector<8x400xf32>
    %71 = vector.extract_strided_slice %69 {offsets = [0, 16], sizes = [8, 400], strides = [1, 1]} : vector<8x416xf32> to vector<8x400xf32>
    %72 = arith.maximumf %70, %71 : vector<8x400xf32>
    %73 = vector.extract_strided_slice %18 {offsets = [144, 0], sizes = [8, 416], strides = [1, 1]} : vector<208x416xf32> to vector<8x416xf32>
    %74 = vector.extract_strided_slice %18 {offsets = [152, 0], sizes = [8, 416], strides = [1, 1]} : vector<208x416xf32> to vector<8x416xf32>
    %75 = arith.maximumf %73, %74 : vector<8x416xf32>
    %76 = vector.extract_strided_slice %75 {offsets = [0, 0], sizes = [8, 400], strides = [1, 1]} : vector<8x416xf32> to vector<8x400xf32>
    %77 = vector.extract_strided_slice %75 {offsets = [0, 16], sizes = [8, 400], strides = [1, 1]} : vector<8x416xf32> to vector<8x400xf32>
    %78 = arith.maximumf %76, %77 : vector<8x400xf32>
    %79 = vector.extract_strided_slice %18 {offsets = [160, 0], sizes = [8, 416], strides = [1, 1]} : vector<208x416xf32> to vector<8x416xf32>
    %80 = vector.extract_strided_slice %18 {offsets = [168, 0], sizes = [8, 416], strides = [1, 1]} : vector<208x416xf32> to vector<8x416xf32>
    %81 = arith.maximumf %79, %80 : vector<8x416xf32>
    %82 = vector.extract_strided_slice %81 {offsets = [0, 0], sizes = [8, 400], strides = [1, 1]} : vector<8x416xf32> to vector<8x400xf32>
    %83 = vector.extract_strided_slice %81 {offsets = [0, 16], sizes = [8, 400], strides = [1, 1]} : vector<8x416xf32> to vector<8x400xf32>
    %84 = arith.maximumf %82, %83 : vector<8x400xf32>
    %85 = vector.extract_strided_slice %18 {offsets = [176, 0], sizes = [8, 416], strides = [1, 1]} : vector<208x416xf32> to vector<8x416xf32>
    %86 = vector.extract_strided_slice %18 {offsets = [184, 0], sizes = [8, 416], strides = [1, 1]} : vector<208x416xf32> to vector<8x416xf32>
    %87 = arith.maximumf %85, %86 : vector<8x416xf32>
    %88 = vector.extract_strided_slice %87 {offsets = [0, 0], sizes = [8, 400], strides = [1, 1]} : vector<8x416xf32> to vector<8x400xf32>
    %89 = vector.extract_strided_slice %87 {offsets = [0, 16], sizes = [8, 400], strides = [1, 1]} : vector<8x416xf32> to vector<8x400xf32>
    %90 = arith.maximumf %88, %89 : vector<8x400xf32>
    %91 = vector.extract_strided_slice %18 {offsets = [192, 0], sizes = [8, 416], strides = [1, 1]} : vector<208x416xf32> to vector<8x416xf32>
    %92 = vector.extract_strided_slice %18 {offsets = [200, 0], sizes = [8, 416], strides = [1, 1]} : vector<208x416xf32> to vector<8x416xf32>
    %93 = arith.maximumf %91, %92 : vector<8x416xf32>
    %94 = vector.extract_strided_slice %93 {offsets = [0, 0], sizes = [8, 400], strides = [1, 1]} : vector<8x416xf32> to vector<8x400xf32>
    %95 = vector.extract_strided_slice %93 {offsets = [0, 16], sizes = [8, 400], strides = [1, 1]} : vector<8x416xf32> to vector<8x400xf32>
    %96 = arith.maximumf %94, %95 : vector<8x400xf32>
    %97 = tpu.concatenate %24, %30, %36, %42, %48, %54, %60, %66, %72, %78, %84, %90, %96 in 0 : vector<8x400xf32>, vector<8x400xf32>, vector<8x400xf32>, vector<8x400xf32>, vector<8x400xf32>, vector<8x400xf32>, vector<8x400xf32>, vector<8x400xf32>, vector<8x400xf32>, vector<8x400xf32>, vector<8x400xf32>, vector<8x400xf32>, vector<8x400xf32> -> vector<104x400xf32>
    %98 = vector.extract_strided_slice %0 {offsets = [0, 0], sizes = [1, 176], strides = [1, 1]} : vector<4x176xf32> to vector<1x176xf32>
    %99 = vector.extract_strided_slice %97 {offsets = [0, 0], sizes = [88, 400], strides = [1, 1]} : vector<104x400xf32> to vector<88x400xf32>
    %c0_14 = arith.constant 0 : index
    %c0_15 = arith.constant 0 : index
    %c0_16 = arith.constant 0 : index
    %100 = vector.load %arg3[%c0_14, %c0_15, %c0_16] : memref<3x400x176xf32, #tpu.memory_space<vmem>>, vector<1x400x176xf32>
    %101 = vector.shape_cast %100 : vector<1x400x176xf32> to vector<400x176xf32>
    %cst_17 = arith.constant dense<0.000000e+00> : vector<88x176xf32>
    %102 = tpu.matmul %99, %101, %cst_17 {dimension_numbers = #tpu.dot_dimension_numbers<[1], [0], [0], [1], [0, 0, 1, 1], [], []>} : vector<88x400xf32>, vector<400x176xf32>, vector<88x176xf32> -> vector<88x176xf32>
    %103 = vector.extract_strided_slice %97 {offsets = [8, 0], sizes = [88, 400], strides = [1, 1]} : vector<104x400xf32> to vector<88x400xf32>
    %c1_18 = arith.constant 1 : index
    %c0_19 = arith.constant 0 : index
    %c0_20 = arith.constant 0 : index
    %104 = vector.load %arg3[%c1_18, %c0_19, %c0_20] : memref<3x400x176xf32, #tpu.memory_space<vmem>>, vector<1x400x176xf32>
    %105 = vector.shape_cast %104 : vector<1x400x176xf32> to vector<400x176xf32>
    %cst_21 = arith.constant dense<0.000000e+00> : vector<88x176xf32>
    %106 = tpu.matmul %103, %105, %cst_21 {dimension_numbers = #tpu.dot_dimension_numbers<[1], [0], [0], [1], [0, 0, 1, 1], [], []>} : vector<88x400xf32>, vector<400x176xf32>, vector<88x176xf32> -> vector<88x176xf32>
    %107 = arith.addf %102, %106 : vector<88x176xf32>
    %108 = vector.extract_strided_slice %97 {offsets = [16, 0], sizes = [88, 400], strides = [1, 1]} : vector<104x400xf32> to vector<88x400xf32>
    %c2_22 = arith.constant 2 : index
    %c0_23 = arith.constant 0 : index
    %c0_24 = arith.constant 0 : index
    %109 = vector.load %arg3[%c2_22, %c0_23, %c0_24] : memref<3x400x176xf32, #tpu.memory_space<vmem>>, vector<1x400x176xf32>
    %110 = vector.shape_cast %109 : vector<1x400x176xf32> to vector<400x176xf32>
    %cst_25 = arith.constant dense<0.000000e+00> : vector<88x176xf32>
    %111 = tpu.matmul %108, %110, %cst_25 {dimension_numbers = #tpu.dot_dimension_numbers<[1], [0], [0], [1], [0, 0, 1, 1], [], []>} : vector<88x400xf32>, vector<400x176xf32>, vector<88x176xf32> -> vector<88x176xf32>
    %112 = arith.addf %107, %111 : vector<88x176xf32>
    %113 = vector.broadcast %98 : vector<1x176xf32> to vector<88x176xf32>
    %114 = arith.addf %112, %113 : vector<88x176xf32>
    %cst_26 = arith.constant 0.000000e+00 : f32
    %115 = vector.broadcast %cst_26 : f32 to vector<88x176xf32>
    %116 = arith.maximumf %114, %115 : vector<88x176xf32>
    %117 = vector.extract_strided_slice %116 {offsets = [0, 0], sizes = [8, 176], strides = [1, 1]} : vector<88x176xf32> to vector<8x176xf32>
    %118 = vector.extract_strided_slice %116 {offsets = [8, 0], sizes = [8, 176], strides = [1, 1]} : vector<88x176xf32> to vector<8x176xf32>
    %119 = arith.maximumf %117, %118 : vector<8x176xf32>
    %120 = vector.extract_strided_slice %119 {offsets = [0, 0], sizes = [8, 160], strides = [1, 1]} : vector<8x176xf32> to vector<8x160xf32>
    %121 = vector.extract_strided_slice %119 {offsets = [0, 16], sizes = [8, 160], strides = [1, 1]} : vector<8x176xf32> to vector<8x160xf32>
    %122 = arith.maximumf %120, %121 : vector<8x160xf32>
    %123 = vector.extract_strided_slice %116 {offsets = [16, 0], sizes = [8, 176], strides = [1, 1]} : vector<88x176xf32> to vector<8x176xf32>
    %124 = vector.extract_strided_slice %116 {offsets = [24, 0], sizes = [8, 176], strides = [1, 1]} : vector<88x176xf32> to vector<8x176xf32>
    %125 = arith.maximumf %123, %124 : vector<8x176xf32>
    %126 = vector.extract_strided_slice %125 {offsets = [0, 0], sizes = [8, 160], strides = [1, 1]} : vector<8x176xf32> to vector<8x160xf32>
    %127 = vector.extract_strided_slice %125 {offsets = [0, 16], sizes = [8, 160], strides = [1, 1]} : vector<8x176xf32> to vector<8x160xf32>
    %128 = arith.maximumf %126, %127 : vector<8x160xf32>
    %129 = vector.extract_strided_slice %116 {offsets = [32, 0], sizes = [8, 176], strides = [1, 1]} : vector<88x176xf32> to vector<8x176xf32>
    %130 = vector.extract_strided_slice %116 {offsets = [40, 0], sizes = [8, 176], strides = [1, 1]} : vector<88x176xf32> to vector<8x176xf32>
    %131 = arith.maximumf %129, %130 : vector<8x176xf32>
    %132 = vector.extract_strided_slice %131 {offsets = [0, 0], sizes = [8, 160], strides = [1, 1]} : vector<8x176xf32> to vector<8x160xf32>
    %133 = vector.extract_strided_slice %131 {offsets = [0, 16], sizes = [8, 160], strides = [1, 1]} : vector<8x176xf32> to vector<8x160xf32>
    %134 = arith.maximumf %132, %133 : vector<8x160xf32>
    %135 = vector.extract_strided_slice %116 {offsets = [48, 0], sizes = [8, 176], strides = [1, 1]} : vector<88x176xf32> to vector<8x176xf32>
    %136 = vector.extract_strided_slice %116 {offsets = [56, 0], sizes = [8, 176], strides = [1, 1]} : vector<88x176xf32> to vector<8x176xf32>
    %137 = arith.maximumf %135, %136 : vector<8x176xf32>
    %138 = vector.extract_strided_slice %137 {offsets = [0, 0], sizes = [8, 160], strides = [1, 1]} : vector<8x176xf32> to vector<8x160xf32>
    %139 = vector.extract_strided_slice %137 {offsets = [0, 16], sizes = [8, 160], strides = [1, 1]} : vector<8x176xf32> to vector<8x160xf32>
    %140 = arith.maximumf %138, %139 : vector<8x160xf32>
    %141 = vector.extract_strided_slice %116 {offsets = [64, 0], sizes = [8, 176], strides = [1, 1]} : vector<88x176xf32> to vector<8x176xf32>
    %142 = vector.extract_strided_slice %116 {offsets = [72, 0], sizes = [8, 176], strides = [1, 1]} : vector<88x176xf32> to vector<8x176xf32>
    %143 = arith.maximumf %141, %142 : vector<8x176xf32>
    %144 = vector.extract_strided_slice %143 {offsets = [0, 0], sizes = [8, 160], strides = [1, 1]} : vector<8x176xf32> to vector<8x160xf32>
    %145 = vector.extract_strided_slice %143 {offsets = [0, 16], sizes = [8, 160], strides = [1, 1]} : vector<8x176xf32> to vector<8x160xf32>
    %146 = arith.maximumf %144, %145 : vector<8x160xf32>
    %147 = tpu.concatenate %122, %128, %134, %140, %146 in 0 : vector<8x160xf32>, vector<8x160xf32>, vector<8x160xf32>, vector<8x160xf32>, vector<8x160xf32> -> vector<40x160xf32>
    %148 = vector.extract_strided_slice %0 {offsets = [1, 0], sizes = [1, 48], strides = [1, 1]} : vector<4x176xf32> to vector<1x48xf32>
    %149 = vector.extract_strided_slice %147 {offsets = [0, 0], sizes = [24, 160], strides = [1, 1]} : vector<40x160xf32> to vector<24x160xf32>
    %c0_27 = arith.constant 0 : index
    %c0_28 = arith.constant 0 : index
    %c0_29 = arith.constant 0 : index
    %150 = vector.load %arg4[%c0_27, %c0_28, %c0_29] : memref<3x160x48xf32, #tpu.memory_space<vmem>>, vector<1x160x48xf32>
    %151 = vector.shape_cast %150 : vector<1x160x48xf32> to vector<160x48xf32>
    %cst_30 = arith.constant dense<0.000000e+00> : vector<24x48xf32>
    %152 = tpu.matmul %149, %151, %cst_30 {dimension_numbers = #tpu.dot_dimension_numbers<[1], [0], [0], [1], [0, 0, 1, 1], [], []>} : vector<24x160xf32>, vector<160x48xf32>, vector<24x48xf32> -> vector<24x48xf32>
    %153 = vector.extract_strided_slice %147 {offsets = [8, 0], sizes = [24, 160], strides = [1, 1]} : vector<40x160xf32> to vector<24x160xf32>
    %c1_31 = arith.constant 1 : index
    %c0_32 = arith.constant 0 : index
    %c0_33 = arith.constant 0 : index
    %154 = vector.load %arg4[%c1_31, %c0_32, %c0_33] : memref<3x160x48xf32, #tpu.memory_space<vmem>>, vector<1x160x48xf32>
    %155 = vector.shape_cast %154 : vector<1x160x48xf32> to vector<160x48xf32>
    %cst_34 = arith.constant dense<0.000000e+00> : vector<24x48xf32>
    %156 = tpu.matmul %153, %155, %cst_34 {dimension_numbers = #tpu.dot_dimension_numbers<[1], [0], [0], [1], [0, 0, 1, 1], [], []>} : vector<24x160xf32>, vector<160x48xf32>, vector<24x48xf32> -> vector<24x48xf32>
    %157 = arith.addf %152, %156 : vector<24x48xf32>
    %158 = vector.extract_strided_slice %147 {offsets = [16, 0], sizes = [24, 160], strides = [1, 1]} : vector<40x160xf32> to vector<24x160xf32>
    %c2_35 = arith.constant 2 : index
    %c0_36 = arith.constant 0 : index
    %c0_37 = arith.constant 0 : index
    %159 = vector.load %arg4[%c2_35, %c0_36, %c0_37] : memref<3x160x48xf32, #tpu.memory_space<vmem>>, vector<1x160x48xf32>
    %160 = vector.shape_cast %159 : vector<1x160x48xf32> to vector<160x48xf32>
    %cst_38 = arith.constant dense<0.000000e+00> : vector<24x48xf32>
    %161 = tpu.matmul %158, %160, %cst_38 {dimension_numbers = #tpu.dot_dimension_numbers<[1], [0], [0], [1], [0, 0, 1, 1], [], []>} : vector<24x160xf32>, vector<160x48xf32>, vector<24x48xf32> -> vector<24x48xf32>
    %162 = arith.addf %157, %161 : vector<24x48xf32>
    %163 = vector.broadcast %148 : vector<1x48xf32> to vector<24x48xf32>
    %164 = arith.addf %162, %163 : vector<24x48xf32>
    %cst_39 = arith.constant 0.000000e+00 : f32
    %165 = vector.broadcast %cst_39 : f32 to vector<24x48xf32>
    %166 = arith.maximumf %164, %165 : vector<24x48xf32>
    %167 = vector.extract_strided_slice %0 {offsets = [2, 0], sizes = [1, 16], strides = [1, 1]} : vector<4x176xf32> to vector<1x16xf32>
    %168 = vector.extract_strided_slice %166 {offsets = [0, 0], sizes = [8, 48], strides = [1, 1]} : vector<24x48xf32> to vector<8x48xf32>
    %c0_40 = arith.constant 0 : index
    %c0_41 = arith.constant 0 : index
    %c0_42 = arith.constant 0 : index
    %169 = vector.load %arg5[%c0_40, %c0_41, %c0_42] : memref<3x48x16xf32, #tpu.memory_space<vmem>>, vector<1x48x16xf32>
    %170 = vector.shape_cast %169 : vector<1x48x16xf32> to vector<48x16xf32>
    %cst_43 = arith.constant dense<0.000000e+00> : vector<8x16xf32>
    %171 = tpu.matmul %168, %170, %cst_43 {dimension_numbers = #tpu.dot_dimension_numbers<[1], [0], [0], [1], [0, 0, 1, 1], [], []>} : vector<8x48xf32>, vector<48x16xf32>, vector<8x16xf32> -> vector<8x16xf32>
    %172 = vector.extract_strided_slice %166 {offsets = [8, 0], sizes = [8, 48], strides = [1, 1]} : vector<24x48xf32> to vector<8x48xf32>
    %c1_44 = arith.constant 1 : index
    %c0_45 = arith.constant 0 : index
    %c0_46 = arith.constant 0 : index
    %173 = vector.load %arg5[%c1_44, %c0_45, %c0_46] : memref<3x48x16xf32, #tpu.memory_space<vmem>>, vector<1x48x16xf32>
    %174 = vector.shape_cast %173 : vector<1x48x16xf32> to vector<48x16xf32>
    %cst_47 = arith.constant dense<0.000000e+00> : vector<8x16xf32>
    %175 = tpu.matmul %172, %174, %cst_47 {dimension_numbers = #tpu.dot_dimension_numbers<[1], [0], [0], [1], [0, 0, 1, 1], [], []>} : vector<8x48xf32>, vector<48x16xf32>, vector<8x16xf32> -> vector<8x16xf32>
    %176 = arith.addf %171, %175 : vector<8x16xf32>
    %177 = vector.extract_strided_slice %166 {offsets = [16, 0], sizes = [8, 48], strides = [1, 1]} : vector<24x48xf32> to vector<8x48xf32>
    %c2_48 = arith.constant 2 : index
    %c0_49 = arith.constant 0 : index
    %c0_50 = arith.constant 0 : index
    %178 = vector.load %arg5[%c2_48, %c0_49, %c0_50] : memref<3x48x16xf32, #tpu.memory_space<vmem>>, vector<1x48x16xf32>
    %179 = vector.shape_cast %178 : vector<1x48x16xf32> to vector<48x16xf32>
    %cst_51 = arith.constant dense<0.000000e+00> : vector<8x16xf32>
    %180 = tpu.matmul %177, %179, %cst_51 {dimension_numbers = #tpu.dot_dimension_numbers<[1], [0], [0], [1], [0, 0, 1, 1], [], []>} : vector<8x48xf32>, vector<48x16xf32>, vector<8x16xf32> -> vector<8x16xf32>
    %181 = arith.addf %176, %180 : vector<8x16xf32>
    %182 = vector.broadcast %167 : vector<1x16xf32> to vector<8x16xf32>
    %183 = arith.addf %181, %182 : vector<8x16xf32>
    %cst_52 = arith.constant 0.000000e+00 : f32
    %184 = vector.broadcast %cst_52 : f32 to vector<8x16xf32>
    %185 = arith.maximumf %183, %184 : vector<8x16xf32>
    %c0_53 = arith.constant 0 : index
    %c0_54 = arith.constant 0 : index
    %186 = vector.load %arg6[%c0_53, %c0_54] : memref<16x10xf32, #tpu.memory_space<vmem>>, vector<16x10xf32>
    %cst_55 = arith.constant dense<0.000000e+00> : vector<8x10xf32>
    %187 = tpu.matmul %185, %186, %cst_55 {dimension_numbers = #tpu.dot_dimension_numbers<[1], [0], [0], [1], [0, 0, 1, 1], [], []>} : vector<8x16xf32>, vector<16x10xf32>, vector<8x10xf32> -> vector<8x10xf32>
    %188 = vector.extract_strided_slice %0 {offsets = [3, 0], sizes = [1, 10], strides = [1, 1]} : vector<4x176xf32> to vector<1x10xf32>
    %189 = vector.broadcast %188 : vector<1x10xf32> to vector<8x10xf32>
    %190 = arith.addf %187, %189 : vector<8x10xf32>
    %cst_56 = arith.constant 0.000000e+00 : f32
    %191 = vector.broadcast %cst_56 : f32 to vector<8x10xf32>
    %192 = arith.maximumf %190, %191 : vector<8x10xf32>
    %cst_57 = arith.constant dense<0xFF800000> : vector<8xf32>
    %193 = vector.multi_reduction <maximumf>, %192, %cst_57 [1] : vector<8x10xf32> to vector<8xf32>
    %194 = vector.shape_cast %193 : vector<8xf32> to vector<8x1xf32>
    %195 = vector.broadcast %194 : vector<8x1xf32> to vector<8x10xf32>
    %196 = arith.subf %192, %195 : vector<8x10xf32>
    %197 = math.exp %196 : vector<8x10xf32>
    %cst_58 = arith.constant dense<0.000000e+00> : vector<8xf32>
    %198 = vector.multi_reduction <add>, %197, %cst_58 [1] : vector<8x10xf32> to vector<8xf32>
    %199 = vector.shape_cast %198 : vector<8xf32> to vector<8x1xf32>
    %200 = math.log %199 : vector<8x1xf32>
    %201 = vector.broadcast %200 : vector<8x1xf32> to vector<8x10xf32>
    %202 = arith.subf %196, %201 : vector<8x10xf32>
    %c0_59 = arith.constant 0 : index
    %c0_60 = arith.constant 0 : index
    %203 = vector.load %arg8[%c0_59, %c0_60] : memref<8x10xf32, #tpu.memory_space<vmem>>, vector<8x10xf32>
    tpu.vector_store %arg8[%c0_59, %c0_60], %202 {strides = array<i32>} : memref<8x10xf32, #tpu.memory_space<vmem>>, vector<8x10xf32>,
    return
  }
  func.func @transform_0(%arg0: i32) -> (i32, i32, i32) {
    %c0_i32 = arith.constant 0 : i32
    %c0_i32_0 = arith.constant 0 : i32
    %c0_i32_1 = arith.constant 0 : i32
    return %c0_i32, %arg0, %c0_i32_0 : i32, i32, i32
  }
  func.func @transform_1(%arg0: i32) -> (i32, i32, i32) {
    %c0_i32 = arith.constant 0 : i32
    %c0_i32_0 = arith.constant 0 : i32
    %c0_i32_1 = arith.constant 0 : i32
    %c0_i32_2 = arith.constant 0 : i32
    return %c0_i32, %c0_i32_0, %c0_i32_1 : i32, i32, i32
  }
  func.func @transform_2(%arg0: i32) -> (i32, i32, i32) {
    %c0_i32 = arith.constant 0 : i32
    %c0_i32_0 = arith.constant 0 : i32
    %c0_i32_1 = arith.constant 0 : i32
    %c0_i32_2 = arith.constant 0 : i32
    return %c0_i32, %c0_i32_0, %c0_i32_1 : i32, i32, i32
  }
  func.func @transform_3(%arg0: i32) -> (i32, i32, i32) {
    %c0_i32 = arith.constant 0 : i32
    %c0_i32_0 = arith.constant 0 : i32
    %c0_i32_1 = arith.constant 0 : i32
    %c0_i32_2 = arith.constant 0 : i32
    return %c0_i32, %c0_i32_0, %c0_i32_1 : i32, i32, i32
  }
  func.func @transform_4(%arg0: i32) -> (i32, i32, i32) {
    %c0_i32 = arith.constant 0 : i32
    %c0_i32_0 = arith.constant 0 : i32
    %c0_i32_1 = arith.constant 0 : i32
    %c0_i32_2 = arith.constant 0 : i32
    return %c0_i32, %c0_i32_0, %c0_i32_1 : i32, i32, i32
  }
  func.func @transform_5(%arg0: i32) -> (i32, i32) {
    %c0_i32 = arith.constant 0 : i32
    %c0_i32_0 = arith.constant 0 : i32
    %c0_i32_1 = arith.constant 0 : i32
    return %c0_i32, %c0_i32_0 : i32, i32
  }
  func.func @transform_6(%arg0: i32) -> (i32, i32) {
    %c0_i32 = arith.constant 0 : i32
    %c0_i32_0 = arith.constant 0 : i32
    %c0_i32_1 = arith.constant 0 : i32
    return %c0_i32, %c0_i32_0 : i32, i32
  }
  func.func @transform_7(%arg0: i32) -> (i32, i32) {
    %c0_i32 = arith.constant 0 : i32
    %c0_i32_0 = arith.constant 0 : i32
    return %arg0, %c0_i32 : i32, i32
  }
}

</mosaic_0001>

<llo_original>
// kernel: tile.13
$region0: #{tile.13}
  #allocation0 [shape = 's32[1]{0}', space=sflag, size = 0x4, scoped, tag = 'scoped memory for tile.13']
  %s0 = inlined_call_operand.vmem [shape: f32[16], index: 0, kind: input, shape index: {}]
  %s1 = inlined_call_operand.vmem [shape: f32[11,16], index: 1, kind: output, shape index: {}]
  // Predicated region
  $region2: #{tile.13} parent=0 // pred_check
    _
  $region3: #{tile.13} parent=0 // pred_check_branch
    %3 = sbr.rel (0) target = $region5
  $region4: #{tile.13} parent=0 // pred_region
    _
  $region5: #{tile.13} parent=0 // pred_fallthru
    _
  %v4 = vld [vmem:[%s0] ss:$0 sm:$0xff]
  %5 = vst [vmem:[%s1] sm:$0xff] %v4
  %s6 = scalar_lea.vmem %s1, 8
  %7 = vst [vmem:[%s6] sm:$0xff] %v4

// kernel: tile.18
$region0: #{tile.18}
  #allocation0 [shape = 's32[1]{0}', space=sflag, size = 0x4, scoped, tag = 'scoped memory for tile.18']
  %s0 = inlined_call_operand.vmem [shape: f32[16], index: 0, kind: input, shape index: {}]
  %s1 = inlined_call_operand.vmem [shape: f32[3,16], index: 1, kind: output, shape index: {}]
  // Predicated region
  $region2: #{tile.18} parent=0 // pred_check
    _
  $region3: #{tile.18} parent=0 // pred_check_branch
    %3 = sbr.rel (0) target = $region5
  $region4: #{tile.18} parent=0 // pred_region
    _
  $region5: #{tile.18} parent=0 // pred_fallthru
    _
  %v4 = vld [vmem:[%s0] ss:$0 sm:$0xff]
  %5 = vst [vmem:[%s1] sm:$0xf] %v4

// kernel: tile.19
$region0: #{tile.19}
  %s0 = inlined_call_operand.vmem [shape: f32[3,16], index: 0, kind: input, shape index: {}]
  %s1 = inlined_call_operand.vmem [shape: f32[48], index: 1, kind: output, shape index: {}]
  $region1: #{tile.19} parent=0
    #allocation0 [shape = 'u8[4096]{0}', space=vmem, size = 0x1000, scoped, tag = 'scoped mem for output reshape']
    #allocation1 [shape = 'u8[4096]{0}', space=vmem, size = 0x1000, scoped, tag = 'scoped mem for input reshape']
    %s3 = sshllo.u32 0, 4
    %v4 = vld [vmem:[%s0] sm:%s3]
    %5 = vst [vmem:[#allocation1] sm:%s3] %v4
    %v6 = vld [vmem:[#allocation1] sm:$0x1]
    %vm7 = vcmask 130048
    %8 = vst.msk [vmem:[#allocation0] sm:$0x1] %vm7, %v6
    %s9 = scalar_lea.vmem [#allocation1], 2
    %v10 = vld [vmem:[%s9] sm:$0x1]
    %11 = vrot.lane.b32.xlu0 %v10, 32
    %v12 = vpop.permute.xlu0 %11
    %vm13 = vcmask 392448
    %14 = vst.msk [vmem:[#allocation0] sm:$0x1] %vm13, %v12
    %s15 = scalar_lea.vmem [#allocation1], 1
    %v16 = vld [vmem:[%s15] sm:$0x1]
    %17 = vrot.lane.b32.xlu0 %v16, 16
    %v18 = vpop.permute.xlu0 %17
    %vm19 = vcmask 261248
    %20 = vst.msk [vmem:[#allocation0] sm:$0x1] %vm19, %v18
    %s22 = sshllo.u32 0, 1
    %v24 = vld [vmem:[#allocation0] sm:%s22]
    %s25 = sshllo.u32 0, 1
    %26 = vst [vmem:[%s1] sm:%s25] %v24

// kernel: model3_forward.1
$region0: #{model3_forward.1}
  #allocation0 [shape = 'u32[]', space=smem, size = 0x4, offset = 0x4, fixed_abs, tag = 'smem constant byte address 0x4 - core index']
  #allocation1 [shape = 'u32[144,128]{1,0:T(1,128)}', space=vmem, size = 0x12000, scoped, tag = 'internal scratch']
  %s0 = inlined_call_operand.vmem [shape: f32[28,8,28], index: 0, kind: input, shape index: {}]
  %s1 = inlined_call_operand.vmem [shape: f32[3,28,416], index: 1, kind: input, shape index: {}]
  %s2 = inlined_call_operand.vmem [shape: f32[3,400,176], index: 2, kind: input, shape index: {}]
  %s3 = inlined_call_operand.vmem [shape: f32[3,160,48], index: 3, kind: input, shape index: {}]
  %s4 = inlined_call_operand.vmem [shape: f32[3,48,16], index: 4, kind: input, shape index: {}]
  %s5 = inlined_call_operand.vmem [shape: f32[16,10], index: 5, kind: input, shape index: {}]
  %s6 = inlined_call_operand.vmem [shape: f32[4,176], index: 6, kind: input, shape index: {}]
  %s7 = inlined_call_operand.vmem [shape: f32[8,10], index: 7, kind: output, shape index: {}]
  %s8 = sld [smem:[#allocation0]]
  $region38: #{model3_forward.1} parent=0
    _
  %s10 = ssub.s32 1, %s8
  %s11 = scalar_select 0, %s10, %s8
  // Predicated region
  $region2: #{model3_forward.1} parent=0 // pred_check
    _
  $region3: #{model3_forward.1} parent=0 // pred_check_branch
    %13 = sbr.rel (0) target = $region5
  $region4: #{model3_forward.1} parent=0 // pred_region
    _
  $region5: #{model3_forward.1} parent=0 // pred_fallthru
    _
  // Predicated region
  $region6: #{model3_forward.1} parent=0 // pred_check
    _
  $region7: #{model3_forward.1} parent=0 // pred_check_branch
    %15 = sbr.rel (0) target = $region9
  $region8: #{model3_forward.1} parent=0 // pred_region
    _
  $region9: #{model3_forward.1} parent=0 // pred_fallthru
    _
  // Predicated region
  $region10: #{model3_forward.1} parent=0 // pred_check
    _
  $region11: #{model3_forward.1} parent=0 // pred_check_branch
    %17 = sbr.rel (0) target = $region13
  $region12: #{model3_forward.1} parent=0 // pred_region
    _
  $region13: #{model3_forward.1} parent=0 // pred_fallthru
    _
  // Predicated region
  $region14: #{model3_forward.1} parent=0 // pred_check
    _
  $region15: #{model3_forward.1} parent=0 // pred_check_branch
    %19 = sbr.rel (0) target = $region17
  $region16: #{model3_forward.1} parent=0 // pred_region
    _
  $region17: #{model3_forward.1} parent=0 // pred_fallthru
    _
  // Predicated region
  $region18: #{model3_forward.1} parent=0 // pred_check
    _
  $region19: #{model3_forward.1} parent=0 // pred_check_branch
    %21 = sbr.rel (0) target = $region21
  $region20: #{model3_forward.1} parent=0 // pred_region
    _
  $region21: #{model3_forward.1} parent=0 // pred_fallthru
    _
  // Predicated region
  $region22: #{model3_forward.1} parent=0 // pred_check
    _
  $region23: #{model3_forward.1} parent=0 // pred_check_branch
    %23 = sbr.rel (0) target = $region25
  $region24: #{model3_forward.1} parent=0 // pred_region
    _
  $region25: #{model3_forward.1} parent=0 // pred_fallthru
    _
  // Predicated region
  $region26: #{model3_forward.1} parent=0 // pred_check
    _
  $region27: #{model3_forward.1} parent=0 // pred_check_branch
    %25 = sbr.rel (0) target = $region29
  $region28: #{model3_forward.1} parent=0 // pred_region
    _
  $region29: #{model3_forward.1} parent=0 // pred_fallthru
    _
  %v26 = vld [vmem:[%s6] sm:$0xff]
  %v27 = vld [vmem:[%s0] sm:$0xff]
  %v28 = vld [vmem:[%s0 + $0x8] sm:$0xff]
  %v29 = vld [vmem:[%s0 + $0x10] sm:$0xff]
  %v30 = vld [vmem:[%s0 + $0x18] sm:$0xff]
  %v31 = vld [vmem:[%s0 + $0x20] sm:$0xff]
  %v32 = vld [vmem:[%s0 + $0x28] sm:$0xff]
  %v33 = vld [vmem:[%s0 + $0x30] sm:$0xff]
  %v34 = vld [vmem:[%s0 + $0x38] sm:$0xff]
  %v35 = vld [vmem:[%s0 + $0x40] sm:$0xff]
  %v36 = vld [vmem:[%s0 + $0x48] sm:$0xff]
  %v37 = vld [vmem:[%s0 + $0x50] sm:$0xff]
  %v38 = vld [vmem:[%s0 + $0x58] sm:$0xff]
  %v39 = vld [vmem:[%s0 + $0x60] sm:$0xff]
  %v40 = vld [vmem:[%s0 + $0x68] sm:$0xff]
  %v41 = vld [vmem:[%s0 + $0x70] sm:$0xff]
  %v42 = vld [vmem:[%s0 + $0x78] sm:$0xff]
  %v43 = vld [vmem:[%s0 + $0x80] sm:$0xff]
  %v44 = vld [vmem:[%s0 + $0x88] sm:$0xff]
  %v45 = vld [vmem:[%s0 + $0x90] sm:$0xff]
  %v46 = vld [vmem:[%s0 + $0x98] sm:$0xff]
  %v47 = vld [vmem:[%s0 + $0xa0] sm:$0xff]
  %v48 = vld [vmem:[%s0 + $0xa8] sm:$0xff]
  %v49 = vld [vmem:[%s0 + $0xb0] sm:$0xff]
  %v50 = vld [vmem:[%s0 + $0xb8] sm:$0xff]
  %v51 = vld [vmem:[%s0 + $0xc0] sm:$0xff]
  %v52 = vld [vmem:[%s0 + $0xc8] sm:$0xff]
  %v53 = vld [vmem:[%s0 + $0xd0] sm:$0xff]
  %v54 = vld [vmem:[%s0 + $0xd8] sm:$0xff]
  %v55 = vld [vmem:[%s1] sm:$0xff]
  %v56 = vld [vmem:[%s1 + $0x8] sm:$0xff]
  %v57 = vld [vmem:[%s1 + $0x10] sm:$0xff]
  %v58 = vld [vmem:[%s1 + $0x18] sm:$0xff]
  %v59 = vld [vmem:[%s1 + $0x20] sm:$0xff]
  %v60 = vld [vmem:[%s1 + $0x28] sm:$0xff]
  %v61 = vld [vmem:[%s1 + $0x30] sm:$0xff]
  %v62 = vld [vmem:[%s1 + $0x38] sm:$0xff]
  %v63 = vld [vmem:[%s1 + $0x40] sm:$0xff]
  %v64 = vld [vmem:[%s1 + $0x48] sm:$0xff]
  %v65 = vld [vmem:[%s1 + $0x50] sm:$0xff]
  %v66 = vld [vmem:[%s1 + $0x58] sm:$0xff]
  %v67 = vld [vmem:[%s1 + $0x60] sm:$0xf]
  %v68 = vld [vmem:[%s1 + $0x68] sm:$0xf]
  %v69 = vld [vmem:[%s1 + $0x70] sm:$0xf]
  %v70 = vld [vmem:[%s1 + $0x78] sm:$0xf]
  %s71 = scalar_lea.vmem %s1, 128
  %v72 = vld [vmem:[%s71] sm:$0xff]
  %v73 = vld [vmem:[%s71 + $0x8] sm:$0xff]
  %v74 = vld [vmem:[%s71 + $0x10] sm:$0xff]
  %v75 = vld [vmem:[%s71 + $0x18] sm:$0xff]
  %v76 = vld [vmem:[%s71 + $0x20] sm:$0xff]
  %v77 = vld [vmem:[%s71 + $0x28] sm:$0xff]
  %v78 = vld [vmem:[%s71 + $0x30] sm:$0xff]
  %v79 = vld [vmem:[%s71 + $0x38] sm:$0xff]
  %v80 = vld [vmem:[%s71 + $0x40] sm:$0xff]
  %v81 = vld [vmem:[%s71 + $0x48] sm:$0xff]
  %v82 = vld [vmem:[%s71 + $0x50] sm:$0xff]
  %v83 = vld [vmem:[%s71 + $0x58] sm:$0xff]
  %v84 = vld [vmem:[%s71 + $0x60] sm:$0xf]
  %v85 = vld [vmem:[%s71 + $0x68] sm:$0xf]
  %v86 = vld [vmem:[%s71 + $0x70] sm:$0xf]
  %v87 = vld [vmem:[%s71 + $0x78] sm:$0xf]
  %vm88 = vcmask 228352
  %v90 = vsel %vm88, %v28, 0
  %v93 = vsel %vm88, %v29, 0
  %v96 = vsel %vm88, %v30, 0
  %v99 = vsel %vm88, %v31, 0
  %v102 = vsel %vm88, %v32, 0
  %v105 = vsel %vm88, %v33, 0
  %v108 = vsel %vm88, %v34, 0
  %v111 = vsel %vm88, %v35, 0
  %v114 = vsel %vm88, %v36, 0
  %v117 = vsel %vm88, %v37, 0
  %v120 = vsel %vm88, %v38, 0
  %v123 = vsel %vm88, %v39, 0
  %v126 = vsel %vm88, %v40, 0
  %v129 = vsel %vm88, %v41, 0
  %v132 = vsel %vm88, %v42, 0
  %v135 = vsel %vm88, %v43, 0
  %v138 = vsel %vm88, %v44, 0
  %v141 = vsel %vm88, %v45, 0
  %v144 = vsel %vm88, %v46, 0
  %v147 = vsel %vm88, %v47, 0
  %v150 = vsel %vm88, %v48, 0
  %v153 = vsel %vm88, %v49, 0
  %v156 = vsel %vm88, %v50, 0
  %v159 = vsel %vm88, %v51, 0
  %v162 = vsel %vm88, %v52, 0
  %v165 = vsel %vm88, %v53, 0
  %vm167 = vcmask 1043456
  %v169 = vsel %vm167, %v84, 0
  %v172 = vsel %vm167, %v85, 0
  %v175 = vsel %vm167, %v86, 0
  %v178 = vsel %vm167, %v87, 0
  %180 = vmatprep.subr.mxu0 %v73
  %181 = vmatpush1.msra.mxu0 %v72
  %182 = vmatprep.subr.mxu0 %v77
  %183 = vmatpush1.msra.mxu0 %v76
  %184 = vmatprep.subr.mxu0 %v81
  %185 = vmatpush1.msra.mxu0 %v80
  %186 = vmatprep.subr.mxu0 %v172
  %187 = vmatpush1.msra.mxu0 %v169
  %188 = vmatprep.subr.mxu0 0.0
  %189 = vmatpush1.msra.mxu0 0.0
  %190 = vmatprep.subr.mxu0 0.0
  %191 = vmatpush1.msra.mxu0 0.0
  %192 = vmatprep.subr.mxu0 0.0
  %193 = vmatpush1.msra.mxu0 0.0
  %194 = vmatprep.subr.mxu0 0.0
  %195 = vmatpush1.msra.mxu0 0.0
  %196 = vmatprep.subr.mxu0 0.0
  %197 = vmatpush1.msra.mxu0 0.0
  %198 = vmatprep.subr.mxu0 0.0
  %199 = vmatpush1.msra.mxu0 0.0
  %200 = vmatprep.subr.mxu0 0.0
  %201 = vmatpush1.msra.mxu0 0.0
  %202 = vmatprep.subr.mxu0 0.0
  %203 = vmatpush1.msra.mxu0 0.0
  %204 = vmatprep.subr.mxu0 0.0
  %205 = vmatpush1.msra.mxu0 0.0
  %206 = vmatprep.subr.mxu0 0.0
  %207 = vmatpush1.msra.mxu0 0.0
  %208 = vmatprep.subr.mxu0 0.0
  %209 = vmatpush1.msra.mxu0 0.0
  %210 = vmatprep.subr.mxu0 0.0
  %211 = vmatpush1.msra.mxu0 0.0
  %212 = vmatprep.subr.mxu0 0.0
  %213 = vmatpush1.msra.mxu0 0.0
  %214 = vmatprep.subr.mxu0 0.0
  %215 = vmatpush1.msra.mxu0 0.0
  %216 = vmatprep.subr.mxu0 0.0
  %217 = vmatpush1.msra.mxu0 0.0
  %218 = vmatprep.subr.mxu0 0.0
  %219 = vmatpush1.msra.mxu0 0.0
  %220 = vmatprep.subr.mxu0 0.0
  %221 = vmatpush1.msra.mxu0 0.0
  %222 = vmatprep.subr.mxu0 0.0
  %223 = vmatpush1.msra.mxu0 0.0
  %224 = vmatprep.subr.mxu0 0.0
  %225 = vmatpush1.msra.mxu0 0.0
  %226 = vmatprep.subr.mxu0 0.0
  %227 = vmatpush1.msra.mxu0 0.0
  %228 = vmatprep.subr.mxu0 0.0
  %229 = vmatpush1.msra.mxu0 0.0
  %230 = vmatprep.subr.mxu0 0.0
  %231 = vmatpush1.msra.mxu0 0.0
  %232 = vmatprep.subr.mxu0 0.0
  %233 = vmatpush1.msra.mxu0 0.0
  %234 = vmatprep.subr.mxu0 0.0
  %235 = vmatpush1.msra.mxu0 0.0
  %236 = vmatprep.subr.mxu0 0.0
  %237 = vmatpush1.msra.mxu0 0.0
  %238 = vmatprep.subr.mxu0 0.0
  %239 = vmatpush1.msra.mxu0 0.0
  %240 = vmatprep.subr.mxu0 0.0
  %241 = vmatpush1.msra.mxu0 0.0
  %242 = vmatprep.subr.mxu0 0.0
  %243 = vmatpush1.msra.mxu0 0.0
  %244 = vmatprep.mubr.f32.mxu0 0.0
  %245 = vmatmul.mubr.f32.gmra.mrb[0].mxu0 %v90
  %v246 = vpop.f32.mrb[0].mxu0
  %v247 = vadd.f32 0.0, %v246
  %v248 = vpop.f32.mrb[0].mxu0
  %v249 = vadd.f32 0.0, %v248
  %250 = vmatprep.mubr.f32.mxu0 0.0
  %251 = vmatmul.mubr.f32.gmra.mrb[0].mxu0 %v93
  %v252 = vpop.f32.mrb[0].mxu0
  %v253 = vadd.f32 0.0, %v252
  %v254 = vpop.f32.mrb[0].mxu0
  %v255 = vadd.f32 0.0, %v254
  %256 = vmatprep.mubr.f32.mxu0 0.0
  %257 = vmatmul.mubr.f32.gmra.mrb[0].mxu0 %v96
  %v258 = vpop.f32.mrb[0].mxu0
  %v259 = vadd.f32 0.0, %v258
  %v260 = vpop.f32.mrb[0].mxu0
  %v261 = vadd.f32 0.0, %v260
  %262 = vmatprep.mubr.f32.mxu0 0.0
  %263 = vmatmul.mubr.f32.gmra.mrb[0].mxu0 %v99
  %v264 = vpop.f32.mrb[0].mxu0
  %v265 = vadd.f32 0.0, %v264
  %v266 = vpop.f32.mrb[0].mxu0
  %v267 = vadd.f32 0.0, %v266
  %268 = vmatprep.mubr.f32.mxu0 0.0
  %269 = vmatmul.mubr.f32.gmra.mrb[0].mxu0 %v102
  %v270 = vpop.f32.mrb[0].mxu0
  %v271 = vadd.f32 0.0, %v270
  %v272 = vpop.f32.mrb[0].mxu0
  %v273 = vadd.f32 0.0, %v272
  %274 = vmatprep.mubr.f32.mxu0 0.0
  %275 = vmatmul.mubr.f32.gmra.mrb[0].mxu0 %v105
  %v276 = vpop.f32.mrb[0].mxu0
  %v277 = vadd.f32 0.0, %v276
  %v278 = vpop.f32.mrb[0].mxu0
  %v279 = vadd.f32 0.0, %v278
  %280 = vmatprep.mubr.f32.mxu0 0.0
  %281 = vmatmul.mubr.f32.gmra.mrb[0].mxu0 %v108
  %v282 = vpop.f32.mrb[0].mxu0
  %v283 = vadd.f32 0.0, %v282
  %v284 = vpop.f32.mrb[0].mxu0
  %v285 = vadd.f32 0.0, %v284
  %286 = vmatprep.mubr.f32.mxu0 0.0
  %287 = vmatmul.mubr.f32.gmra.mrb[0].mxu0 %v111
  %v288 = vpop.f32.mrb[0].mxu0
  %v289 = vadd.f32 0.0, %v288
  %v290 = vpop.f32.mrb[0].mxu0
  %v291 = vadd.f32 0.0, %v290
  %292 = vmatprep.mubr.f32.mxu0 0.0
  %293 = vmatmul.mubr.f32.gmra.mrb[0].mxu0 %v114
  %v294 = vpop.f32.mrb[0].mxu0
  %v295 = vadd.f32 0.0, %v294
  %v296 = vpop.f32.mrb[0].mxu0
  %v297 = vadd.f32 0.0, %v296
  %298 = vmatprep.mubr.f32.mxu0 0.0
  %299 = vmatmul.mubr.f32.gmra.mrb[0].mxu0 %v117
  %v300 = vpop.f32.mrb[0].mxu0
  %v301 = vadd.f32 0.0, %v300
  %v302 = vpop.f32.mrb[0].mxu0
  %v303 = vadd.f32 0.0, %v302
  %304 = vmatprep.mubr.f32.mxu0 0.0
  %305 = vmatmul.mubr.f32.gmra.mrb[0].mxu0 %v120
  %v306 = vpop.f32.mrb[0].mxu0
  %v307 = vadd.f32 0.0, %v306
  %v308 = vpop.f32.mrb[0].mxu0
  %v309 = vadd.f32 0.0, %v308
  %310 = vmatprep.mubr.f32.mxu0 0.0
  %311 = vmatmul.mubr.f32.gmra.mrb[0].mxu0 %v123
  %v312 = vpop.f32.mrb[0].mxu0
  %v313 = vadd.f32 0.0, %v312
  %v314 = vpop.f32.mrb[0].mxu0
  %v315 = vadd.f32 0.0, %v314
  %316 = vmatprep.mubr.f32.mxu0 0.0
  %317 = vmatmul.mubr.f32.gmra.mrb[0].mxu0 %v126
  %v318 = vpop.f32.mrb[0].mxu0
  %v319 = vadd.f32 0.0, %v318
  %v320 = vpop.f32.mrb[0].mxu0
  %v321 = vadd.f32 0.0, %v320
  %322 = vmatprep.mubr.f32.mxu0 0.0
  %323 = vmatmul.mubr.f32.gmra.mrb[0].mxu0 %v129
  %v324 = vpop.f32.mrb[0].mxu0
  %v325 = vadd.f32 0.0, %v324
  %v326 = vpop.f32.mrb[0].mxu0
  %v327 = vadd.f32 0.0, %v326
  %328 = vmatprep.mubr.f32.mxu0 0.0
  %329 = vmatmul.mubr.f32.gmra.mrb[0].mxu0 %v132
  %v330 = vpop.f32.mrb[0].mxu0
  %v331 = vadd.f32 0.0, %v330
  %v332 = vpop.f32.mrb[0].mxu0
  %v333 = vadd.f32 0.0, %v332
  %334 = vmatprep.mubr.f32.mxu0 0.0
  %335 = vmatmul.mubr.f32.gmra.mrb[0].mxu0 %v135
  %v336 = vpop.f32.mrb[0].mxu0
  %v337 = vadd.f32 0.0, %v336
  %v338 = vpop.f32.mrb[0].mxu0
  %v339 = vadd.f32 0.0, %v338
  %340 = vmatprep.mubr.f32.mxu0 0.0
  %341 = vmatmul.mubr.f32.gmra.mrb[0].mxu0 %v138
  %v342 = vpop.f32.mrb[0].mxu0
  %v343 = vadd.f32 0.0, %v342
  %v344 = vpop.f32.mrb[0].mxu0
  %v345 = vadd.f32 0.0, %v344
  %346 = vmatprep.mubr.f32.mxu0 0.0
  %347 = vmatmul.mubr.f32.gmra.mrb[0].mxu0 %v141
  %v348 = vpop.f32.mrb[0].mxu0
  %v349 = vadd.f32 0.0, %v348
  %v350 = vpop.f32.mrb[0].mxu0
  %v351 = vadd.f32 0.0, %v350
  %352 = vmatprep.mubr.f32.mxu0 0.0
  %353 = vmatmul.mubr.f32.gmra.mrb[0].mxu0 %v144
  %v354 = vpop.f32.mrb[0].mxu0
  %v355 = vadd.f32 0.0, %v354
  %v356 = vpop.f32.mrb[0].mxu0
  %v357 = vadd.f32 0.0, %v356
  %358 = vmatprep.mubr.f32.mxu0 0.0
  %359 = vmatmul.mubr.f32.gmra.mrb[0].mxu0 %v147
  %v360 = vpop.f32.mrb[0].mxu0
  %v361 = vadd.f32 0.0, %v360
  %v362 = vpop.f32.mrb[0].mxu0
  %v363 = vadd.f32 0.0, %v362
  %364 = vmatprep.mubr.f32.mxu0 0.0
  %365 = vmatmul.mubr.f32.gmra.mrb[0].mxu0 %v150
  %v366 = vpop.f32.mrb[0].mxu0
  %v367 = vadd.f32 0.0, %v366
  %v368 = vpop.f32.mrb[0].mxu0
  %v369 = vadd.f32 0.0, %v368
  %370 = vmatprep.mubr.f32.mxu0 0.0
  %371 = vmatmul.mubr.f32.gmra.mrb[0].mxu0 %v153
  %v372 = vpop.f32.mrb[0].mxu0
  %v373 = vadd.f32 0.0, %v372
  %v374 = vpop.f32.mrb[0].mxu0
  %v375 = vadd.f32 0.0, %v374
  %376 = vmatprep.mubr.f32.mxu0 0.0
  %377 = vmatmul.mubr.f32.gmra.mrb[0].mxu0 %v156
  %v378 = vpop.f32.mrb[0].mxu0
  %v379 = vadd.f32 0.0, %v378
  %v380 = vpop.f32.mrb[0].mxu0
  %v381 = vadd.f32 0.0, %v380
  %382 = vmatprep.mubr.f32.mxu0 0.0
  %383 = vmatmul.mubr.f32.gmra.mrb[0].mxu0 %v159
  %v384 = vpop.f32.mrb[0].mxu0
  %v385 = vadd.f32 0.0, %v384
  %v386 = vpop.f32.mrb[0].mxu0
  %v387 = vadd.f32 0.0, %v386
  %388 = vmatprep.mubr.f32.mxu0 0.0
  %389 = vmatmul.mubr.f32.gmra.mrb[0].mxu0 %v162
  %v390 = vpop.f32.mrb[0].mxu0
  %v391 = vadd.f32 0.0, %v390
  %v392 = vpop.f32.mrb[0].mxu0
  %v393 = vadd.f32 0.0, %v392
  %394 = vmatprep.mubr.f32.mxu0 0.0
  %395 = vmatmul.mubr.f32.gmra.mrb[0].mxu0 %v165
  %v396 = vpop.f32.mrb[0].mxu0
  %v397 = vadd.f32 0.0, %v396
  %v398 = vpop.f32.mrb[0].mxu0
  %v399 = vadd.f32 0.0, %v398
  %400 = vdwg.mxu0
  %401 = vmatprep.subr.mxu0 %v75
  %402 = vmatpush1.msra.mxu0 %v74
  %403 = vmatprep.subr.mxu0 %v79
  %404 = vmatpush1.msra.mxu0 %v78
  %405 = vmatprep.subr.mxu0 %v83
  %406 = vmatpush1.msra.mxu0 %v82
  %407 = vmatprep.subr.mxu0 %v178
  %408 = vmatpush1.msra.mxu0 %v175
  %409 = vmatprep.subr.mxu0 0.0
  %410 = vmatpush1.msra.mxu0 0.0
  %411 = vmatprep.subr.mxu0 0.0
  %412 = vmatpush1.msra.mxu0 0.0
  %413 = vmatprep.subr.mxu0 0.0
  %414 = vmatpush1.msra.mxu0 0.0
  %415 = vmatprep.subr.mxu0 0.0
  %416 = vmatpush1.msra.mxu0 0.0
  %417 = vmatprep.subr.mxu0 0.0
  %418 = vmatpush1.msra.mxu0 0.0
  %419 = vmatprep.subr.mxu0 0.0
  %420 = vmatpush1.msra.mxu0 0.0
  %421 = vmatprep.subr.mxu0 0.0
  %422 = vmatpush1.msra.mxu0 0.0
  %423 = vmatprep.subr.mxu0 0.0
  %424 = vmatpush1.msra.mxu0 0.0
  %425 = vmatprep.subr.mxu0 0.0
  %426 = vmatpush1.msra.mxu0 0.0
  %427 = vmatprep.subr.mxu0 0.0
  %428 = vmatpush1.msra.mxu0 0.0
  %429 = vmatprep.subr.mxu0 0.0
  %430 = vmatpush1.msra.mxu0 0.0
  %431 = vmatprep.subr.mxu0 0.0
  %432 = vmatpush1.msra.mxu0 0.0
  %433 = vmatprep.subr.mxu0 0.0
  %434 = vmatpush1.msra.mxu0 0.0
  %435 = vmatprep.subr.mxu0 0.0
  %436 = vmatpush1.msra.mxu0 0.0
  %437 = vmatprep.subr.mxu0 0.0
  %438 = vmatpush1.msra.mxu0 0.0
  %439 = vmatprep.subr.mxu0 0.0
  %440 = vmatpush1.msra.mxu0 0.0
  %441 = vmatprep.subr.mxu0 0.0
  %442 = vmatpush1.msra.mxu0 0.0
  %443 = vmatprep.subr.mxu0 0.0
  %444 = vmatpush1.msra.mxu0 0.0
  %445 = vmatprep.subr.mxu0 0.0
  %446 = vmatpush1.msra.mxu0 0.0
  %447 = vmatprep.subr.mxu0 0.0
  %448 = vmatpush1.msra.mxu0 0.0
  %449 = vmatprep.subr.mxu0 0.0
  %450 = vmatpush1.msra.mxu0 0.0
  %451 = vmatprep.subr.mxu0 0.0
  %452 = vmatpush1.msra.mxu0 0.0
  %453 = vmatprep.subr.mxu0 0.0
  %454 = vmatpush1.msra.mxu0 0.0
  %455 = vmatprep.subr.mxu0 0.0
  %456 = vmatpush1.msra.mxu0 0.0
  %457 = vmatprep.subr.mxu0 0.0
  %458 = vmatpush1.msra.mxu0 0.0
  %459 = vmatprep.subr.mxu0 0.0
  %460 = vmatpush1.msra.mxu0 0.0
  %461 = vmatprep.subr.mxu0 0.0
  %462 = vmatpush1.msra.mxu0 0.0
  %463 = vmatprep.subr.mxu0 0.0
  %464 = vmatpush1.msra.mxu0 0.0
  %465 = vmatprep.mubr.f32.mxu0 0.0
  %466 = vmatmul.mubr.f32.gmra.mrb[0].mxu0 %v90
  %v467 = vpop.f32.mrb[0].mxu0
  %v468 = vadd.f32 0.0, %v467
  %v469 = vpop.f32.mrb[0].mxu0
  %v470 = vadd.f32 0.0, %v469
  %471 = vmatprep.mubr.f32.mxu0 0.0
  %472 = vmatmul.mubr.f32.gmra.mrb[0].mxu0 %v93
  %v473 = vpop.f32.mrb[0].mxu0
  %v474 = vadd.f32 0.0, %v473
  %v475 = vpop.f32.mrb[0].mxu0
  %v476 = vadd.f32 0.0, %v475
  %477 = vmatprep.mubr.f32.mxu0 0.0
  %478 = vmatmul.mubr.f32.gmra.mrb[0].mxu0 %v96
  %v479 = vpop.f32.mrb[0].mxu0
  %v480 = vadd.f32 0.0, %v479
  %v481 = vpop.f32.mrb[0].mxu0
  %v482 = vadd.f32 0.0, %v481
  %483 = vmatprep.mubr.f32.mxu0 0.0
  %484 = vmatmul.mubr.f32.gmra.mrb[0].mxu0 %v99
  %v485 = vpop.f32.mrb[0].mxu0
  %v486 = vadd.f32 0.0, %v485
  %v487 = vpop.f32.mrb[0].mxu0
  %v488 = vadd.f32 0.0, %v487
  %489 = vmatprep.mubr.f32.mxu0 0.0
  %490 = vmatmul.mubr.f32.gmra.mrb[0].mxu0 %v102
  %v491 = vpop.f32.mrb[0].mxu0
  %v492 = vadd.f32 0.0, %v491
  %v493 = vpop.f32.mrb[0].mxu0
  %v494 = vadd.f32 0.0, %v493
  %495 = vmatprep.mubr.f32.mxu0 0.0
  %496 = vmatmul.mubr.f32.gmra.mrb[0].mxu0 %v105
  %v497 = vpop.f32.mrb[0].mxu0
  %v498 = vadd.f32 0.0, %v497
  %v499 = vpop.f32.mrb[0].mxu0
  %v500 = vadd.f32 0.0, %v499
  %501 = vmatprep.mubr.f32.mxu0 0.0
  %502 = vmatmul.mubr.f32.gmra.mrb[0].mxu0 %v108
  %v503 = vpop.f32.mrb[0].mxu0
  %v504 = vadd.f32 0.0, %v503
  %v505 = vpop.f32.mrb[0].mxu0
  %v506 = vadd.f32 0.0, %v505
  %507 = vmatprep.mubr.f32.mxu0 0.0
  %508 = vmatmul.mubr.f32.gmra.mrb[0].mxu0 %v111
  %v509 = vpop.f32.mrb[0].mxu0
  %v510 = vadd.f32 0.0, %v509
  %v511 = vpop.f32.mrb[0].mxu0
  %v512 = vadd.f32 0.0, %v511
  %513 = vmatprep.mubr.f32.mxu0 0.0
  %514 = vmatmul.mubr.f32.gmra.mrb[0].mxu0 %v114
  %v515 = vpop.f32.mrb[0].mxu0
  %v516 = vadd.f32 0.0, %v515
  %v517 = vpop.f32.mrb[0].mxu0
  %v518 = vadd.f32 0.0, %v517
  %519 = vmatprep.mubr.f32.mxu0 0.0
  %520 = vmatmul.mubr.f32.gmra.mrb[0].mxu0 %v117
  %v521 = vpop.f32.mrb[0].mxu0
  %v522 = vadd.f32 0.0, %v521
  %v523 = vpop.f32.mrb[0].mxu0
  %v524 = vadd.f32 0.0, %v523
  %525 = vmatprep.mubr.f32.mxu0 0.0
  %526 = vmatmul.mubr.f32.gmra.mrb[0].mxu0 %v120
  %v527 = vpop.f32.mrb[0].mxu0
  %v528 = vadd.f32 0.0, %v527
  %v529 = vpop.f32.mrb[0].mxu0
  %v530 = vadd.f32 0.0, %v529
  %531 = vmatprep.mubr.f32.mxu0 0.0
  %532 = vmatmul.mubr.f32.gmra.mrb[0].mxu0 %v123
  %v533 = vpop.f32.mrb[0].mxu0
  %v534 = vadd.f32 0.0, %v533
  %v535 = vpop.f32.mrb[0].mxu0
  %v536 = vadd.f32 0.0, %v535
  %537 = vmatprep.mubr.f32.mxu0 0.0
  %538 = vmatmul.mubr.f32.gmra.mrb[0].mxu0 %v126
  %v539 = vpop.f32.mrb[0].mxu0
  %v540 = vadd.f32 0.0, %v539
  %v541 = vpop.f32.mrb[0].mxu0
  %v542 = vadd.f32 0.0, %v541
  %543 = vmatprep.mubr.f32.mxu0 0.0
  %544 = vmatmul.mubr.f32.gmra.mrb[0].mxu0 %v129
  %v545 = vpop.f32.mrb[0].mxu0
  %v546 = vadd.f32 0.0, %v545
  %v547 = vpop.f32.mrb[0].mxu0
  %v548 = vadd.f32 0.0, %v547
  %549 = vmatprep.mubr.f32.mxu0 0.0
  %550 = vmatmul.mubr.f32.gmra.mrb[0].mxu0 %v132
  %v551 = vpop.f32.mrb[0].mxu0
  %v552 = vadd.f32 0.0, %v551
  %v553 = vpop.f32.mrb[0].mxu0
  %v554 = vadd.f32 0.0, %v553
  %555 = vmatprep.mubr.f32.mxu0 0.0
  %556 = vmatmul.mubr.f32.gmra.mrb[0].mxu0 %v135
  %v557 = vpop.f32.mrb[0].mxu0
  %v558 = vadd.f32 0.0, %v557
  %v559 = vpop.f32.mrb[0].mxu0
  %v560 = vadd.f32 0.0, %v559
  %561 = vmatprep.mubr.f32.mxu0 0.0
  %562 = vmatmul.mubr.f32.gmra.mrb[0].mxu0 %v138
  %v563 = vpop.f32.mrb[0].mxu0
  %v564 = vadd.f32 0.0, %v563
  %v565 = vpop.f32.mrb[0].mxu0
  %v566 = vadd.f32 0.0, %v565
  %567 = vmatprep.mubr.f32.mxu0 0.0
  %568 = vmatmul.mubr.f32.gmra.mrb[0].mxu0 %v141
  %v569 = vpop.f32.mrb[0].mxu0
  %v570 = vadd.f32 0.0, %v569
  %v571 = vpop.f32.mrb[0].mxu0
  %v572 = vadd.f32 0.0, %v571
  %573 = vmatprep.mubr.f32.mxu0 0.0
  %574 = vmatmul.mubr.f32.gmra.mrb[0].mxu0 %v144
  %v575 = vpop.f32.mrb[0].mxu0
  %v576 = vadd.f32 0.0, %v575
  %v577 = vpop.f32.mrb[0].mxu0
  %v578 = vadd.f32 0.0, %v577
  %579 = vmatprep.mubr.f32.mxu0 0.0
  %580 = vmatmul.mubr.f32.gmra.mrb[0].mxu0 %v147
  %v581 = vpop.f32.mrb[0].mxu0
  %v582 = vadd.f32 0.0, %v581
  %v583 = vpop.f32.mrb[0].mxu0
  %v584 = vadd.f32 0.0, %v583
  %585 = vmatprep.mubr.f32.mxu0 0.0
  %586 = vmatmul.mubr.f32.gmra.mrb[0].mxu0 %v150
  %v587 = vpop.f32.mrb[0].mxu0
  %v588 = vadd.f32 0.0, %v587
  %v589 = vpop.f32.mrb[0].mxu0
  %v590 = vadd.f32 0.0, %v589
  %591 = vmatprep.mubr.f32.mxu0 0.0
  %592 = vmatmul.mubr.f32.gmra.mrb[0].mxu0 %v153
  %v593 = vpop.f32.mrb[0].mxu0
  %v594 = vadd.f32 0.0, %v593
  %v595 = vpop.f32.mrb[0].mxu0
  %v596 = vadd.f32 0.0, %v595
  %597 = vmatprep.mubr.f32.mxu0 0.0
  %598 = vmatmul.mubr.f32.gmra.mrb[0].mxu0 %v156
  %v599 = vpop.f32.mrb[0].mxu0
  %v600 = vadd.f32 0.0, %v599
  %v601 = vpop.f32.mrb[0].mxu0
  %v602 = vadd.f32 0.0, %v601
  %603 = vmatprep.mubr.f32.mxu0 0.0
  %604 = vmatmul.mubr.f32.gmra.mrb[0].mxu0 %v159
  %v605 = vpop.f32.mrb[0].mxu0
  %v606 = vadd.f32 0.0, %v605
  %v607 = vpop.f32.mrb[0].mxu0
  %v608 = vadd.f32 0.0, %v607
  %609 = vmatprep.mubr.f32.mxu0 0.0
  %610 = vmatmul.mubr.f32.gmra.mrb[0].mxu0 %v162
  %v611 = vpop.f32.mrb[0].mxu0
  %v612 = vadd.f32 0.0, %v611
  %v613 = vpop.f32.mrb[0].mxu0
  %v614 = vadd.f32 0.0, %v613
  %615 = vmatprep.mubr.f32.mxu0 0.0
  %616 = vmatmul.mubr.f32.gmra.mrb[0].mxu0 %v165
  %v617 = vpop.f32.mrb[0].mxu0
  %v618 = vadd.f32 0.0, %v617
  %v619 = vpop.f32.mrb[0].mxu0
  %v620 = vadd.f32 0.0, %v619
  %621 = vdwg.mxu0
  %v623 = vsel %vm88, %v27, 0
  %v626 = vsel %vm167, %v67, 0
  %v629 = vsel %vm167, %v68, 0
  %v632 = vsel %vm167, %v69, 0
  %v635 = vsel %vm167, %v70, 0
  %637 = vmatprep.subr.mxu0 %v56
  %638 = vmatpush1.msra.mxu0 %v55
  %639 = vmatprep.subr.mxu0 %v60
  %640 = vmatpush1.msra.mxu0 %v59
  %641 = vmatprep.subr.mxu0 %v64
  %642 = vmatpush1.msra.mxu0 %v63
  %643 = vmatprep.subr.mxu0 %v629
  %644 = vmatpush1.msra.mxu0 %v626
  %645 = vmatprep.subr.mxu0 0.0
  %646 = vmatpush1.msra.mxu0 0.0
  %647 = vmatprep.subr.mxu0 0.0
  %648 = vmatpush1.msra.mxu0 0.0
  %649 = vmatprep.subr.mxu0 0.0
  %650 = vmatpush1.msra.mxu0 0.0
  %651 = vmatprep.subr.mxu0 0.0
  %652 = vmatpush1.msra.mxu0 0.0
  %653 = vmatprep.subr.mxu0 0.0
  %654 = vmatpush1.msra.mxu0 0.0
  %655 = vmatprep.subr.mxu0 0.0
  %656 = vmatpush1.msra.mxu0 0.0
  %657 = vmatprep.subr.mxu0 0.0
  %658 = vmatpush1.msra.mxu0 0.0
  %659 = vmatprep.subr.mxu0 0.0
  %660 = vmatpush1.msra.mxu0 0.0
  %661 = vmatprep.subr.mxu0 0.0
  %662 = vmatpush1.msra.mxu0 0.0
  %663 = vmatprep.subr.mxu0 0.0
  %664 = vmatpush1.msra.mxu0 0.0
  %665 = vmatprep.subr.mxu0 0.0
  %666 = vmatpush1.msra.mxu0 0.0
  %667 = vmatprep.subr.mxu0 0.0
  %668 = vmatpush1.msra.mxu0 0.0
  %669 = vmatprep.subr.mxu0 0.0
  %670 = vmatpush1.msra.mxu0 0.0
  %671 = vmatprep.subr.mxu0 0.0
  %672 = vmatpush1.msra.mxu0 0.0
  %673 = vmatprep.subr.mxu0 0.0
  %674 = vmatpush1.msra.mxu0 0.0
  %675 = vmatprep.subr.mxu0 0.0
  %676 = vmatpush1.msra.mxu0 0.0
  %677 = vmatprep.subr.mxu0 0.0
  %678 = vmatpush1.msra.mxu0 0.0
  %679 = vmatprep.subr.mxu0 0.0
  %680 = vmatpush1.msra.mxu0 0.0
  %681 = vmatprep.subr.mxu0 0.0
  %682 = vmatpush1.msra.mxu0 0.0
  %683 = vmatprep.subr.mxu0 0.0
  %684 = vmatpush1.msra.mxu0 0.0
  %685 = vmatprep.subr.mxu0 0.0
  %686 = vmatpush1.msra.mxu0 0.0
  %687 = vmatprep.subr.mxu0 0.0
  %688 = vmatpush1.msra.mxu0 0.0
  %689 = vmatprep.subr.mxu0 0.0
  %690 = vmatpush1.msra.mxu0 0.0
  %691 = vmatprep.subr.mxu0 0.0
  %692 = vmatpush1.msra.mxu0 0.0
  %693 = vmatprep.subr.mxu0 0.0
  %694 = vmatpush1.msra.mxu0 0.0
  %695 = vmatprep.subr.mxu0 0.0
  %696 = vmatpush1.msra.mxu0 0.0
  %697 = vmatprep.subr.mxu0 0.0
  %698 = vmatpush1.msra.mxu0 0.0
  %699 = vmatprep.subr.mxu0 0.0
  %700 = vmatpush1.msra.mxu0 0.0
  %701 = vmatprep.mubr.f32.mxu0 0.0
  %702 = vmatmul.mubr.f32.gmra.mrb[0].mxu0 %v623
  %v703 = vpop.f32.mrb[0].mxu0
  %v704 = vadd.f32 %v247, %v703
  %v705 = vpop.f32.mrb[0].mxu0
  %v706 = vadd.f32 %v249, %v705
  %707 = vmatprep.mubr.f32.mxu0 0.0
  %708 = vmatmul.mubr.f32.gmra.mrb[0].mxu0 %v90
  %v709 = vpop.f32.mrb[0].mxu0
  %v710 = vadd.f32 %v253, %v709
  %v711 = vpop.f32.mrb[0].mxu0
  %v712 = vadd.f32 %v255, %v711
  %713 = vmatprep.mubr.f32.mxu0 0.0
  %714 = vmatmul.mubr.f32.gmra.mrb[0].mxu0 %v93
  %v715 = vpop.f32.mrb[0].mxu0
  %v716 = vadd.f32 %v259, %v715
  %v717 = vpop.f32.mrb[0].mxu0
  %v718 = vadd.f32 %v261, %v717
  %719 = vmatprep.mubr.f32.mxu0 0.0
  %720 = vmatmul.mubr.f32.gmra.mrb[0].mxu0 %v96
  %v721 = vpop.f32.mrb[0].mxu0
  %v722 = vadd.f32 %v265, %v721
  %v723 = vpop.f32.mrb[0].mxu0
  %v724 = vadd.f32 %v267, %v723
  %725 = vmatprep.mubr.f32.mxu0 0.0
  %726 = vmatmul.mubr.f32.gmra.mrb[0].mxu0 %v99
  %v727 = vpop.f32.mrb[0].mxu0
  %v728 = vadd.f32 %v271, %v727
  %v729 = vpop.f32.mrb[0].mxu0
  %v730 = vadd.f32 %v273, %v729
  %731 = vmatprep.mubr.f32.mxu0 0.0
  %732 = vmatmul.mubr.f32.gmra.mrb[0].mxu0 %v102
  %v733 = vpop.f32.mrb[0].mxu0
  %v734 = vadd.f32 %v277, %v733
  %v735 = vpop.f32.mrb[0].mxu0
  %v736 = vadd.f32 %v279, %v735
  %737 = vmatprep.mubr.f32.mxu0 0.0
  %738 = vmatmul.mubr.f32.gmra.mrb[0].mxu0 %v105
  %v739 = vpop.f32.mrb[0].mxu0
  %v740 = vadd.f32 %v283, %v739
  %v741 = vpop.f32.mrb[0].mxu0
  %v742 = vadd.f32 %v285, %v741
  %743 = vmatprep.mubr.f32.mxu0 0.0
  %744 = vmatmul.mubr.f32.gmra.mrb[0].mxu0 %v108
  %v745 = vpop.f32.mrb[0].mxu0
  %v746 = vadd.f32 %v289, %v745
  %v747 = vpop.f32.mrb[0].mxu0
  %v748 = vadd.f32 %v291, %v747
  %749 = vmatprep.mubr.f32.mxu0 0.0
  %750 = vmatmul.mubr.f32.gmra.mrb[0].mxu0 %v111
  %v751 = vpop.f32.mrb[0].mxu0
  %v752 = vadd.f32 %v295, %v751
  %v753 = vpop.f32.mrb[0].mxu0
  %v754 = vadd.f32 %v297, %v753
  %755 = vmatprep.mubr.f32.mxu0 0.0
  %756 = vmatmul.mubr.f32.gmra.mrb[0].mxu0 %v114
  %v757 = vpop.f32.mrb[0].mxu0
  %v758 = vadd.f32 %v301, %v757
  %v759 = vpop.f32.mrb[0].mxu0
  %v760 = vadd.f32 %v303, %v759
  %761 = vmatprep.mubr.f32.mxu0 0.0
  %762 = vmatmul.mubr.f32.gmra.mrb[0].mxu0 %v117
  %v763 = vpop.f32.mrb[0].mxu0
  %v764 = vadd.f32 %v307, %v763
  %v765 = vpop.f32.mrb[0].mxu0
  %v766 = vadd.f32 %v309, %v765
  %767 = vmatprep.mubr.f32.mxu0 0.0
  %768 = vmatmul.mubr.f32.gmra.mrb[0].mxu0 %v120
  %v769 = vpop.f32.mrb[0].mxu0
  %v770 = vadd.f32 %v313, %v769
  %v771 = vpop.f32.mrb[0].mxu0
  %v772 = vadd.f32 %v315, %v771
  %773 = vmatprep.mubr.f32.mxu0 0.0
  %774 = vmatmul.mubr.f32.gmra.mrb[0].mxu0 %v123
  %v775 = vpop.f32.mrb[0].mxu0
  %v776 = vadd.f32 %v319, %v775
  %v777 = vpop.f32.mrb[0].mxu0
  %v778 = vadd.f32 %v321, %v777
  %779 = vmatprep.mubr.f32.mxu0 0.0
  %780 = vmatmul.mubr.f32.gmra.mrb[0].mxu0 %v126
  %v781 = vpop.f32.mrb[0].mxu0
  %v782 = vadd.f32 %v325, %v781
  %v783 = vpop.f32.mrb[0].mxu0
  %v784 = vadd.f32 %v327, %v783
  %785 = vmatprep.mubr.f32.mxu0 0.0
  %786 = vmatmul.mubr.f32.gmra.mrb[0].mxu0 %v129
  %v787 = vpop.f32.mrb[0].mxu0
  %v788 = vadd.f32 %v331, %v787
  %v789 = vpop.f32.mrb[0].mxu0
  %v790 = vadd.f32 %v333, %v789
  %791 = vmatprep.mubr.f32.mxu0 0.0
  %792 = vmatmul.mubr.f32.gmra.mrb[0].mxu0 %v132
  %v793 = vpop.f32.mrb[0].mxu0
  %v794 = vadd.f32 %v337, %v793
  %v795 = vpop.f32.mrb[0].mxu0
  %v796 = vadd.f32 %v339, %v795
  %797 = vmatprep.mubr.f32.mxu0 0.0
  %798 = vmatmul.mubr.f32.gmra.mrb[0].mxu0 %v135
  %v799 = vpop.f32.mrb[0].mxu0
  %v800 = vadd.f32 %v343, %v799
  %v801 = vpop.f32.mrb[0].mxu0
  %v802 = vadd.f32 %v345, %v801
  %803 = vmatprep.mubr.f32.mxu0 0.0
  %804 = vmatmul.mubr.f32.gmra.mrb[0].mxu0 %v138
  %v805 = vpop.f32.mrb[0].mxu0
  %v806 = vadd.f32 %v349, %v805
  %v807 = vpop.f32.mrb[0].mxu0
  %v808 = vadd.f32 %v351, %v807
  %809 = vmatprep.mubr.f32.mxu0 0.0
  %810 = vmatmul.mubr.f32.gmra.mrb[0].mxu0 %v141
  %v811 = vpop.f32.mrb[0].mxu0
  %v812 = vadd.f32 %v355, %v811
  %v813 = vpop.f32.mrb[0].mxu0
  %v814 = vadd.f32 %v357, %v813
  %815 = vmatprep.mubr.f32.mxu0 0.0
  %816 = vmatmul.mubr.f32.gmra.mrb[0].mxu0 %v144
  %v817 = vpop.f32.mrb[0].mxu0
  %v818 = vadd.f32 %v361, %v817
  %v819 = vpop.f32.mrb[0].mxu0
  %v820 = vadd.f32 %v363, %v819
  %821 = vmatprep.mubr.f32.mxu0 0.0
  %822 = vmatmul.mubr.f32.gmra.mrb[0].mxu0 %v147
  %v823 = vpop.f32.mrb[0].mxu0
  %v824 = vadd.f32 %v367, %v823
  %v825 = vpop.f32.mrb[0].mxu0
  %v826 = vadd.f32 %v369, %v825
  %827 = vmatprep.mubr.f32.mxu0 0.0
  %828 = vmatmul.mubr.f32.gmra.mrb[0].mxu0 %v150
  %v829 = vpop.f32.mrb[0].mxu0
  %v830 = vadd.f32 %v373, %v829
  %v831 = vpop.f32.mrb[0].mxu0
  %v832 = vadd.f32 %v375, %v831
  %833 = vmatprep.mubr.f32.mxu0 0.0
  %834 = vmatmul.mubr.f32.gmra.mrb[0].mxu0 %v153
  %v835 = vpop.f32.mrb[0].mxu0
  %v836 = vadd.f32 %v379, %v835
  %v837 = vpop.f32.mrb[0].mxu0
  %v838 = vadd.f32 %v381, %v837
  %839 = vmatprep.mubr.f32.mxu0 0.0
  %840 = vmatmul.mubr.f32.gmra.mrb[0].mxu0 %v156
  %v841 = vpop.f32.mrb[0].mxu0
  %v842 = vadd.f32 %v385, %v841
  %v843 = vpop.f32.mrb[0].mxu0
  %v844 = vadd.f32 %v387, %v843
  %845 = vmatprep.mubr.f32.mxu0 0.0
  %846 = vmatmul.mubr.f32.gmra.mrb[0].mxu0 %v159
  %v847 = vpop.f32.mrb[0].mxu0
  %v848 = vadd.f32 %v391, %v847
  %v849 = vpop.f32.mrb[0].mxu0
  %v850 = vadd.f32 %v393, %v849
  %851 = vmatprep.mubr.f32.mxu0 0.0
  %852 = vmatmul.mubr.f32.gmra.mrb[0].mxu0 %v162
  %v853 = vpop.f32.mrb[0].mxu0
  %v854 = vadd.f32 %v397, %v853
  %v855 = vpop.f32.mrb[0].mxu0
  %v856 = vadd.f32 %v399, %v855
  %857 = vdwg.mxu0
  %858 = vmatprep.subr.mxu0 %v58
  %859 = vmatpush1.msra.mxu0 %v57
  %860 = vmatprep.subr.mxu0 %v62
  %861 = vmatpush1.msra.mxu0 %v61
  %862 = vmatprep.subr.mxu0 %v66
  %863 = vmatpush1.msra.mxu0 %v65
  %864 = vmatprep.subr.mxu0 %v635
  %865 = vmatpush1.msra.mxu0 %v632
  %866 = vmatprep.subr.mxu0 0.0
  %867 = vmatpush1.msra.mxu0 0.0
  %868 = vmatprep.subr.mxu0 0.0
  %869 = vmatpush1.msra.mxu0 0.0
  %870 = vmatprep.subr.mxu0 0.0
  %871 = vmatpush1.msra.mxu0 0.0
  %872 = vmatprep.subr.mxu0 0.0
  %873 = vmatpush1.msra.mxu0 0.0
  %874 = vmatprep.subr.mxu0 0.0
  %875 = vmatpush1.msra.mxu0 0.0
  %876 = vmatprep.subr.mxu0 0.0
  %877 = vmatpush1.msra.mxu0 0.0
  %878 = vmatprep.subr.mxu0 0.0
  %879 = vmatpush1.msra.mxu0 0.0
  %880 = vmatprep.subr.mxu0 0.0
  %881 = vmatpush1.msra.mxu0 0.0
  %882 = vmatprep.subr.mxu0 0.0
  %883 = vmatpush1.msra.mxu0 0.0
  %884 = vmatprep.subr.mxu0 0.0
  %885 = vmatpush1.msra.mxu0 0.0
  %886 = vmatprep.subr.mxu0 0.0
  %887 = vmatpush1.msra.mxu0 0.0
  %888 = vmatprep.subr.mxu0 0.0
  %889 = vmatpush1.msra.mxu0 0.0
  %890 = vmatprep.subr.mxu0 0.0
  %891 = vmatpush1.msra.mxu0 0.0
  %892 = vmatprep.subr.mxu0 0.0
  %893 = vmatpush1.msra.mxu0 0.0
  %894 = vmatprep.subr.mxu0 0.0
  %895 = vmatpush1.msra.mxu0 0.0
  %896 = vmatprep.subr.mxu0 0.0
  %897 = vmatpush1.msra.mxu0 0.0
  %898 = vmatprep.subr.mxu0 0.0
  %899 = vmatpush1.msra.mxu0 0.0
  %900 = vmatprep.subr.mxu0 0.0
  %901 = vmatpush1.msra.mxu0 0.0
  %902 = vmatprep.subr.mxu0 0.0
  %903 = vmatpush1.msra.mxu0 0.0
  %904 = vmatprep.subr.mxu0 0.0
  %905 = vmatpush1.msra.mxu0 0.0
  %906 = vmatprep.subr.mxu0 0.0
  %907 = vmatpush1.msra.mxu0 0.0
  %908 = vmatprep.subr.mxu0 0.0
  %909 = vmatpush1.msra.mxu0 0.0
  %910 = vmatprep.subr.mxu0 0.0
  %911 = vmatpush1.msra.mxu0 0.0
  %912 = vmatprep.subr.mxu0 0.0
  %913 = vmatpush1.msra.mxu0 0.0
  %914 = vmatprep.subr.mxu0 0.0
  %915 = vmatpush1.msra.mxu0 0.0
  %916 = vmatprep.subr.mxu0 0.0
  %917 = vmatpush1.msra.mxu0 0.0
  %918 = vmatprep.subr.mxu0 0.0
  %919 = vmatpush1.msra.mxu0 0.0
  %920 = vmatprep.subr.mxu0 0.0
  %921 = vmatpush1.msra.mxu0 0.0
  %922 = vmatprep.mubr.f32.mxu0 0.0
  %923 = vmatmul.mubr.f32.gmra.mrb[0].mxu0 %v623
  %v924 = vpop.f32.mrb[0].mxu0
  %v925 = vadd.f32 %v468, %v924
  %v926 = vpop.f32.mrb[0].mxu0
  %v927 = vadd.f32 %v470, %v926
  %928 = vmatprep.mubr.f32.mxu0 0.0
  %929 = vmatmul.mubr.f32.gmra.mrb[0].mxu0 %v90
  %v930 = vpop.f32.mrb[0].mxu0
  %v931 = vadd.f32 %v474, %v930
  %v932 = vpop.f32.mrb[0].mxu0
  %v933 = vadd.f32 %v476, %v932
  %934 = vmatprep.mubr.f32.mxu0 0.0
  %935 = vmatmul.mubr.f32.gmra.mrb[0].mxu0 %v93
  %v936 = vpop.f32.mrb[0].mxu0
  %v937 = vadd.f32 %v480, %v936
  %v938 = vpop.f32.mrb[0].mxu0
  %v939 = vadd.f32 %v482, %v938
  %940 = vmatprep.mubr.f32.mxu0 0.0
  %941 = vmatmul.mubr.f32.gmra.mrb[0].mxu0 %v96
  %v942 = vpop.f32.mrb[0].mxu0
  %v943 = vadd.f32 %v486, %v942
  %v944 = vpop.f32.mrb[0].mxu0
  %v945 = vadd.f32 %v488, %v944
  %946 = vmatprep.mubr.f32.mxu0 0.0
  %947 = vmatmul.mubr.f32.gmra.mrb[0].mxu0 %v99
  %v948 = vpop.f32.mrb[0].mxu0
  %v949 = vadd.f32 %v492, %v948
  %v950 = vpop.f32.mrb[0].mxu0
  %v951 = vadd.f32 %v494, %v950
  %952 = vmatprep.mubr.f32.mxu0 0.0
  %953 = vmatmul.mubr.f32.gmra.mrb[0].mxu0 %v102
  %v954 = vpop.f32.mrb[0].mxu0
  %v955 = vadd.f32 %v498, %v954
  %v956 = vpop.f32.mrb[0].mxu0
  %v957 = vadd.f32 %v500, %v956
  %958 = vmatprep.mubr.f32.mxu0 0.0
  %959 = vmatmul.mubr.f32.gmra.mrb[0].mxu0 %v105
  %v960 = vpop.f32.mrb[0].mxu0
  %v961 = vadd.f32 %v504, %v960
  %v962 = vpop.f32.mrb[0].mxu0
  %v963 = vadd.f32 %v506, %v962
  %964 = vmatprep.mubr.f32.mxu0 0.0
  %965 = vmatmul.mubr.f32.gmra.mrb[0].mxu0 %v108
  %v966 = vpop.f32.mrb[0].mxu0
  %v967 = vadd.f32 %v510, %v966
  %v968 = vpop.f32.mrb[0].mxu0
  %v969 = vadd.f32 %v512, %v968
  %970 = vmatprep.mubr.f32.mxu0 0.0
  %971 = vmatmul.mubr.f32.gmra.mrb[0].mxu0 %v111
  %v972 = vpop.f32.mrb[0].mxu0
  %v973 = vadd.f32 %v516, %v972
  %v974 = vpop.f32.mrb[0].mxu0
  %v975 = vadd.f32 %v518, %v974
  %976 = vmatprep.mubr.f32.mxu0 0.0
  %977 = vmatmul.mubr.f32.gmra.mrb[0].mxu0 %v114
  %v978 = vpop.f32.mrb[0].mxu0
  %v979 = vadd.f32 %v522, %v978
  %v980 = vpop.f32.mrb[0].mxu0
  %v981 = vadd.f32 %v524, %v980
  %982 = vmatprep.mubr.f32.mxu0 0.0
  %983 = vmatmul.mubr.f32.gmra.mrb[0].mxu0 %v117
  %v984 = vpop.f32.mrb[0].mxu0
  %v985 = vadd.f32 %v528, %v984
  %v986 = vpop.f32.mrb[0].mxu0
  %v987 = vadd.f32 %v530, %v986
  %988 = vmatprep.mubr.f32.mxu0 0.0
  %989 = vmatmul.mubr.f32.gmra.mrb[0].mxu0 %v120
  %v990 = vpop.f32.mrb[0].mxu0
  %v991 = vadd.f32 %v534, %v990
  %v992 = vpop.f32.mrb[0].mxu0
  %v993 = vadd.f32 %v536, %v992
  %994 = vmatprep.mubr.f32.mxu0 0.0
  %995 = vmatmul.mubr.f32.gmra.mrb[0].mxu0 %v123
  %v996 = vpop.f32.mrb[0].mxu0
  %v997 = vadd.f32 %v540, %v996
  %v998 = vpop.f32.mrb[0].mxu0
  %v999 = vadd.f32 %v542, %v998
  %1000 = vmatprep.mubr.f32.mxu0 0.0
  %1001 = vmatmul.mubr.f32.gmra.mrb[0].mxu0 %v126
  %v1002 = vpop.f32.mrb[0].mxu0
  %v1003 = vadd.f32 %v546, %v1002
  %v1004 = vpop.f32.mrb[0].mxu0
  %v1005 = vadd.f32 %v548, %v1004
  %1006 = vmatprep.mubr.f32.mxu0 0.0
  %1007 = vmatmul.mubr.f32.gmra.mrb[0].mxu0 %v129
  %v1008 = vpop.f32.mrb[0].mxu0
  %v1009 = vadd.f32 %v552, %v1008
  %v1010 = vpop.f32.mrb[0].mxu0
  %v1011 = vadd.f32 %v554, %v1010
  %1012 = vmatprep.mubr.f32.mxu0 0.0
  %1013 = vmatmul.mubr.f32.gmra.mrb[0].mxu0 %v132
  %v1014 = vpop.f32.mrb[0].mxu0
  %v1015 = vadd.f32 %v558, %v1014
  %v1016 = vpop.f32.mrb[0].mxu0
  %v1017 = vadd.f32 %v560, %v1016
  %1018 = vmatprep.mubr.f32.mxu0 0.0
  %1019 = vmatmul.mubr.f32.gmra.mrb[0].mxu0 %v135
  %v1020 = vpop.f32.mrb[0].mxu0
  %v1021 = vadd.f32 %v564, %v1020
  %v1022 = vpop.f32.mrb[0].mxu0
  %v1023 = vadd.f32 %v566, %v1022
  %1024 = vmatprep.mubr.f32.mxu0 0.0
  %1025 = vmatmul.mubr.f32.gmra.mrb[0].mxu0 %v138
  %v1026 = vpop.f32.mrb[0].mxu0
  %v1027 = vadd.f32 %v570, %v1026
  %v1028 = vpop.f32.mrb[0].mxu0
  %v1029 = vadd.f32 %v572, %v1028
  %1030 = vmatprep.mubr.f32.mxu0 0.0
  %1031 = vmatmul.mubr.f32.gmra.mrb[0].mxu0 %v141
  %v1032 = vpop.f32.mrb[0].mxu0
  %v1033 = vadd.f32 %v576, %v1032
  %v1034 = vpop.f32.mrb[0].mxu0
  %v1035 = vadd.f32 %v578, %v1034
  %1036 = vmatprep.mubr.f32.mxu0 0.0
  %1037 = vmatmul.mubr.f32.gmra.mrb[0].mxu0 %v144
  %v1038 = vpop.f32.mrb[0].mxu0
  %v1039 = vadd.f32 %v582, %v1038
  %v1040 = vpop.f32.mrb[0].mxu0
  %v1041 = vadd.f32 %v584, %v1040
  %1042 = vmatprep.mubr.f32.mxu0 0.0
  %1043 = vmatmul.mubr.f32.gmra.mrb[0].mxu0 %v147
  %v1044 = vpop.f32.mrb[0].mxu0
  %v1045 = vadd.f32 %v588, %v1044
  %v1046 = vpop.f32.mrb[0].mxu0
  %v1047 = vadd.f32 %v590, %v1046
  %1048 = vmatprep.mubr.f32.mxu0 0.0
  %1049 = vmatmul.mubr.f32.gmra.mrb[0].mxu0 %v150
  %v1050 = vpop.f32.mrb[0].mxu0
  %v1051 = vadd.f32 %v594, %v1050
  %v1052 = vpop.f32.mrb[0].mxu0
  %v1053 = vadd.f32 %v596, %v1052
  %1054 = vmatprep.mubr.f32.mxu0 0.0
  %1055 = vmatmul.mubr.f32.gmra.mrb[0].mxu0 %v153
  %v1056 = vpop.f32.mrb[0].mxu0
  %v1057 = vadd.f32 %v600, %v1056
  %v1058 = vpop.f32.mrb[0].mxu0
  %v1059 = vadd.f32 %v602, %v1058
  %1060 = vmatprep.mubr.f32.mxu0 0.0
  %1061 = vmatmul.mubr.f32.gmra.mrb[0].mxu0 %v156
  %v1062 = vpop.f32.mrb[0].mxu0
  %v1063 = vadd.f32 %v606, %v1062
  %v1064 = vpop.f32.mrb[0].mxu0
  %v1065 = vadd.f32 %v608, %v1064
  %1066 = vmatprep.mubr.f32.mxu0 0.0
  %1067 = vmatmul.mubr.f32.gmra.mrb[0].mxu0 %v159
  %v1068 = vpop.f32.mrb[0].mxu0
  %v1069 = vadd.f32 %v612, %v1068
  %v1070 = vpop.f32.mrb[0].mxu0
  %v1071 = vadd.f32 %v614, %v1070
  %1072 = vmatprep.mubr.f32.mxu0 0.0
  %1073 = vmatmul.mubr.f32.gmra.mrb[0].mxu0 %v162
  %v1074 = vpop.f32.mrb[0].mxu0
  %v1075 = vadd.f32 %v618, %v1074
  %v1076 = vpop.f32.mrb[0].mxu0
  %v1077 = vadd.f32 %v620, %v1076
  %1078 = vdwg.mxu0
  %s1079 = scalar_lea.vmem %s1, 256
  %v1080 = vld [vmem:[%s1079] sm:$0xff]
  %v1081 = vld [vmem:[%s1079 + $0x8] sm:$0xff]
  %v1082 = vld [vmem:[%s1079 + $0x10] sm:$0xff]
  %v1083 = vld [vmem:[%s1079 + $0x18] sm:$0xff]
  %v1084 = vld [vmem:[%s1079 + $0x20] sm:$0xff]
  %v1085 = vld [vmem:[%s1079 + $0x28] sm:$0xff]
  %v1086 = vld [vmem:[%s1079 + $0x30] sm:$0xff]
  %v1087 = vld [vmem:[%s1079 + $0x38] sm:$0xff]
  %v1088 = vld [vmem:[%s1079 + $0x40] sm:$0xff]
  %v1089 = vld [vmem:[%s1079 + $0x48] sm:$0xff]
  %v1090 = vld [vmem:[%s1079 + $0x50] sm:$0xff]
  %v1091 = vld [vmem:[%s1079 + $0x58] sm:$0xff]
  %v1092 = vld [vmem:[%s1079 + $0x60] sm:$0xf]
  %v1093 = vld [vmem:[%s1079 + $0x68] sm:$0xf]
  %v1094 = vld [vmem:[%s1079 + $0x70] sm:$0xf]
  %v1095 = vld [vmem:[%s1079 + $0x78] sm:$0xf]
  %v1097 = vsel %vm88, %v54, 0
  %v1100 = vsel %vm167, %v1092, 0
  %v1103 = vsel %vm167, %v1093, 0
  %v1106 = vsel %vm167, %v1094, 0
  %v1109 = vsel %vm167, %v1095, 0
  %1111 = vmatprep.subr.mxu0 %v1081
  %1112 = vmatpush1.msra.mxu0 %v1080
  %1113 = vmatprep.subr.mxu0 %v1085
  %1114 = vmatpush1.msra.mxu0 %v1084
  %1115 = vmatprep.subr.mxu0 %v1089
  %1116 = vmatpush1.msra.mxu0 %v1088
  %1117 = vmatprep.subr.mxu0 %v1103
  %1118 = vmatpush1.msra.mxu0 %v1100
  %1119 = vmatprep.subr.mxu0 0.0
  %1120 = vmatpush1.msra.mxu0 0.0
  %1121 = vmatprep.subr.mxu0 0.0
  %1122 = vmatpush1.msra.mxu0 0.0
  %1123 = vmatprep.subr.mxu0 0.0
  %1124 = vmatpush1.msra.mxu0 0.0
  %1125 = vmatprep.subr.mxu0 0.0
  %1126 = vmatpush1.msra.mxu0 0.0
  %1127 = vmatprep.subr.mxu0 0.0
  %1128 = vmatpush1.msra.mxu0 0.0
  %1129 = vmatprep.subr.mxu0 0.0
  %1130 = vmatpush1.msra.mxu0 0.0
  %1131 = vmatprep.subr.mxu0 0.0
  %1132 = vmatpush1.msra.mxu0 0.0
  %1133 = vmatprep.subr.mxu0 0.0
  %1134 = vmatpush1.msra.mxu0 0.0
  %1135 = vmatprep.subr.mxu0 0.0
  %1136 = vmatpush1.msra.mxu0 0.0
  %1137 = vmatprep.subr.mxu0 0.0
  %1138 = vmatpush1.msra.mxu0 0.0
  %1139 = vmatprep.subr.mxu0 0.0
  %1140 = vmatpush1.msra.mxu0 0.0
  %1141 = vmatprep.subr.mxu0 0.0
  %1142 = vmatpush1.msra.mxu0 0.0
  %1143 = vmatprep.subr.mxu0 0.0
  %1144 = vmatpush1.msra.mxu0 0.0
  %1145 = vmatprep.subr.mxu0 0.0
  %1146 = vmatpush1.msra.mxu0 0.0
  %1147 = vmatprep.subr.mxu0 0.0
  %1148 = vmatpush1.msra.mxu0 0.0
  %1149 = vmatprep.subr.mxu0 0.0
  %1150 = vmatpush1.msra.mxu0 0.0
  %1151 = vmatprep.subr.mxu0 0.0
  %1152 = vmatpush1.msra.mxu0 0.0
  %1153 = vmatprep.subr.mxu0 0.0
  %1154 = vmatpush1.msra.mxu0 0.0
  %1155 = vmatprep.subr.mxu0 0.0
  %1156 = vmatpush1.msra.mxu0 0.0
  %1157 = vmatprep.subr.mxu0 0.0
  %1158 = vmatpush1.msra.mxu0 0.0
  %1159 = vmatprep.subr.mxu0 0.0
  %1160 = vmatpush1.msra.mxu0 0.0
  %1161 = vmatprep.subr.mxu0 0.0
  %1162 = vmatpush1.msra.mxu0 0.0
  %1163 = vmatprep.subr.mxu0 0.0
  %1164 = vmatpush1.msra.mxu0 0.0
  %1165 = vmatprep.subr.mxu0 0.0
  %1166 = vmatpush1.msra.mxu0 0.0
  %1167 = vmatprep.subr.mxu0 0.0
  %1168 = vmatpush1.msra.mxu0 0.0
  %1169 = vmatprep.subr.mxu0 0.0
  %1170 = vmatpush1.msra.mxu0 0.0
  %1171 = vmatprep.subr.mxu0 0.0
  %1172 = vmatpush1.msra.mxu0 0.0
  %1173 = vmatprep.subr.mxu0 0.0
  %1174 = vmatpush1.msra.mxu0 0.0
  %1175 = vmatprep.mubr.f32.mxu0 0.0
  %1176 = vmatmul.mubr.f32.gmra.mrb[0].mxu0 %v93
  %v1177 = vpop.f32.mrb[0].mxu0
  %v1178 = vadd.f32 0.0, %v1177
  %v1179 = vpop.f32.mrb[0].mxu0
  %v1180 = vadd.f32 0.0, %v1179
  %1181 = vmatprep.mubr.f32.mxu0 0.0
  %1182 = vmatmul.mubr.f32.gmra.mrb[0].mxu0 %v96
  %v1183 = vpop.f32.mrb[0].mxu0
  %v1184 = vadd.f32 0.0, %v1183
  %v1185 = vpop.f32.mrb[0].mxu0
  %v1186 = vadd.f32 0.0, %v1185
  %1187 = vmatprep.mubr.f32.mxu0 0.0
  %1188 = vmatmul.mubr.f32.gmra.mrb[0].mxu0 %v99
  %v1189 = vpop.f32.mrb[0].mxu0
  %v1190 = vadd.f32 0.0, %v1189
  %v1191 = vpop.f32.mrb[0].mxu0
  %v1192 = vadd.f32 0.0, %v1191
  %1193 = vmatprep.mubr.f32.mxu0 0.0
  %1194 = vmatmul.mubr.f32.gmra.mrb[0].mxu0 %v102
  %v1195 = vpop.f32.mrb[0].mxu0
  %v1196 = vadd.f32 0.0, %v1195
  %v1197 = vpop.f32.mrb[0].mxu0
  %v1198 = vadd.f32 0.0, %v1197
  %1199 = vmatprep.mubr.f32.mxu0 0.0
  %1200 = vmatmul.mubr.f32.gmra.mrb[0].mxu0 %v105
  %v1201 = vpop.f32.mrb[0].mxu0
  %v1202 = vadd.f32 0.0, %v1201
  %v1203 = vpop.f32.mrb[0].mxu0
  %v1204 = vadd.f32 0.0, %v1203
  %1205 = vmatprep.mubr.f32.mxu0 0.0
  %1206 = vmatmul.mubr.f32.gmra.mrb[0].mxu0 %v108
  %v1207 = vpop.f32.mrb[0].mxu0
  %v1208 = vadd.f32 0.0, %v1207
  %v1209 = vpop.f32.mrb[0].mxu0
  %v1210 = vadd.f32 0.0, %v1209
  %1211 = vmatprep.mubr.f32.mxu0 0.0
  %1212 = vmatmul.mubr.f32.gmra.mrb[0].mxu0 %v111
  %v1213 = vpop.f32.mrb[0].mxu0
  %v1214 = vadd.f32 0.0, %v1213
  %v1215 = vpop.f32.mrb[0].mxu0
  %v1216 = vadd.f32 0.0, %v1215
  %1217 = vmatprep.mubr.f32.mxu0 0.0
  %1218 = vmatmul.mubr.f32.gmra.mrb[0].mxu0 %v114
  %v1219 = vpop.f32.mrb[0].mxu0
  %v1220 = vadd.f32 0.0, %v1219
  %v1221 = vpop.f32.mrb[0].mxu0
  %v1222 = vadd.f32 0.0, %v1221
  %1223 = vmatprep.mubr.f32.mxu0 0.0
  %1224 = vmatmul.mubr.f32.gmra.mrb[0].mxu0 %v117
  %v1225 = vpop.f32.mrb[0].mxu0
  %v1226 = vadd.f32 0.0, %v1225
  %v1227 = vpop.f32.mrb[0].mxu0
  %v1228 = vadd.f32 0.0, %v1227
  %1229 = vmatprep.mubr.f32.mxu0 0.0
  %1230 = vmatmul.mubr.f32.gmra.mrb[0].mxu0 %v120
  %v1231 = vpop.f32.mrb[0].mxu0
  %v1232 = vadd.f32 0.0, %v1231
  %v1233 = vpop.f32.mrb[0].mxu0
  %v1234 = vadd.f32 0.0, %v1233
  %1235 = vmatprep.mubr.f32.mxu0 0.0
  %1236 = vmatmul.mubr.f32.gmra.mrb[0].mxu0 %v123
  %v1237 = vpop.f32.mrb[0].mxu0
  %v1238 = vadd.f32 0.0, %v1237
  %v1239 = vpop.f32.mrb[0].mxu0
  %v1240 = vadd.f32 0.0, %v1239
  %1241 = vmatprep.mubr.f32.mxu0 0.0
  %1242 = vmatmul.mubr.f32.gmra.mrb[0].mxu0 %v126
  %v1243 = vpop.f32.mrb[0].mxu0
  %v1244 = vadd.f32 0.0, %v1243
  %v1245 = vpop.f32.mrb[0].mxu0
  %v1246 = vadd.f32 0.0, %v1245
  %1247 = vmatprep.mubr.f32.mxu0 0.0
  %1248 = vmatmul.mubr.f32.gmra.mrb[0].mxu0 %v129
  %v1249 = vpop.f32.mrb[0].mxu0
  %v1250 = vadd.f32 0.0, %v1249
  %v1251 = vpop.f32.mrb[0].mxu0
  %v1252 = vadd.f32 0.0, %v1251
  %1253 = vmatprep.mubr.f32.mxu0 0.0
  %1254 = vmatmul.mubr.f32.gmra.mrb[0].mxu0 %v132
  %v1255 = vpop.f32.mrb[0].mxu0
  %v1256 = vadd.f32 0.0, %v1255
  %v1257 = vpop.f32.mrb[0].mxu0
  %v1258 = vadd.f32 0.0, %v1257
  %1259 = vmatprep.mubr.f32.mxu0 0.0
  %1260 = vmatmul.mubr.f32.gmra.mrb[0].mxu0 %v135
  %v1261 = vpop.f32.mrb[0].mxu0
  %v1262 = vadd.f32 0.0, %v1261
  %v1263 = vpop.f32.mrb[0].mxu0
  %v1264 = vadd.f32 0.0, %v1263
  %1265 = vmatprep.mubr.f32.mxu0 0.0
  %1266 = vmatmul.mubr.f32.gmra.mrb[0].mxu0 %v138
  %v1267 = vpop.f32.mrb[0].mxu0
  %v1268 = vadd.f32 0.0, %v1267
  %v1269 = vpop.f32.mrb[0].mxu0
  %v1270 = vadd.f32 0.0, %v1269
  %1271 = vmatprep.mubr.f32.mxu0 0.0
  %1272 = vmatmul.mubr.f32.gmra.mrb[0].mxu0 %v141
  %v1273 = vpop.f32.mrb[0].mxu0
  %v1274 = vadd.f32 0.0, %v1273
  %v1275 = vpop.f32.mrb[0].mxu0
  %v1276 = vadd.f32 0.0, %v1275
  %1277 = vmatprep.mubr.f32.mxu0 0.0
  %1278 = vmatmul.mubr.f32.gmra.mrb[0].mxu0 %v144
  %v1279 = vpop.f32.mrb[0].mxu0
  %v1280 = vadd.f32 0.0, %v1279
  %v1281 = vpop.f32.mrb[0].mxu0
  %v1282 = vadd.f32 0.0, %v1281
  %1283 = vmatprep.mubr.f32.mxu0 0.0
  %1284 = vmatmul.mubr.f32.gmra.mrb[0].mxu0 %v147
  %v1285 = vpop.f32.mrb[0].mxu0
  %v1286 = vadd.f32 0.0, %v1285
  %v1287 = vpop.f32.mrb[0].mxu0
  %v1288 = vadd.f32 0.0, %v1287
  %1289 = vmatprep.mubr.f32.mxu0 0.0
  %1290 = vmatmul.mubr.f32.gmra.mrb[0].mxu0 %v150
  %v1291 = vpop.f32.mrb[0].mxu0
  %v1292 = vadd.f32 0.0, %v1291
  %v1293 = vpop.f32.mrb[0].mxu0
  %v1294 = vadd.f32 0.0, %v1293
  %1295 = vmatprep.mubr.f32.mxu0 0.0
  %1296 = vmatmul.mubr.f32.gmra.mrb[0].mxu0 %v153
  %v1297 = vpop.f32.mrb[0].mxu0
  %v1298 = vadd.f32 0.0, %v1297
  %v1299 = vpop.f32.mrb[0].mxu0
  %v1300 = vadd.f32 0.0, %v1299
  %1301 = vmatprep.mubr.f32.mxu0 0.0
  %1302 = vmatmul.mubr.f32.gmra.mrb[0].mxu0 %v156
  %v1303 = vpop.f32.mrb[0].mxu0
  %v1304 = vadd.f32 0.0, %v1303
  %v1305 = vpop.f32.mrb[0].mxu0
  %v1306 = vadd.f32 0.0, %v1305
  %1307 = vmatprep.mubr.f32.mxu0 0.0
  %1308 = vmatmul.mubr.f32.gmra.mrb[0].mxu0 %v159
  %v1309 = vpop.f32.mrb[0].mxu0
  %v1310 = vadd.f32 0.0, %v1309
  %v1311 = vpop.f32.mrb[0].mxu0
  %v1312 = vadd.f32 0.0, %v1311
  %1313 = vmatprep.mubr.f32.mxu0 0.0
  %1314 = vmatmul.mubr.f32.gmra.mrb[0].mxu0 %v162
  %v1315 = vpop.f32.mrb[0].mxu0
  %v1316 = vadd.f32 0.0, %v1315
  %v1317 = vpop.f32.mrb[0].mxu0
  %v1318 = vadd.f32 0.0, %v1317
  %1319 = vmatprep.mubr.f32.mxu0 0.0
  %1320 = vmatmul.mubr.f32.gmra.mrb[0].mxu0 %v165
  %v1321 = vpop.f32.mrb[0].mxu0
  %v1322 = vadd.f32 0.0, %v1321
  %v1323 = vpop.f32.mrb[0].mxu0
  %v1324 = vadd.f32 0.0, %v1323
  %1325 = vmatprep.mubr.f32.mxu0 0.0
  %1326 = vmatmul.mubr.f32.gmra.mrb[0].mxu0 %v1097
  %v1327 = vpop.f32.mrb[0].mxu0
  %v1328 = vadd.f32 0.0, %v1327
  %v1329 = vpop.f32.mrb[0].mxu0
  %v1330 = vadd.f32 0.0, %v1329
  %1331 = vdwg.mxu0
  %1332 = vmatprep.subr.mxu0 %v1083
  %1333 = vmatpush1.msra.mxu0 %v1082
  %1334 = vmatprep.subr.mxu0 %v1087
  %1335 = vmatpush1.msra.mxu0 %v1086
  %1336 = vmatprep.subr.mxu0 %v1091
  %1337 = vmatpush1.msra.mxu0 %v1090
  %1338 = vmatprep.subr.mxu0 %v1109
  %1339 = vmatpush1.msra.mxu0 %v1106
  %1340 = vmatprep.subr.mxu0 0.0
  %1341 = vmatpush1.msra.mxu0 0.0
  %1342 = vmatprep.subr.mxu0 0.0
  %1343 = vmatpush1.msra.mxu0 0.0
  %1344 = vmatprep.subr.mxu0 0.0
  %1345 = vmatpush1.msra.mxu0 0.0
  %1346 = vmatprep.subr.mxu0 0.0
  %1347 = vmatpush1.msra.mxu0 0.0
  %1348 = vmatprep.subr.mxu0 0.0
  %1349 = vmatpush1.msra.mxu0 0.0
  %1350 = vmatprep.subr.mxu0 0.0
  %1351 = vmatpush1.msra.mxu0 0.0
  %1352 = vmatprep.subr.mxu0 0.0
  %1353 = vmatpush1.msra.mxu0 0.0
  %1354 = vmatprep.subr.mxu0 0.0
  %1355 = vmatpush1.msra.mxu0 0.0
  %1356 = vmatprep.subr.mxu0 0.0
  %1357 = vmatpush1.msra.mxu0 0.0
  %1358 = vmatprep.subr.mxu0 0.0
  %1359 = vmatpush1.msra.mxu0 0.0
  %1360 = vmatprep.subr.mxu0 0.0
  %1361 = vmatpush1.msra.mxu0 0.0
  %1362 = vmatprep.subr.mxu0 0.0
  %1363 = vmatpush1.msra.mxu0 0.0
  %1364 = vmatprep.subr.mxu0 0.0
  %1365 = vmatpush1.msra.mxu0 0.0
  %1366 = vmatprep.subr.mxu0 0.0
  %1367 = vmatpush1.msra.mxu0 0.0
  %1368 = vmatprep.subr.mxu0 0.0
  %1369 = vmatpush1.msra.mxu0 0.0
  %1370 = vmatprep.subr.mxu0 0.0
  %1371 = vmatpush1.msra.mxu0 0.0
  %1372 = vmatprep.subr.mxu0 0.0
  %1373 = vmatpush1.msra.mxu0 0.0
  %1374 = vmatprep.subr.mxu0 0.0
  %1375 = vmatpush1.msra.mxu0 0.0
  %1376 = vmatprep.subr.mxu0 0.0
  %1377 = vmatpush1.msra.mxu0 0.0
  %1378 = vmatprep.subr.mxu0 0.0
  %1379 = vmatpush1.msra.mxu0 0.0
  %1380 = vmatprep.subr.mxu0 0.0
  %1381 = vmatpush1.msra.mxu0 0.0
  %1382 = vmatprep.subr.mxu0 0.0
  %1383 = vmatpush1.msra.mxu0 0.0
  %1384 = vmatprep.subr.mxu0 0.0
  %1385 = vmatpush1.msra.mxu0 0.0
  %1386 = vmatprep.subr.mxu0 0.0
  %1387 = vmatpush1.msra.mxu0 0.0
  %1388 = vmatprep.subr.mxu0 0.0
  %1389 = vmatpush1.msra.mxu0 0.0
  %1390 = vmatprep.subr.mxu0 0.0
  %1391 = vmatpush1.msra.mxu0 0.0
  %1392 = vmatprep.subr.mxu0 0.0
  %1393 = vmatpush1.msra.mxu0 0.0
  %1394 = vmatprep.subr.mxu0 0.0
  %1395 = vmatpush1.msra.mxu0 0.0
  %1396 = vmatprep.mubr.f32.mxu0 0.0
  %1397 = vmatmul.mubr.f32.gmra.mrb[0].mxu0 %v93
  %v1398 = vpop.f32.mrb[0].mxu0
  %v1399 = vadd.f32 0.0, %v1398
  %v1400 = vpop.f32.mrb[0].mxu0
  %v1401 = vadd.f32 0.0, %v1400
  %1402 = vmatprep.mubr.f32.mxu0 0.0
  %1403 = vmatmul.mubr.f32.gmra.mrb[0].mxu0 %v96
  %v1404 = vpop.f32.mrb[0].mxu0
  %v1405 = vadd.f32 0.0, %v1404
  %v1406 = vpop.f32.mrb[0].mxu0
  %v1407 = vadd.f32 0.0, %v1406
  %1408 = vmatprep.mubr.f32.mxu0 0.0
  %1409 = vmatmul.mubr.f32.gmra.mrb[0].mxu0 %v99
  %v1410 = vpop.f32.mrb[0].mxu0
  %v1411 = vadd.f32 0.0, %v1410
  %v1412 = vpop.f32.mrb[0].mxu0
  %v1413 = vadd.f32 0.0, %v1412
  %1414 = vmatprep.mubr.f32.mxu0 0.0
  %1415 = vmatmul.mubr.f32.gmra.mrb[0].mxu0 %v102
  %v1416 = vpop.f32.mrb[0].mxu0
  %v1417 = vadd.f32 0.0, %v1416
  %v1418 = vpop.f32.mrb[0].mxu0
  %v1419 = vadd.f32 0.0, %v1418
  %1420 = vmatprep.mubr.f32.mxu0 0.0
  %1421 = vmatmul.mubr.f32.gmra.mrb[0].mxu0 %v105
  %v1422 = vpop.f32.mrb[0].mxu0
  %v1423 = vadd.f32 0.0, %v1422
  %v1424 = vpop.f32.mrb[0].mxu0
  %v1425 = vadd.f32 0.0, %v1424
  %1426 = vmatprep.mubr.f32.mxu0 0.0
  %1427 = vmatmul.mubr.f32.gmra.mrb[0].mxu0 %v108
  %v1428 = vpop.f32.mrb[0].mxu0
  %v1429 = vadd.f32 0.0, %v1428
  %v1430 = vpop.f32.mrb[0].mxu0
  %v1431 = vadd.f32 0.0, %v1430
  %1432 = vmatprep.mubr.f32.mxu0 0.0
  %1433 = vmatmul.mubr.f32.gmra.mrb[0].mxu0 %v111
  %v1434 = vpop.f32.mrb[0].mxu0
  %v1435 = vadd.f32 0.0, %v1434
  %v1436 = vpop.f32.mrb[0].mxu0
  %v1437 = vadd.f32 0.0, %v1436
  %1438 = vmatprep.mubr.f32.mxu0 0.0
  %1439 = vmatmul.mubr.f32.gmra.mrb[0].mxu0 %v114
  %v1440 = vpop.f32.mrb[0].mxu0
  %v1441 = vadd.f32 0.0, %v1440
  %v1442 = vpop.f32.mrb[0].mxu0
  %v1443 = vadd.f32 0.0, %v1442
  %1444 = vmatprep.mubr.f32.mxu0 0.0
  %1445 = vmatmul.mubr.f32.gmra.mrb[0].mxu0 %v117
  %v1446 = vpop.f32.mrb[0].mxu0
  %v1447 = vadd.f32 0.0, %v1446
  %v1448 = vpop.f32.mrb[0].mxu0
  %v1449 = vadd.f32 0.0, %v1448
  %1450 = vmatprep.mubr.f32.mxu0 0.0
  %1451 = vmatmul.mubr.f32.gmra.mrb[0].mxu0 %v120
  %v1452 = vpop.f32.mrb[0].mxu0
  %v1453 = vadd.f32 0.0, %v1452
  %v1454 = vpop.f32.mrb[0].mxu0
  %v1455 = vadd.f32 0.0, %v1454
  %1456 = vmatprep.mubr.f32.mxu0 0.0
  %1457 = vmatmul.mubr.f32.gmra.mrb[0].mxu0 %v123
  %v1458 = vpop.f32.mrb[0].mxu0
  %v1459 = vadd.f32 0.0, %v1458
  %v1460 = vpop.f32.mrb[0].mxu0
  %v1461 = vadd.f32 0.0, %v1460
  %1462 = vmatprep.mubr.f32.mxu0 0.0
  %1463 = vmatmul.mubr.f32.gmra.mrb[0].mxu0 %v126
  %v1464 = vpop.f32.mrb[0].mxu0
  %v1465 = vadd.f32 0.0, %v1464
  %v1466 = vpop.f32.mrb[0].mxu0
  %v1467 = vadd.f32 0.0, %v1466
  %1468 = vmatprep.mubr.f32.mxu0 0.0
  %1469 = vmatmul.mubr.f32.gmra.mrb[0].mxu0 %v129
  %v1470 = vpop.f32.mrb[0].mxu0
  %v1471 = vadd.f32 0.0, %v1470
  %v1472 = vpop.f32.mrb[0].mxu0
  %v1473 = vadd.f32 0.0, %v1472
  %1474 = vmatprep.mubr.f32.mxu0 0.0
  %1475 = vmatmul.mubr.f32.gmra.mrb[0].mxu0 %v132
  %v1476 = vpop.f32.mrb[0].mxu0
  %v1477 = vadd.f32 0.0, %v1476
  %v1478 = vpop.f32.mrb[0].mxu0
  %v1479 = vadd.f32 0.0, %v1478
  %1480 = vmatprep.mubr.f32.mxu0 0.0
  %1481 = vmatmul.mubr.f32.gmra.mrb[0].mxu0 %v135
  %v1482 = vpop.f32.mrb[0].mxu0
  %v1483 = vadd.f32 0.0, %v1482
  %v1484 = vpop.f32.mrb[0].mxu0
  %v1485 = vadd.f32 0.0, %v1484
  %1486 = vmatprep.mubr.f32.mxu0 0.0
  %1487 = vmatmul.mubr.f32.gmra.mrb[0].mxu0 %v138
  %v1488 = vpop.f32.mrb[0].mxu0
  %v1489 = vadd.f32 0.0, %v1488
  %v1490 = vpop.f32.mrb[0].mxu0
  %v1491 = vadd.f32 0.0, %v1490
  %1492 = vmatprep.mubr.f32.mxu0 0.0
  %1493 = vmatmul.mubr.f32.gmra.mrb[0].mxu0 %v141
  %v1494 = vpop.f32.mrb[0].mxu0
  %v1495 = vadd.f32 0.0, %v1494
  %v1496 = vpop.f32.mrb[0].mxu0
  %v1497 = vadd.f32 0.0, %v1496
  %1498 = vmatprep.mubr.f32.mxu0 0.0
  %1499 = vmatmul.mubr.f32.gmra.mrb[0].mxu0 %v144
  %v1500 = vpop.f32.mrb[0].mxu0
  %v1501 = vadd.f32 0.0, %v1500
  %v1502 = vpop.f32.mrb[0].mxu0
  %v1503 = vadd.f32 0.0, %v1502
  %1504 = vmatprep.mubr.f32.mxu0 0.0
  %1505 = vmatmul.mubr.f32.gmra.mrb[0].mxu0 %v147
  %v1506 = vpop.f32.mrb[0].mxu0
  %v1507 = vadd.f32 0.0, %v1506
  %v1508 = vpop.f32.mrb[0].mxu0
  %v1509 = vadd.f32 0.0, %v1508
  %1510 = vmatprep.mubr.f32.mxu0 0.0
  %1511 = vmatmul.mubr.f32.gmra.mrb[0].mxu0 %v150
  %v1512 = vpop.f32.mrb[0].mxu0
  %v1513 = vadd.f32 0.0, %v1512
  %v1514 = vpop.f32.mrb[0].mxu0
  %v1515 = vadd.f32 0.0, %v1514
  %1516 = vmatprep.mubr.f32.mxu0 0.0
  %1517 = vmatmul.mubr.f32.gmra.mrb[0].mxu0 %v153
  %v1518 = vpop.f32.mrb[0].mxu0
  %v1519 = vadd.f32 0.0, %v1518
  %v1520 = vpop.f32.mrb[0].mxu0
  %v1521 = vadd.f32 0.0, %v1520
  %1522 = vmatprep.mubr.f32.mxu0 0.0
  %1523 = vmatmul.mubr.f32.gmra.mrb[0].mxu0 %v156
  %v1524 = vpop.f32.mrb[0].mxu0
  %v1525 = vadd.f32 0.0, %v1524
  %v1526 = vpop.f32.mrb[0].mxu0
  %v1527 = vadd.f32 0.0, %v1526
  %1528 = vmatprep.mubr.f32.mxu0 0.0
  %1529 = vmatmul.mubr.f32.gmra.mrb[0].mxu0 %v159
  %v1530 = vpop.f32.mrb[0].mxu0
  %v1531 = vadd.f32 0.0, %v1530
  %v1532 = vpop.f32.mrb[0].mxu0
  %v1533 = vadd.f32 0.0, %v1532
  %1534 = vmatprep.mubr.f32.mxu0 0.0
  %1535 = vmatmul.mubr.f32.gmra.mrb[0].mxu0 %v162
  %v1536 = vpop.f32.mrb[0].mxu0
  %v1537 = vadd.f32 0.0, %v1536
  %v1538 = vpop.f32.mrb[0].mxu0
  %v1539 = vadd.f32 0.0, %v1538
  %1540 = vmatprep.mubr.f32.mxu0 0.0
  %1541 = vmatmul.mubr.f32.gmra.mrb[0].mxu0 %v165
  %v1542 = vpop.f32.mrb[0].mxu0
  %v1543 = vadd.f32 0.0, %v1542
  %v1544 = vpop.f32.mrb[0].mxu0
  %v1545 = vadd.f32 0.0, %v1544
  %1546 = vmatprep.mubr.f32.mxu0 0.0
  %1547 = vmatmul.mubr.f32.gmra.mrb[0].mxu0 %v1097
  %v1548 = vpop.f32.mrb[0].mxu0
  %v1549 = vadd.f32 0.0, %v1548
  %v1550 = vpop.f32.mrb[0].mxu0
  %v1551 = vadd.f32 0.0, %v1550
  %1552 = vdwg.mxu0
  %v1553 = vadd.f32 %v704, %v1178
  %v1554 = vadd.f32 %v706, %v1180
  %v1555 = vadd.f32 %v925, %v1399
  %v1556 = vadd.f32 %v927, %v1401
  %v1557 = vadd.f32 %v710, %v1184
  %v1558 = vadd.f32 %v712, %v1186
  %v1559 = vadd.f32 %v931, %v1405
  %v1560 = vadd.f32 %v933, %v1407
  %v1561 = vadd.f32 %v716, %v1190
  %v1562 = vadd.f32 %v718, %v1192
  %v1563 = vadd.f32 %v937, %v1411
  %v1564 = vadd.f32 %v939, %v1413
  %v1565 = vadd.f32 %v722, %v1196
  %v1566 = vadd.f32 %v724, %v1198
  %v1567 = vadd.f32 %v943, %v1417
  %v1568 = vadd.f32 %v945, %v1419
  %v1569 = vadd.f32 %v728, %v1202
  %v1570 = vadd.f32 %v730, %v1204
  %v1571 = vadd.f32 %v949, %v1423
  %v1572 = vadd.f32 %v951, %v1425
  %v1573 = vadd.f32 %v734, %v1208
  %v1574 = vadd.f32 %v736, %v1210
  %v1575 = vadd.f32 %v955, %v1429
  %v1576 = vadd.f32 %v957, %v1431
  %v1577 = vadd.f32 %v740, %v1214
  %v1578 = vadd.f32 %v742, %v1216
  %v1579 = vadd.f32 %v961, %v1435
  %v1580 = vadd.f32 %v963, %v1437
  %v1581 = vadd.f32 %v746, %v1220
  %v1582 = vadd.f32 %v748, %v1222
  %v1583 = vadd.f32 %v967, %v1441
  %v1584 = vadd.f32 %v969, %v1443
  %v1585 = vadd.f32 %v752, %v1226
  %v1586 = vadd.f32 %v754, %v1228
  %v1587 = vadd.f32 %v973, %v1447
  %v1588 = vadd.f32 %v975, %v1449
  %v1589 = vadd.f32 %v758, %v1232
  %v1590 = vadd.f32 %v760, %v1234
  %v1591 = vadd.f32 %v979, %v1453
  %v1592 = vadd.f32 %v981, %v1455
  %v1593 = vadd.f32 %v764, %v1238
  %v1594 = vadd.f32 %v766, %v1240
  %v1595 = vadd.f32 %v985, %v1459
  %v1596 = vadd.f32 %v987, %v1461
  %v1597 = vadd.f32 %v770, %v1244
  %v1598 = vadd.f32 %v772, %v1246
  %v1599 = vadd.f32 %v991, %v1465
  %v1600 = vadd.f32 %v993, %v1467
  %v1601 = vadd.f32 %v776, %v1250
  %v1602 = vadd.f32 %v778, %v1252
  %v1603 = vadd.f32 %v997, %v1471
  %v1604 = vadd.f32 %v999, %v1473
  %v1605 = vadd.f32 %v782, %v1256
  %v1606 = vadd.f32 %v784, %v1258
  %v1607 = vadd.f32 %v1003, %v1477
  %v1608 = vadd.f32 %v1005, %v1479
  %v1609 = vadd.f32 %v788, %v1262
  %v1610 = vadd.f32 %v790, %v1264
  %v1611 = vadd.f32 %v1009, %v1483
  %v1612 = vadd.f32 %v1011, %v1485
  %v1613 = vadd.f32 %v794, %v1268
  %v1614 = vadd.f32 %v796, %v1270
  %v1615 = vadd.f32 %v1015, %v1489
  %v1616 = vadd.f32 %v1017, %v1491
  %v1617 = vadd.f32 %v800, %v1274
  %v1618 = vadd.f32 %v802, %v1276
  %v1619 = vadd.f32 %v1021, %v1495
  %v1620 = vadd.f32 %v1023, %v1497
  %v1621 = vadd.f32 %v806, %v1280
  %v1622 = vadd.f32 %v808, %v1282
  %v1623 = vadd.f32 %v1027, %v1501
  %v1624 = vadd.f32 %v1029, %v1503
  %v1625 = vadd.f32 %v812, %v1286
  %v1626 = vadd.f32 %v814, %v1288
  %v1627 = vadd.f32 %v1033, %v1507
  %v1628 = vadd.f32 %v1035, %v1509
  %v1629 = vadd.f32 %v818, %v1292
  %v1630 = vadd.f32 %v820, %v1294
  %v1631 = vadd.f32 %v1039, %v1513
  %v1632 = vadd.f32 %v1041, %v1515
  %v1633 = vadd.f32 %v824, %v1298
  %v1634 = vadd.f32 %v826, %v1300
  %v1635 = vadd.f32 %v1045, %v1519
  %v1636 = vadd.f32 %v1047, %v1521
  %v1637 = vadd.f32 %v830, %v1304
  %v1638 = vadd.f32 %v832, %v1306
  %v1639 = vadd.f32 %v1051, %v1525
  %v1640 = vadd.f32 %v1053, %v1527
  %v1641 = vadd.f32 %v836, %v1310
  %v1642 = vadd.f32 %v838, %v1312
  %v1643 = vadd.f32 %v1057, %v1531
  %v1644 = vadd.f32 %v1059, %v1533
  %v1645 = vadd.f32 %v842, %v1316
  %v1646 = vadd.f32 %v844, %v1318
  %v1647 = vadd.f32 %v1063, %v1537
  %v1648 = vadd.f32 %v1065, %v1539
  %v1649 = vadd.f32 %v848, %v1322
  %v1650 = vadd.f32 %v850, %v1324
  %v1651 = vadd.f32 %v1069, %v1543
  %v1652 = vadd.f32 %v1071, %v1545
  %v1653 = vadd.f32 %v854, %v1328
  %v1654 = vadd.f32 %v856, %v1330
  %v1655 = vadd.f32 %v1075, %v1549
  %v1656 = vadd.f32 %v1077, %v1551
  %v1657 = vmax.f32 %v1553, 0.0
  %v1658 = vmax.f32 %v1554, 0.0
  %v1659 = vmax.f32 %v1555, 0.0
  %v1660 = vmax.f32 %v1556, 0.0
  %v1661 = vmax.f32 %v1557, 0.0
  %v1662 = vmax.f32 %v1558, 0.0
  %v1663 = vmax.f32 %v1559, 0.0
  %v1664 = vmax.f32 %v1560, 0.0
  %v1665 = vmax.f32 %v1561, 0.0
  %v1666 = vmax.f32 %v1562, 0.0
  %v1667 = vmax.f32 %v1563, 0.0
  %v1668 = vmax.f32 %v1564, 0.0
  %v1669 = vmax.f32 %v1565, 0.0
  %v1670 = vmax.f32 %v1566, 0.0
  %v1671 = vmax.f32 %v1567, 0.0
  %v1672 = vmax.f32 %v1568, 0.0
  %v1673 = vmax.f32 %v1569, 0.0
  %v1674 = vmax.f32 %v1570, 0.0
  %v1675 = vmax.f32 %v1571, 0.0
  %v1676 = vmax.f32 %v1572, 0.0
  %v1677 = vmax.f32 %v1573, 0.0
  %v1678 = vmax.f32 %v1574, 0.0
  %v1679 = vmax.f32 %v1575, 0.0
  %v1680 = vmax.f32 %v1576, 0.0
  %v1681 = vmax.f32 %v1577, 0.0
  %v1682 = vmax.f32 %v1578, 0.0
  %v1683 = vmax.f32 %v1579, 0.0
  %v1684 = vmax.f32 %v1580, 0.0
  %v1685 = vmax.f32 %v1581, 0.0
  %v1686 = vmax.f32 %v1582, 0.0
  %v1687 = vmax.f32 %v1583, 0.0
  %v1688 = vmax.f32 %v1584, 0.0
  %v1689 = vmax.f32 %v1585, 0.0
  %v1690 = vmax.f32 %v1586, 0.0
  %v1691 = vmax.f32 %v1587, 0.0
  %v1692 = vmax.f32 %v1588, 0.0
  %v1693 = vmax.f32 %v1589, 0.0
  %v1694 = vmax.f32 %v1590, 0.0
  %v1695 = vmax.f32 %v1591, 0.0
  %v1696 = vmax.f32 %v1592, 0.0
  %v1697 = vmax.f32 %v1593, 0.0
  %v1698 = vmax.f32 %v1594, 0.0
  %v1699 = vmax.f32 %v1595, 0.0
  %v1700 = vmax.f32 %v1596, 0.0
  %v1701 = vmax.f32 %v1597, 0.0
  %v1702 = vmax.f32 %v1598, 0.0
  %v1703 = vmax.f32 %v1599, 0.0
  %v1704 = vmax.f32 %v1600, 0.0
  %v1705 = vmax.f32 %v1601, 0.0
  %v1706 = vmax.f32 %v1602, 0.0
  %v1707 = vmax.f32 %v1603, 0.0
  %v1708 = vmax.f32 %v1604, 0.0
  %v1709 = vmax.f32 %v1605, 0.0
  %v1710 = vmax.f32 %v1606, 0.0
  %v1711 = vmax.f32 %v1607, 0.0
  %v1712 = vmax.f32 %v1608, 0.0
  %v1713 = vmax.f32 %v1609, 0.0
  %v1714 = vmax.f32 %v1610, 0.0
  %v1715 = vmax.f32 %v1611, 0.0
  %v1716 = vmax.f32 %v1612, 0.0
  %v1717 = vmax.f32 %v1613, 0.0
  %v1718 = vmax.f32 %v1614, 0.0
  %v1719 = vmax.f32 %v1615, 0.0
  %v1720 = vmax.f32 %v1616, 0.0
  %v1721 = vmax.f32 %v1617, 0.0
  %v1722 = vmax.f32 %v1618, 0.0
  %v1723 = vmax.f32 %v1619, 0.0
  %v1724 = vmax.f32 %v1620, 0.0
  %v1725 = vmax.f32 %v1621, 0.0
  %v1726 = vmax.f32 %v1622, 0.0
  %v1727 = vmax.f32 %v1623, 0.0
  %v1728 = vmax.f32 %v1624, 0.0
  %v1729 = vmax.f32 %v1625, 0.0
  %v1730 = vmax.f32 %v1626, 0.0
  %v1731 = vmax.f32 %v1627, 0.0
  %v1732 = vmax.f32 %v1628, 0.0
  %v1733 = vmax.f32 %v1629, 0.0
  %v1734 = vmax.f32 %v1630, 0.0
  %v1735 = vmax.f32 %v1631, 0.0
  %v1736 = vmax.f32 %v1632, 0.0
  %v1737 = vmax.f32 %v1633, 0.0
  %v1738 = vmax.f32 %v1634, 0.0
  %v1739 = vmax.f32 %v1635, 0.0
  %v1740 = vmax.f32 %v1636, 0.0
  %v1741 = vmax.f32 %v1637, 0.0
  %v1742 = vmax.f32 %v1638, 0.0
  %v1743 = vmax.f32 %v1639, 0.0
  %v1744 = vmax.f32 %v1640, 0.0
  %v1745 = vmax.f32 %v1641, 0.0
  %v1746 = vmax.f32 %v1642, 0.0
  %v1747 = vmax.f32 %v1643, 0.0
  %v1748 = vmax.f32 %v1644, 0.0
  %v1749 = vmax.f32 %v1645, 0.0
  %v1750 = vmax.f32 %v1646, 0.0
  %v1751 = vmax.f32 %v1647, 0.0
  %v1752 = vmax.f32 %v1648, 0.0
  %v1753 = vmax.f32 %v1649, 0.0
  %v1754 = vmax.f32 %v1650, 0.0
  %v1755 = vmax.f32 %v1651, 0.0
  %v1756 = vmax.f32 %v1652, 0.0
  %v1757 = vmax.f32 %v1653, 0.0
  %v1758 = vmax.f32 %v1654, 0.0
  %v1759 = vmax.f32 %v1655, 0.0
  %v1760 = vmax.f32 %v1656, 0.0
  %v1761 = vmax.f32 %v1657, %v1661
  %v1762 = vmax.f32 %v1658, %v1662
  %v1763 = vmax.f32 %v1659, %v1663
  %v1764 = vmax.f32 %v1660, %v1664
  %1769 = vrot.lane.b32.xlu0 %v1761, 112
  %v1770 = vpop.permute.xlu0 %1769
  %1771 = vrot.lane.b32.xlu0 %v1762, 112
  %v1772 = vpop.permute.xlu0 %1771
  %1773 = vrot.lane.b32.xlu0 %v1763, 112
  %v1774 = vpop.permute.xlu0 %1773
  %1775 = vrot.lane.b32.xlu0 %v1764, 112
  %v1776 = vpop.permute.xlu0 %1775
  %vm1777 = vcmask 916480
  %v1778 = vsel %vm1777, %v1770, %v1772
  %v1779 = vsel %vm1777, %v1772, %v1774
  %v1780 = vsel %vm1777, %v1774, %v1776
  %v1785 = vmax.f32 %v1761, %v1778
  %v1786 = vmax.f32 %v1762, %v1779
  %v1787 = vmax.f32 %v1763, %v1780
  %v1788 = vmax.f32 %v1764, %v1776
  %v1789 = vmax.f32 %v1665, %v1669
  %v1790 = vmax.f32 %v1666, %v1670
  %v1791 = vmax.f32 %v1667, %v1671
  %v1792 = vmax.f32 %v1668, %v1672
  %1797 = vrot.lane.b32.xlu0 %v1789, 112
  %v1798 = vpop.permute.xlu0 %1797
  %1799 = vrot.lane.b32.xlu0 %v1790, 112
  %v1800 = vpop.permute.xlu0 %1799
  %1801 = vrot.lane.b32.xlu0 %v1791, 112
  %v1802 = vpop.permute.xlu0 %1801
  %1803 = vrot.lane.b32.xlu0 %v1792, 112
  %v1804 = vpop.permute.xlu0 %1803
  %v1805 = vsel %vm1777, %v1798, %v1800
  %v1806 = vsel %vm1777, %v1800, %v1802
  %v1807 = vsel %vm1777, %v1802, %v1804
  %v1812 = vmax.f32 %v1789, %v1805
  %v1813 = vmax.f32 %v1790, %v1806
  %v1814 = vmax.f32 %v1791, %v1807
  %v1815 = vmax.f32 %v1792, %v1804
  %v1816 = vmax.f32 %v1673, %v1677
  %v1817 = vmax.f32 %v1674, %v1678
  %v1818 = vmax.f32 %v1675, %v1679
  %v1819 = vmax.f32 %v1676, %v1680
  %1824 = vrot.lane.b32.xlu0 %v1816, 112
  %v1825 = vpop.permute.xlu0 %1824
  %1826 = vrot.lane.b32.xlu0 %v1817, 112
  %v1827 = vpop.permute.xlu0 %1826
  %1828 = vrot.lane.b32.xlu0 %v1818, 112
  %v1829 = vpop.permute.xlu0 %1828
  %1830 = vrot.lane.b32.xlu0 %v1819, 112
  %v1831 = vpop.permute.xlu0 %1830
  %v1832 = vsel %vm1777, %v1825, %v1827
  %v1833 = vsel %vm1777, %v1827, %v1829
  %v1834 = vsel %vm1777, %v1829, %v1831
  %v1839 = vmax.f32 %v1816, %v1832
  %v1840 = vmax.f32 %v1817, %v1833
  %v1841 = vmax.f32 %v1818, %v1834
  %v1842 = vmax.f32 %v1819, %v1831
  %v1843 = vmax.f32 %v1681, %v1685
  %v1844 = vmax.f32 %v1682, %v1686
  %v1845 = vmax.f32 %v1683, %v1687
  %v1846 = vmax.f32 %v1684, %v1688
  %1851 = vrot.lane.b32.xlu0 %v1843, 112
  %v1852 = vpop.permute.xlu0 %1851
  %1853 = vrot.lane.b32.xlu0 %v1844, 112
  %v1854 = vpop.permute.xlu0 %1853
  %1855 = vrot.lane.b32.xlu0 %v1845, 112
  %v1856 = vpop.permute.xlu0 %1855
  %1857 = vrot.lane.b32.xlu0 %v1846, 112
  %v1858 = vpop.permute.xlu0 %1857
  %v1859 = vsel %vm1777, %v1852, %v1854
  %v1860 = vsel %vm1777, %v1854, %v1856
  %v1861 = vsel %vm1777, %v1856, %v1858
  %v1866 = vmax.f32 %v1843, %v1859
  %v1867 = vmax.f32 %v1844, %v1860
  %v1868 = vmax.f32 %v1845, %v1861
  %v1869 = vmax.f32 %v1846, %v1858
  %v1870 = vmax.f32 %v1689, %v1693
  %v1871 = vmax.f32 %v1690, %v1694
  %v1872 = vmax.f32 %v1691, %v1695
  %v1873 = vmax.f32 %v1692, %v1696
  %1878 = vrot.lane.b32.xlu0 %v1870, 112
  %v1879 = vpop.permute.xlu0 %1878
  %1880 = vrot.lane.b32.xlu0 %v1871, 112
  %v1881 = vpop.permute.xlu0 %1880
  %1882 = vrot.lane.b32.xlu0 %v1872, 112
  %v1883 = vpop.permute.xlu0 %1882
  %1884 = vrot.lane.b32.xlu0 %v1873, 112
  %v1885 = vpop.permute.xlu0 %1884
  %v1886 = vsel %vm1777, %v1879, %v1881
  %v1887 = vsel %vm1777, %v1881, %v1883
  %v1888 = vsel %vm1777, %v1883, %v1885
  %v1893 = vmax.f32 %v1870, %v1886
  %v1894 = vmax.f32 %v1871, %v1887
  %v1895 = vmax.f32 %v1872, %v1888
  %v1896 = vmax.f32 %v1873, %v1885
  %v1897 = vmax.f32 %v1697, %v1701
  %v1898 = vmax.f32 %v1698, %v1702
  %v1899 = vmax.f32 %v1699, %v1703
  %v1900 = vmax.f32 %v1700, %v1704
  %1905 = vrot.lane.b32.xlu0 %v1897, 112
  %v1906 = vpop.permute.xlu0 %1905
  %1907 = vrot.lane.b32.xlu0 %v1898, 112
  %v1908 = vpop.permute.xlu0 %1907
  %1909 = vrot.lane.b32.xlu0 %v1899, 112
  %v1910 = vpop.permute.xlu0 %1909
  %1911 = vrot.lane.b32.xlu0 %v1900, 112
  %v1912 = vpop.permute.xlu0 %1911
  %v1913 = vsel %vm1777, %v1906, %v1908
  %v1914 = vsel %vm1777, %v1908, %v1910
  %v1915 = vsel %vm1777, %v1910, %v1912
  %v1920 = vmax.f32 %v1897, %v1913
  %v1921 = vmax.f32 %v1898, %v1914
  %v1922 = vmax.f32 %v1899, %v1915
  %v1923 = vmax.f32 %v1900, %v1912
  %v1924 = vmax.f32 %v1705, %v1709
  %v1925 = vmax.f32 %v1706, %v1710
  %v1926 = vmax.f32 %v1707, %v1711
  %v1927 = vmax.f32 %v1708, %v1712
  %1932 = vrot.lane.b32.xlu0 %v1924, 112
  %v1933 = vpop.permute.xlu0 %1932
  %1934 = vrot.lane.b32.xlu0 %v1925, 112
  %v1935 = vpop.permute.xlu0 %1934
  %1936 = vrot.lane.b32.xlu0 %v1926, 112
  %v1937 = vpop.permute.xlu0 %1936
  %1938 = vrot.lane.b32.xlu0 %v1927, 112
  %v1939 = vpop.permute.xlu0 %1938
  %v1940 = vsel %vm1777, %v1933, %v1935
  %v1941 = vsel %vm1777, %v1935, %v1937
  %v1942 = vsel %vm1777, %v1937, %v1939
  %v1947 = vmax.f32 %v1924, %v1940
  %v1948 = vmax.f32 %v1925, %v1941
  %v1949 = vmax.f32 %v1926, %v1942
  %v1950 = vmax.f32 %v1927, %v1939
  %v1951 = vmax.f32 %v1713, %v1717
  %v1952 = vmax.f32 %v1714, %v1718
  %v1953 = vmax.f32 %v1715, %v1719
  %v1954 = vmax.f32 %v1716, %v1720
  %1959 = vrot.lane.b32.xlu0 %v1951, 112
  %v1960 = vpop.permute.xlu0 %1959
  %1961 = vrot.lane.b32.xlu0 %v1952, 112
  %v1962 = vpop.permute.xlu0 %1961
  %1963 = vrot.lane.b32.xlu0 %v1953, 112
  %v1964 = vpop.permute.xlu0 %1963
  %1965 = vrot.lane.b32.xlu0 %v1954, 112
  %v1966 = vpop.permute.xlu0 %1965
  %v1967 = vsel %vm1777, %v1960, %v1962
  %v1968 = vsel %vm1777, %v1962, %v1964
  %v1969 = vsel %vm1777, %v1964, %v1966
  %v1974 = vmax.f32 %v1951, %v1967
  %v1975 = vmax.f32 %v1952, %v1968
  %v1976 = vmax.f32 %v1953, %v1969
  %v1977 = vmax.f32 %v1954, %v1966
  %v1978 = vmax.f32 %v1721, %v1725
  %v1979 = vmax.f32 %v1722, %v1726
  %v1980 = vmax.f32 %v1723, %v1727
  %v1981 = vmax.f32 %v1724, %v1728
  %1986 = vrot.lane.b32.xlu0 %v1978, 112
  %v1987 = vpop.permute.xlu0 %1986
  %1988 = vrot.lane.b32.xlu0 %v1979, 112
  %v1989 = vpop.permute.xlu0 %1988
  %1990 = vrot.lane.b32.xlu0 %v1980, 112
  %v1991 = vpop.permute.xlu0 %1990
  %1992 = vrot.lane.b32.xlu0 %v1981, 112
  %v1993 = vpop.permute.xlu0 %1992
  %v1994 = vsel %vm1777, %v1987, %v1989
  %v1995 = vsel %vm1777, %v1989, %v1991
  %v1996 = vsel %vm1777, %v1991, %v1993
  %v2001 = vmax.f32 %v1978, %v1994
  %v2002 = vmax.f32 %v1979, %v1995
  %v2003 = vmax.f32 %v1980, %v1996
  %v2004 = vmax.f32 %v1981, %v1993
  %v2005 = vmax.f32 %v1729, %v1733
  %v2006 = vmax.f32 %v1730, %v1734
  %v2007 = vmax.f32 %v1731, %v1735
  %v2008 = vmax.f32 %v1732, %v1736
  %2013 = vrot.lane.b32.xlu0 %v2005, 112
  %v2014 = vpop.permute.xlu0 %2013
  %2015 = vrot.lane.b32.xlu0 %v2006, 112
  %v2016 = vpop.permute.xlu0 %2015
  %2017 = vrot.lane.b32.xlu0 %v2007, 112
  %v2018 = vpop.permute.xlu0 %2017
  %2019 = vrot.lane.b32.xlu0 %v2008, 112
  %v2020 = vpop.permute.xlu0 %2019
  %v2021 = vsel %vm1777, %v2014, %v2016
  %v2022 = vsel %vm1777, %v2016, %v2018
  %v2023 = vsel %vm1777, %v2018, %v2020
  %v2028 = vmax.f32 %v2005, %v2021
  %v2029 = vmax.f32 %v2006, %v2022
  %v2030 = vmax.f32 %v2007, %v2023
  %v2031 = vmax.f32 %v2008, %v2020
  %v2032 = vmax.f32 %v1737, %v1741
  %v2033 = vmax.f32 %v1738, %v1742
  %v2034 = vmax.f32 %v1739, %v1743
  %v2035 = vmax.f32 %v1740, %v1744
  %2040 = vrot.lane.b32.xlu0 %v2032, 112
  %v2041 = vpop.permute.xlu0 %2040
  %2042 = vrot.lane.b32.xlu0 %v2033, 112
  %v2043 = vpop.permute.xlu0 %2042
  %2044 = vrot.lane.b32.xlu0 %v2034, 112
  %v2045 = vpop.permute.xlu0 %2044
  %2046 = vrot.lane.b32.xlu0 %v2035, 112
  %v2047 = vpop.permute.xlu0 %2046
  %v2048 = vsel %vm1777, %v2041, %v2043
  %v2049 = vsel %vm1777, %v2043, %v2045
  %v2050 = vsel %vm1777, %v2045, %v2047
  %v2055 = vmax.f32 %v2032, %v2048
  %v2056 = vmax.f32 %v2033, %v2049
  %v2057 = vmax.f32 %v2034, %v2050
  %v2058 = vmax.f32 %v2035, %v2047
  %v2059 = vmax.f32 %v1745, %v1749
  %v2060 = vmax.f32 %v1746, %v1750
  %v2061 = vmax.f32 %v1747, %v1751
  %v2062 = vmax.f32 %v1748, %v1752
  %2067 = vrot.lane.b32.xlu0 %v2059, 112
  %v2068 = vpop.permute.xlu0 %2067
  %2069 = vrot.lane.b32.xlu0 %v2060, 112
  %v2070 = vpop.permute.xlu0 %2069
  %2071 = vrot.lane.b32.xlu0 %v2061, 112
  %v2072 = vpop.permute.xlu0 %2071
  %2073 = vrot.lane.b32.xlu0 %v2062, 112
  %v2074 = vpop.permute.xlu0 %2073
  %v2075 = vsel %vm1777, %v2068, %v2070
  %v2076 = vsel %vm1777, %v2070, %v2072
  %v2077 = vsel %vm1777, %v2072, %v2074
  %v2082 = vmax.f32 %v2059, %v2075
  %v2083 = vmax.f32 %v2060, %v2076
  %v2084 = vmax.f32 %v2061, %v2077
  %v2085 = vmax.f32 %v2062, %v2074
  %v2086 = vmax.f32 %v1753, %v1757
  %v2087 = vmax.f32 %v1754, %v1758
  %v2088 = vmax.f32 %v1755, %v1759
  %v2089 = vmax.f32 %v1756, %v1760
  %2094 = vrot.lane.b32.xlu0 %v2086, 112
  %v2095 = vpop.permute.xlu0 %2094
  %2096 = vrot.lane.b32.xlu0 %v2087, 112
  %v2097 = vpop.permute.xlu0 %2096
  %2098 = vrot.lane.b32.xlu0 %v2088, 112
  %v2099 = vpop.permute.xlu0 %2098
  %2100 = vrot.lane.b32.xlu0 %v2089, 112
  %v2101 = vpop.permute.xlu0 %2100
  %v2102 = vsel %vm1777, %v2095, %v2097
  %v2103 = vsel %vm1777, %v2097, %v2099
  %v2104 = vsel %vm1777, %v2099, %v2101
  %v2109 = vmax.f32 %v2086, %v2102
  %v2110 = vmax.f32 %v2087, %v2103
  %v2111 = vmax.f32 %v2088, %v2104
  %v2112 = vmax.f32 %v2089, %v2101
  %v2113 = vld [vmem:[%s2] sm:$0xff]
  %v2114 = vld [vmem:[%s2 + $0x8] sm:$0xff]
  %v2115 = vld [vmem:[%s2 + $0x10] sm:$0xff]
  %v2116 = vld [vmem:[%s2 + $0x18] sm:$0xff]
  %v2117 = vld [vmem:[%s2 + $0x20] sm:$0xff]
  %v2118 = vld [vmem:[%s2 + $0x28] sm:$0xff]
  %v2119 = vld [vmem:[%s2 + $0x30] sm:$0xff]
  %v2120 = vld [vmem:[%s2 + $0x38] sm:$0xff]
  %v2121 = vld [vmem:[%s2 + $0x40] sm:$0xff]
  %v2122 = vld [vmem:[%s2 + $0x48] sm:$0xff]
  %v2123 = vld [vmem:[%s2 + $0x50] sm:$0xff]
  %v2124 = vld [vmem:[%s2 + $0x58] sm:$0xff]
  %v2125 = vld [vmem:[%s2 + $0x60] sm:$0xff]
  %v2126 = vld [vmem:[%s2 + $0x68] sm:$0xff]
  %v2127 = vld [vmem:[%s2 + $0x70] sm:$0xff]
  %v2128 = vld [vmem:[%s2 + $0x78] sm:$0xff]
  %v2129 = vld [vmem:[%s2 + $0x80] sm:$0xff]
  %v2130 = vld [vmem:[%s2 + $0x88] sm:$0xff]
  %v2131 = vld [vmem:[%s2 + $0x90] sm:$0xff]
  %v2132 = vld [vmem:[%s2 + $0x98] sm:$0xff]
  %v2133 = vld [vmem:[%s2 + $0xa0] sm:$0xff]
  %v2134 = vld [vmem:[%s2 + $0xa8] sm:$0xff]
  %v2135 = vld [vmem:[%s2 + $0xb0] sm:$0xff]
  %v2136 = vld [vmem:[%s2 + $0xb8] sm:$0xff]
  %v2137 = vld [vmem:[%s2 + $0xc0] sm:$0xff]
  %v2138 = vld [vmem:[%s2 + $0xc8] sm:$0xff]
  %v2139 = vld [vmem:[%s2 + $0xd0] sm:$0xff]
  %v2140 = vld [vmem:[%s2 + $0xd8] sm:$0xff]
  %v2141 = vld [vmem:[%s2 + $0xe0] sm:$0xff]
  %v2142 = vld [vmem:[%s2 + $0xe8] sm:$0xff]
  %v2143 = vld [vmem:[%s2 + $0xf0] sm:$0xff]
  %v2144 = vld [vmem:[%s2 + $0xf8] sm:$0xff]
  %v2145 = vld [vmem:[%s2 + $0x100] sm:$0xff]
  %v2146 = vld [vmem:[%s2 + $0x108] sm:$0xff]
  %v2147 = vld [vmem:[%s2 + $0x110] sm:$0xff]
  %v2148 = vld [vmem:[%s2 + $0x118] sm:$0xff]
  %v2149 = vld [vmem:[%s2 + $0x120] sm:$0xff]
  %v2150 = vld [vmem:[%s2 + $0x128] sm:$0xff]
  %v2151 = vld [vmem:[%s2 + $0x130] sm:$0xff]
  %v2152 = vld [vmem:[%s2 + $0x138] sm:$0xff]
  %v2153 = vld [vmem:[%s2 + $0x140] sm:$0xff]
  %v2154 = vld [vmem:[%s2 + $0x148] sm:$0xff]
  %v2155 = vld [vmem:[%s2 + $0x150] sm:$0xff]
  %v2156 = vld [vmem:[%s2 + $0x158] sm:$0xff]
  %v2157 = vld [vmem:[%s2 + $0x160] sm:$0xff]
  %v2158 = vld [vmem:[%s2 + $0x168] sm:$0xff]
  %v2159 = vld [vmem:[%s2 + $0x170] sm:$0xff]
  %v2160 = vld [vmem:[%s2 + $0x178] sm:$0xff]
  %v2161 = vld [vmem:[%s2 + $0x180] sm:$0xff]
  %v2162 = vld [vmem:[%s2 + $0x188] sm:$0xff]
  %v2163 = vld [vmem:[%s2 + $0x190] sm:$0xff]
  %v2164 = vld [vmem:[%s2 + $0x198] sm:$0xff]
  %v2165 = vld [vmem:[%s2 + $0x1a0] sm:$0xff]
  %v2166 = vld [vmem:[%s2 + $0x1a8] sm:$0xff]
  %v2167 = vld [vmem:[%s2 + $0x1b0] sm:$0xff]
  %v2168 = vld [vmem:[%s2 + $0x1b8] sm:$0xff]
  %v2169 = vld [vmem:[%s2 + $0x1c0] sm:$0xff]
  %v2170 = vld [vmem:[%s2 + $0x1c8] sm:$0xff]
  %v2171 = vld [vmem:[%s2 + $0x1d0] sm:$0xff]
  %v2172 = vld [vmem:[%s2 + $0x1d8] sm:$0xff]
  %v2173 = vld [vmem:[%s2 + $0x1e0] sm:$0xff]
  %v2174 = vld [vmem:[%s2 + $0x1e8] sm:$0xff]
  %v2175 = vld [vmem:[%s2 + $0x1f0] sm:$0xff]
  %v2176 = vld [vmem:[%s2 + $0x1f8] sm:$0xff]
  %v2177 = vld [vmem:[%s2 + $0x200] sm:$0xff]
  %v2178 = vld [vmem:[%s2 + $0x208] sm:$0xff]
  %v2179 = vld [vmem:[%s2 + $0x210] sm:$0xff]
  %v2180 = vld [vmem:[%s2 + $0x218] sm:$0xff]
  %v2181 = vld [vmem:[%s2 + $0x220] sm:$0xff]
  %v2182 = vld [vmem:[%s2 + $0x228] sm:$0xff]
  %v2183 = vld [vmem:[%s2 + $0x230] sm:$0xff]
  %v2184 = vld [vmem:[%s2 + $0x238] sm:$0xff]
  %v2185 = vld [vmem:[%s2 + $0x240] sm:$0xff]
  %v2186 = vld [vmem:[%s2 + $0x248] sm:$0xff]
  %v2187 = vld [vmem:[%s2 + $0x250] sm:$0xff]
  %v2188 = vld [vmem:[%s2 + $0x258] sm:$0xff]
  %v2189 = vld [vmem:[%s2 + $0x260] sm:$0xff]
  %v2190 = vld [vmem:[%s2 + $0x268] sm:$0xff]
  %v2191 = vld [vmem:[%s2 + $0x270] sm:$0xff]
  %v2192 = vld [vmem:[%s2 + $0x278] sm:$0xff]
  %v2193 = vld [vmem:[%s2 + $0x280] sm:$0xff]
  %v2194 = vld [vmem:[%s2 + $0x288] sm:$0xff]
  %v2195 = vld [vmem:[%s2 + $0x290] sm:$0xff]
  %v2196 = vld [vmem:[%s2 + $0x298] sm:$0xff]
  %v2197 = vld [vmem:[%s2 + $0x2a0] sm:$0xff]
  %v2198 = vld [vmem:[%s2 + $0x2a8] sm:$0xff]
  %v2199 = vld [vmem:[%s2 + $0x2b0] sm:$0xff]
  %v2200 = vld [vmem:[%s2 + $0x2b8] sm:$0xff]
  %v2201 = vld [vmem:[%s2 + $0x2c0] sm:$0xff]
  %v2202 = vld [vmem:[%s2 + $0x2c8] sm:$0xff]
  %v2203 = vld [vmem:[%s2 + $0x2d0] sm:$0xff]
  %v2204 = vld [vmem:[%s2 + $0x2d8] sm:$0xff]
  %v2205 = vld [vmem:[%s2 + $0x2e0] sm:$0xff]
  %v2206 = vld [vmem:[%s2 + $0x2e8] sm:$0xff]
  %v2207 = vld [vmem:[%s2 + $0x2f0] sm:$0xff]
  %v2208 = vld [vmem:[%s2 + $0x2f8] sm:$0xff]
  %v2209 = vld [vmem:[%s2 + $0x300] sm:$0xff]
  %v2210 = vld [vmem:[%s2 + $0x308] sm:$0xff]
  %v2211 = vld [vmem:[%s2 + $0x310] sm:$0xff]
  %v2212 = vld [vmem:[%s2 + $0x318] sm:$0xff]
  %s2213 = scalar_lea.vmem %s2, 800
  %v2214 = vld [vmem:[%s2213] sm:$0xff]
  %v2215 = vld [vmem:[%s2213 + $0x8] sm:$0xff]
  %v2216 = vld [vmem:[%s2213 + $0x10] sm:$0xff]
  %v2217 = vld [vmem:[%s2213 + $0x18] sm:$0xff]
  %v2218 = vld [vmem:[%s2213 + $0x20] sm:$0xff]
  %v2219 = vld [vmem:[%s2213 + $0x28] sm:$0xff]
  %v2220 = vld [vmem:[%s2213 + $0x30] sm:$0xff]
  %v2221 = vld [vmem:[%s2213 + $0x38] sm:$0xff]
  %v2222 = vld [vmem:[%s2213 + $0x40] sm:$0xff]
  %v2223 = vld [vmem:[%s2213 + $0x48] sm:$0xff]
  %v2224 = vld [vmem:[%s2213 + $0x50] sm:$0xff]
  %v2225 = vld [vmem:[%s2213 + $0x58] sm:$0xff]
  %v2226 = vld [vmem:[%s2213 + $0x60] sm:$0xff]
  %v2227 = vld [vmem:[%s2213 + $0x68] sm:$0xff]
  %v2228 = vld [vmem:[%s2213 + $0x70] sm:$0xff]
  %v2229 = vld [vmem:[%s2213 + $0x78] sm:$0xff]
  %v2230 = vld [vmem:[%s2213 + $0x80] sm:$0xff]
  %v2231 = vld [vmem:[%s2213 + $0x88] sm:$0xff]
  %v2232 = vld [vmem:[%s2213 + $0x90] sm:$0xff]
  %v2233 = vld [vmem:[%s2213 + $0x98] sm:$0xff]
  %v2234 = vld [vmem:[%s2213 + $0xa0] sm:$0xff]
  %v2235 = vld [vmem:[%s2213 + $0xa8] sm:$0xff]
  %v2236 = vld [vmem:[%s2213 + $0xb0] sm:$0xff]
  %v2237 = vld [vmem:[%s2213 + $0xb8] sm:$0xff]
  %v2238 = vld [vmem:[%s2213 + $0xc0] sm:$0xff]
  %v2239 = vld [vmem:[%s2213 + $0xc8] sm:$0xff]
  %v2240 = vld [vmem:[%s2213 + $0xd0] sm:$0xff]
  %v2241 = vld [vmem:[%s2213 + $0xd8] sm:$0xff]
  %v2242 = vld [vmem:[%s2213 + $0xe0] sm:$0xff]
  %v2243 = vld [vmem:[%s2213 + $0xe8] sm:$0xff]
  %v2244 = vld [vmem:[%s2213 + $0xf0] sm:$0xff]
  %v2245 = vld [vmem:[%s2213 + $0xf8] sm:$0xff]
  %v2246 = vld [vmem:[%s2213 + $0x100] sm:$0xff]
  %v2247 = vld [vmem:[%s2213 + $0x108] sm:$0xff]
  %v2248 = vld [vmem:[%s2213 + $0x110] sm:$0xff]
  %v2249 = vld [vmem:[%s2213 + $0x118] sm:$0xff]
  %v2250 = vld [vmem:[%s2213 + $0x120] sm:$0xff]
  %v2251 = vld [vmem:[%s2213 + $0x128] sm:$0xff]
  %v2252 = vld [vmem:[%s2213 + $0x130] sm:$0xff]
  %v2253 = vld [vmem:[%s2213 + $0x138] sm:$0xff]
  %v2254 = vld [vmem:[%s2213 + $0x140] sm:$0xff]
  %v2255 = vld [vmem:[%s2213 + $0x148] sm:$0xff]
  %v2256 = vld [vmem:[%s2213 + $0x150] sm:$0xff]
  %v2257 = vld [vmem:[%s2213 + $0x158] sm:$0xff]
  %v2258 = vld [vmem:[%s2213 + $0x160] sm:$0xff]
  %v2259 = vld [vmem:[%s2213 + $0x168] sm:$0xff]
  %v2260 = vld [vmem:[%s2213 + $0x170] sm:$0xff]
  %v2261 = vld [vmem:[%s2213 + $0x178] sm:$0xff]
  %v2262 = vld [vmem:[%s2213 + $0x180] sm:$0xff]
  %v2263 = vld [vmem:[%s2213 + $0x188] sm:$0xff]
  %v2264 = vld [vmem:[%s2213 + $0x190] sm:$0xff]
  %v2265 = vld [vmem:[%s2213 + $0x198] sm:$0xff]
  %v2266 = vld [vmem:[%s2213 + $0x1a0] sm:$0xff]
  %v2267 = vld [vmem:[%s2213 + $0x1a8] sm:$0xff]
  %v2268 = vld [vmem:[%s2213 + $0x1b0] sm:$0xff]
  %v2269 = vld [vmem:[%s2213 + $0x1b8] sm:$0xff]
  %v2270 = vld [vmem:[%s2213 + $0x1c0] sm:$0xff]
  %v2271 = vld [vmem:[%s2213 + $0x1c8] sm:$0xff]
  %v2272 = vld [vmem:[%s2213 + $0x1d0] sm:$0xff]
  %v2273 = vld [vmem:[%s2213 + $0x1d8] sm:$0xff]
  %v2274 = vld [vmem:[%s2213 + $0x1e0] sm:$0xff]
  %v2275 = vld [vmem:[%s2213 + $0x1e8] sm:$0xff]
  %v2276 = vld [vmem:[%s2213 + $0x1f0] sm:$0xff]
  %v2277 = vld [vmem:[%s2213 + $0x1f8] sm:$0xff]
  %v2278 = vld [vmem:[%s2213 + $0x200] sm:$0xff]
  %v2279 = vld [vmem:[%s2213 + $0x208] sm:$0xff]
  %v2280 = vld [vmem:[%s2213 + $0x210] sm:$0xff]
  %v2281 = vld [vmem:[%s2213 + $0x218] sm:$0xff]
  %v2282 = vld [vmem:[%s2213 + $0x220] sm:$0xff]
  %v2283 = vld [vmem:[%s2213 + $0x228] sm:$0xff]
  %v2284 = vld [vmem:[%s2213 + $0x230] sm:$0xff]
  %v2285 = vld [vmem:[%s2213 + $0x238] sm:$0xff]
  %v2286 = vld [vmem:[%s2213 + $0x240] sm:$0xff]
  %v2287 = vld [vmem:[%s2213 + $0x248] sm:$0xff]
  %v2288 = vld [vmem:[%s2213 + $0x250] sm:$0xff]
  %v2289 = vld [vmem:[%s2213 + $0x258] sm:$0xff]
  %v2290 = vld [vmem:[%s2213 + $0x260] sm:$0xff]
  %v2291 = vld [vmem:[%s2213 + $0x268] sm:$0xff]
  %v2292 = vld [vmem:[%s2213 + $0x270] sm:$0xff]
  %v2293 = vld [vmem:[%s2213 + $0x278] sm:$0xff]
  %v2294 = vld [vmem:[%s2213 + $0x280] sm:$0xff]
  %v2295 = vld [vmem:[%s2213 + $0x288] sm:$0xff]
  %v2296 = vld [vmem:[%s2213 + $0x290] sm:$0xff]
  %v2297 = vld [vmem:[%s2213 + $0x298] sm:$0xff]
  %v2298 = vld [vmem:[%s2213 + $0x2a0] sm:$0xff]
  %v2299 = vld [vmem:[%s2213 + $0x2a8] sm:$0xff]
  %v2300 = vld [vmem:[%s2213 + $0x2b0] sm:$0xff]
  %v2301 = vld [vmem:[%s2213 + $0x2b8] sm:$0xff]
  %v2302 = vld [vmem:[%s2213 + $0x2c0] sm:$0xff]
  %v2303 = vld [vmem:[%s2213 + $0x2c8] sm:$0xff]
  %v2304 = vld [vmem:[%s2213 + $0x2d0] sm:$0xff]
  %v2305 = vld [vmem:[%s2213 + $0x2d8] sm:$0xff]
  %v2306 = vld [vmem:[%s2213 + $0x2e0] sm:$0xff]
  %v2307 = vld [vmem:[%s2213 + $0x2e8] sm:$0xff]
  %v2308 = vld [vmem:[%s2213 + $0x2f0] sm:$0xff]
  %v2309 = vld [vmem:[%s2213 + $0x2f8] sm:$0xff]
  %v2310 = vld [vmem:[%s2213 + $0x300] sm:$0xff]
  %v2311 = vld [vmem:[%s2213 + $0x308] sm:$0xff]
  %v2312 = vld [vmem:[%s2213 + $0x310] sm:$0xff]
  %v2313 = vld [vmem:[%s2213 + $0x318] sm:$0xff]
  %vm2314 = vcmask 130048
  %v2316 = vsel %vm2314, %v1815, 0
  %v2319 = vsel %vm2314, %v1842, 0
  %v2322 = vsel %vm2314, %v1869, 0
  %v2325 = vsel %vm2314, %v1896, 0
  %v2328 = vsel %vm2314, %v1923, 0
  %v2331 = vsel %vm2314, %v1950, 0
  %v2334 = vsel %vm2314, %v1977, 0
  %v2337 = vsel %vm2314, %v2004, 0
  %v2340 = vsel %vm2314, %v2031, 0
  %v2343 = vsel %vm2314, %v2058, 0
  %v2346 = vsel %vm2314, %v2085, 0
  %2348 = vmatprep.subr.mxu0 %v2215
  %2349 = vmatpush1.msra.mxu0 %v2214
  %2350 = vmatprep.subr.mxu0 %v2217
  %2351 = vmatpush1.msra.mxu0 %v2216
  %2352 = vmatprep.subr.mxu0 %v2219
  %2353 = vmatpush1.msra.mxu0 %v2218
  %2354 = vmatprep.subr.mxu0 %v2221
  %2355 = vmatpush1.msra.mxu0 %v2220
  %2356 = vmatprep.subr.mxu0 %v2223
  %2357 = vmatpush1.msra.mxu0 %v2222
  %2358 = vmatprep.subr.mxu0 %v2225
  %2359 = vmatpush1.msra.mxu0 %v2224
  %2360 = vmatprep.subr.mxu0 %v2227
  %2361 = vmatpush1.msra.mxu0 %v2226
  %2362 = vmatprep.subr.mxu0 %v2229
  %2363 = vmatpush1.msra.mxu0 %v2228
  %2364 = vmatprep.subr.mxu0 %v2231
  %2365 = vmatpush1.msra.mxu0 %v2230
  %2366 = vmatprep.subr.mxu0 %v2233
  %2367 = vmatpush1.msra.mxu0 %v2232
  %2368 = vmatprep.subr.mxu0 %v2235
  %2369 = vmatpush1.msra.mxu0 %v2234
  %2370 = vmatprep.subr.mxu0 %v2237
  %2371 = vmatpush1.msra.mxu0 %v2236
  %2372 = vmatprep.subr.mxu0 %v2239
  %2373 = vmatpush1.msra.mxu0 %v2238
  %2374 = vmatprep.subr.mxu0 %v2241
  %2375 = vmatpush1.msra.mxu0 %v2240
  %2376 = vmatprep.subr.mxu0 %v2243
  %2377 = vmatpush1.msra.mxu0 %v2242
  %2378 = vmatprep.subr.mxu0 %v2245
  %2379 = vmatpush1.msra.mxu0 %v2244
  %2380 = vmatprep.subr.mxu0 %v2247
  %2381 = vmatpush1.msra.mxu0 %v2246
  %2382 = vmatprep.subr.mxu0 %v2249
  %2383 = vmatpush1.msra.mxu0 %v2248
  %2384 = vmatprep.subr.mxu0 %v2251
  %2385 = vmatpush1.msra.mxu0 %v2250
  %2386 = vmatprep.subr.mxu0 %v2253
  %2387 = vmatpush1.msra.mxu0 %v2252
  %2388 = vmatprep.subr.mxu0 %v2255
  %2389 = vmatpush1.msra.mxu0 %v2254
  %2390 = vmatprep.subr.mxu0 %v2257
  %2391 = vmatpush1.msra.mxu0 %v2256
  %2392 = vmatprep.subr.mxu0 %v2259
  %2393 = vmatpush1.msra.mxu0 %v2258
  %2394 = vmatprep.subr.mxu0 %v2261
  %2395 = vmatpush1.msra.mxu0 %v2260
  %2396 = vmatprep.subr.mxu0 %v2263
  %2397 = vmatpush1.msra.mxu0 %v2262
  %2398 = vmatprep.subr.mxu0 %v2265
  %2399 = vmatpush1.msra.mxu0 %v2264
  %2400 = vmatprep.subr.mxu0 %v2267
  %2401 = vmatpush1.msra.mxu0 %v2266
  %2402 = vmatprep.subr.mxu0 %v2269
  %2403 = vmatpush1.msra.mxu0 %v2268
  %2404 = vmatprep.subr.mxu0 %v2271
  %2405 = vmatpush1.msra.mxu0 %v2270
  %2406 = vmatprep.subr.mxu0 %v2273
  %2407 = vmatpush1.msra.mxu0 %v2272
  %2408 = vmatprep.subr.mxu0 %v2275
  %2409 = vmatpush1.msra.mxu0 %v2274
  %2410 = vmatprep.subr.mxu0 %v2277
  %2411 = vmatpush1.msra.mxu0 %v2276
  %2412 = vmatprep.mubr.f32.mxu0 %v1813
  %2413 = vmatmul.mubr.f32.gmra.mrb[0].mxu0 %v1812
  %v2414 = vpop.f32.mrb[0].mxu0
  %v2415 = vadd.f32 0.0, %v2414
  %v2416 = vpop.f32.mrb[0].mxu0
  %v2417 = vadd.f32 0.0, %v2416
  %2418 = vmatprep.mubr.f32.mxu0 %v1840
  %2419 = vmatmul.mubr.f32.gmra.mrb[0].mxu0 %v1839
  %v2420 = vpop.f32.mrb[0].mxu0
  %v2421 = vadd.f32 0.0, %v2420
  %v2422 = vpop.f32.mrb[0].mxu0
  %v2423 = vadd.f32 0.0, %v2422
  %2424 = vmatprep.mubr.f32.mxu0 %v1867
  %2425 = vmatmul.mubr.f32.gmra.mrb[0].mxu0 %v1866
  %v2426 = vpop.f32.mrb[0].mxu0
  %v2427 = vadd.f32 0.0, %v2426
  %v2428 = vpop.f32.mrb[0].mxu0
  %v2429 = vadd.f32 0.0, %v2428
  %2430 = vmatprep.mubr.f32.mxu0 %v1894
  %2431 = vmatmul.mubr.f32.gmra.mrb[0].mxu0 %v1893
  %v2432 = vpop.f32.mrb[0].mxu0
  %v2433 = vadd.f32 0.0, %v2432
  %v2434 = vpop.f32.mrb[0].mxu0
  %v2435 = vadd.f32 0.0, %v2434
  %2436 = vmatprep.mubr.f32.mxu0 %v1921
  %2437 = vmatmul.mubr.f32.gmra.mrb[0].mxu0 %v1920
  %v2438 = vpop.f32.mrb[0].mxu0
  %v2439 = vadd.f32 0.0, %v2438
  %v2440 = vpop.f32.mrb[0].mxu0
  %v2441 = vadd.f32 0.0, %v2440
  %2442 = vmatprep.mubr.f32.mxu0 %v1948
  %2443 = vmatmul.mubr.f32.gmra.mrb[0].mxu0 %v1947
  %v2444 = vpop.f32.mrb[0].mxu0
  %v2445 = vadd.f32 0.0, %v2444
  %v2446 = vpop.f32.mrb[0].mxu0
  %v2447 = vadd.f32 0.0, %v2446
  %2448 = vmatprep.mubr.f32.mxu0 %v1975
  %2449 = vmatmul.mubr.f32.gmra.mrb[0].mxu0 %v1974
  %v2450 = vpop.f32.mrb[0].mxu0
  %v2451 = vadd.f32 0.0, %v2450
  %v2452 = vpop.f32.mrb[0].mxu0
  %v2453 = vadd.f32 0.0, %v2452
  %2454 = vmatprep.mubr.f32.mxu0 %v2002
  %2455 = vmatmul.mubr.f32.gmra.mrb[0].mxu0 %v2001
  %v2456 = vpop.f32.mrb[0].mxu0
  %v2457 = vadd.f32 0.0, %v2456
  %v2458 = vpop.f32.mrb[0].mxu0
  %v2459 = vadd.f32 0.0, %v2458
  %2460 = vmatprep.mubr.f32.mxu0 %v2029
  %2461 = vmatmul.mubr.f32.gmra.mrb[0].mxu0 %v2028
  %v2462 = vpop.f32.mrb[0].mxu0
  %v2463 = vadd.f32 0.0, %v2462
  %v2464 = vpop.f32.mrb[0].mxu0
  %v2465 = vadd.f32 0.0, %v2464
  %2466 = vmatprep.mubr.f32.mxu0 %v2056
  %2467 = vmatmul.mubr.f32.gmra.mrb[0].mxu0 %v2055
  %v2468 = vpop.f32.mrb[0].mxu0
  %v2469 = vadd.f32 0.0, %v2468
  %v2470 = vpop.f32.mrb[0].mxu0
  %v2471 = vadd.f32 0.0, %v2470
  %2472 = vmatprep.mubr.f32.mxu0 %v2083
  %2473 = vmatmul.mubr.f32.gmra.mrb[0].mxu0 %v2082
  %v2474 = vpop.f32.mrb[0].mxu0
  %v2475 = vpop.f32.mrb[0].mxu0
  %2476 = vdwg.mxu0
  %2477 = vmatprep.subr.mxu0 %v2279
  %2478 = vmatpush1.msra.mxu0 %v2278
  %2479 = vmatprep.subr.mxu0 %v2281
  %2480 = vmatpush1.msra.mxu0 %v2280
  %2481 = vmatprep.subr.mxu0 %v2283
  %2482 = vmatpush1.msra.mxu0 %v2282
  %2483 = vmatprep.subr.mxu0 %v2285
  %2484 = vmatpush1.msra.mxu0 %v2284
  %2485 = vmatprep.subr.mxu0 %v2287
  %2486 = vmatpush1.msra.mxu0 %v2286
  %2487 = vmatprep.subr.mxu0 %v2289
  %2488 = vmatpush1.msra.mxu0 %v2288
  %2489 = vmatprep.subr.mxu0 %v2291
  %2490 = vmatpush1.msra.mxu0 %v2290
  %2491 = vmatprep.subr.mxu0 %v2293
  %2492 = vmatpush1.msra.mxu0 %v2292
  %2493 = vmatprep.subr.mxu0 %v2295
  %2494 = vmatpush1.msra.mxu0 %v2294
  %2495 = vmatprep.subr.mxu0 %v2297
  %2496 = vmatpush1.msra.mxu0 %v2296
  %2497 = vmatprep.subr.mxu0 %v2299
  %2498 = vmatpush1.msra.mxu0 %v2298
  %2499 = vmatprep.subr.mxu0 %v2301
  %2500 = vmatpush1.msra.mxu0 %v2300
  %2501 = vmatprep.subr.mxu0 %v2303
  %2502 = vmatpush1.msra.mxu0 %v2302
  %2503 = vmatprep.subr.mxu0 %v2305
  %2504 = vmatpush1.msra.mxu0 %v2304
  %2505 = vmatprep.subr.mxu0 %v2307
  %2506 = vmatpush1.msra.mxu0 %v2306
  %2507 = vmatprep.subr.mxu0 %v2309
  %2508 = vmatpush1.msra.mxu0 %v2308
  %2509 = vmatprep.subr.mxu0 %v2311
  %2510 = vmatpush1.msra.mxu0 %v2310
  %2511 = vmatprep.subr.mxu0 %v2313
  %2512 = vmatpush1.msra.mxu0 %v2312
  %2513 = vmatprep.subr.mxu0 0.0
  %2514 = vmatpush1.msra.mxu0 0.0
  %2515 = vmatprep.subr.mxu0 0.0
  %2516 = vmatpush1.msra.mxu0 0.0
  %2517 = vmatprep.subr.mxu0 0.0
  %2518 = vmatpush1.msra.mxu0 0.0
  %2519 = vmatprep.subr.mxu0 0.0
  %2520 = vmatpush1.msra.mxu0 0.0
  %2521 = vmatprep.subr.mxu0 0.0
  %2522 = vmatpush1.msra.mxu0 0.0
  %2523 = vmatprep.subr.mxu0 0.0
  %2524 = vmatpush1.msra.mxu0 0.0
  %2525 = vmatprep.subr.mxu0 0.0
  %2526 = vmatpush1.msra.mxu0 0.0
  %2527 = vmatprep.subr.mxu0 0.0
  %2528 = vmatpush1.msra.mxu0 0.0
  %2529 = vmatprep.subr.mxu0 0.0
  %2530 = vmatpush1.msra.mxu0 0.0
  %2531 = vmatprep.subr.mxu0 0.0
  %2532 = vmatpush1.msra.mxu0 0.0
  %2533 = vmatprep.subr.mxu0 0.0
  %2534 = vmatpush1.msra.mxu0 0.0
  %2535 = vmatprep.subr.mxu0 0.0
  %2536 = vmatpush1.msra.mxu0 0.0
  %2537 = vmatprep.subr.mxu0 0.0
  %2538 = vmatpush1.msra.mxu0 0.0
  %2539 = vmatprep.subr.mxu0 0.0
  %2540 = vmatpush1.msra.mxu0 0.0
  %2541 = vmatprep.mubr.f32.mxu0 %v2316
  %2542 = vmatmul.mubr.f32.gmra.mrb[0].mxu0 %v1814
  %v2543 = vpop.f32.mrb[0].mxu0
  %v2544 = vadd.f32 %v2415, %v2543
  %v2545 = vpop.f32.mrb[0].mxu0
  %v2546 = vadd.f32 %v2417, %v2545
  %2547 = vmatprep.mubr.f32.mxu0 %v2319
  %2548 = vmatmul.mubr.f32.gmra.mrb[0].mxu0 %v1841
  %v2549 = vpop.f32.mrb[0].mxu0
  %v2550 = vadd.f32 %v2421, %v2549
  %v2551 = vpop.f32.mrb[0].mxu0
  %v2552 = vadd.f32 %v2423, %v2551
  %2553 = vmatprep.mubr.f32.mxu0 %v2322
  %2554 = vmatmul.mubr.f32.gmra.mrb[0].mxu0 %v1868
  %v2555 = vpop.f32.mrb[0].mxu0
  %v2556 = vadd.f32 %v2427, %v2555
  %v2557 = vpop.f32.mrb[0].mxu0
  %v2558 = vadd.f32 %v2429, %v2557
  %2559 = vmatprep.mubr.f32.mxu0 %v2325
  %2560 = vmatmul.mubr.f32.gmra.mrb[0].mxu0 %v1895
  %v2561 = vpop.f32.mrb[0].mxu0
  %v2562 = vadd.f32 %v2433, %v2561
  %v2563 = vpop.f32.mrb[0].mxu0
  %v2564 = vadd.f32 %v2435, %v2563
  %2565 = vmatprep.mubr.f32.mxu0 %v2328
  %2566 = vmatmul.mubr.f32.gmra.mrb[0].mxu0 %v1922
  %v2567 = vpop.f32.mrb[0].mxu0
  %v2568 = vadd.f32 %v2439, %v2567
  %v2569 = vpop.f32.mrb[0].mxu0
  %v2570 = vadd.f32 %v2441, %v2569
  %2571 = vmatprep.mubr.f32.mxu0 %v2331
  %2572 = vmatmul.mubr.f32.gmra.mrb[0].mxu0 %v1949
  %v2573 = vpop.f32.mrb[0].mxu0
  %v2574 = vadd.f32 %v2445, %v2573
  %v2575 = vpop.f32.mrb[0].mxu0
  %v2576 = vadd.f32 %v2447, %v2575
  %2577 = vmatprep.mubr.f32.mxu0 %v2334
  %2578 = vmatmul.mubr.f32.gmra.mrb[0].mxu0 %v1976
  %v2579 = vpop.f32.mrb[0].mxu0
  %v2580 = vadd.f32 %v2451, %v2579
  %v2581 = vpop.f32.mrb[0].mxu0
  %v2582 = vadd.f32 %v2453, %v2581
  %2583 = vmatprep.mubr.f32.mxu0 %v2337
  %2584 = vmatmul.mubr.f32.gmra.mrb[0].mxu0 %v2003
  %v2585 = vpop.f32.mrb[0].mxu0
  %v2586 = vadd.f32 %v2457, %v2585
  %v2587 = vpop.f32.mrb[0].mxu0
  %v2588 = vadd.f32 %v2459, %v2587
  %2589 = vmatprep.mubr.f32.mxu0 %v2340
  %2590 = vmatmul.mubr.f32.gmra.mrb[0].mxu0 %v2030
  %v2591 = vpop.f32.mrb[0].mxu0
  %v2592 = vadd.f32 %v2463, %v2591
  %v2593 = vpop.f32.mrb[0].mxu0
  %v2594 = vadd.f32 %v2465, %v2593
  %2595 = vmatprep.mubr.f32.mxu0 %v2343
  %2596 = vmatmul.mubr.f32.gmra.mrb[0].mxu0 %v2057
  %v2597 = vpop.f32.mrb[0].mxu0
  %v2598 = vadd.f32 %v2469, %v2597
  %v2599 = vpop.f32.mrb[0].mxu0
  %v2600 = vadd.f32 %v2471, %v2599
  %2601 = vmatprep.mubr.f32.mxu0 %v2346
  %2602 = vmatmul.mubr.f32.gmra.mrb[0].mxu0 %v2084
  %v2603 = vpop.f32.mrb[0].mxu0
  %v2604 = vpop.f32.mrb[0].mxu0
  %2605 = vdwg.mxu0
  %v2607 = vsel %vm2314, %v1788, 0
  %2609 = vmatprep.subr.mxu0 %v2114
  %2610 = vmatpush1.msra.mxu0 %v2113
  %2611 = vmatprep.subr.mxu0 %v2116
  %2612 = vmatpush1.msra.mxu0 %v2115
  %2613 = vmatprep.subr.mxu0 %v2118
  %2614 = vmatpush1.msra.mxu0 %v2117
  %2615 = vmatprep.subr.mxu0 %v2120
  %2616 = vmatpush1.msra.mxu0 %v2119
  %2617 = vmatprep.subr.mxu0 %v2122
  %2618 = vmatpush1.msra.mxu0 %v2121
  %2619 = vmatprep.subr.mxu0 %v2124
  %2620 = vmatpush1.msra.mxu0 %v2123
  %2621 = vmatprep.subr.mxu0 %v2126
  %2622 = vmatpush1.msra.mxu0 %v2125
  %2623 = vmatprep.subr.mxu0 %v2128
  %2624 = vmatpush1.msra.mxu0 %v2127
  %2625 = vmatprep.subr.mxu0 %v2130
  %2626 = vmatpush1.msra.mxu0 %v2129
  %2627 = vmatprep.subr.mxu0 %v2132
  %2628 = vmatpush1.msra.mxu0 %v2131
  %2629 = vmatprep.subr.mxu0 %v2134
  %2630 = vmatpush1.msra.mxu0 %v2133
  %2631 = vmatprep.subr.mxu0 %v2136
  %2632 = vmatpush1.msra.mxu0 %v2135
  %2633 = vmatprep.subr.mxu0 %v2138
  %2634 = vmatpush1.msra.mxu0 %v2137
  %2635 = vmatprep.subr.mxu0 %v2140
  %2636 = vmatpush1.msra.mxu0 %v2139
  %2637 = vmatprep.subr.mxu0 %v2142
  %2638 = vmatpush1.msra.mxu0 %v2141
  %2639 = vmatprep.subr.mxu0 %v2144
  %2640 = vmatpush1.msra.mxu0 %v2143
  %2641 = vmatprep.subr.mxu0 %v2146
  %2642 = vmatpush1.msra.mxu0 %v2145
  %2643 = vmatprep.subr.mxu0 %v2148
  %2644 = vmatpush1.msra.mxu0 %v2147
  %2645 = vmatprep.subr.mxu0 %v2150
  %2646 = vmatpush1.msra.mxu0 %v2149
  %2647 = vmatprep.subr.mxu0 %v2152
  %2648 = vmatpush1.msra.mxu0 %v2151
  %2649 = vmatprep.subr.mxu0 %v2154
  %2650 = vmatpush1.msra.mxu0 %v2153
  %2651 = vmatprep.subr.mxu0 %v2156
  %2652 = vmatpush1.msra.mxu0 %v2155
  %2653 = vmatprep.subr.mxu0 %v2158
  %2654 = vmatpush1.msra.mxu0 %v2157
  %2655 = vmatprep.subr.mxu0 %v2160
  %2656 = vmatpush1.msra.mxu0 %v2159
  %2657 = vmatprep.subr.mxu0 %v2162
  %2658 = vmatpush1.msra.mxu0 %v2161
  %2659 = vmatprep.subr.mxu0 %v2164
  %2660 = vmatpush1.msra.mxu0 %v2163
  %2661 = vmatprep.subr.mxu0 %v2166
  %2662 = vmatpush1.msra.mxu0 %v2165
  %2663 = vmatprep.subr.mxu0 %v2168
  %2664 = vmatpush1.msra.mxu0 %v2167
  %2665 = vmatprep.subr.mxu0 %v2170
  %2666 = vmatpush1.msra.mxu0 %v2169
  %2667 = vmatprep.subr.mxu0 %v2172
  %2668 = vmatpush1.msra.mxu0 %v2171
  %2669 = vmatprep.subr.mxu0 %v2174
  %2670 = vmatpush1.msra.mxu0 %v2173
  %2671 = vmatprep.subr.mxu0 %v2176
  %2672 = vmatpush1.msra.mxu0 %v2175
  %2673 = vmatprep.mubr.f32.mxu0 %v1786
  %2674 = vmatmul.mubr.f32.gmra.mrb[0].mxu0 %v1785
  %v2675 = vpop.f32.mrb[0].mxu0
  %v2676 = vadd.f32 %v2544, %v2675
  %v2677 = vpop.f32.mrb[0].mxu0
  %v2678 = vadd.f32 %v2546, %v2677
  %2679 = vmatprep.mubr.f32.mxu0 %v1813
  %2680 = vmatmul.mubr.f32.gmra.mrb[0].mxu0 %v1812
  %v2681 = vpop.f32.mrb[0].mxu0
  %v2682 = vadd.f32 %v2550, %v2681
  %v2683 = vpop.f32.mrb[0].mxu0
  %v2684 = vadd.f32 %v2552, %v2683
  %2685 = vmatprep.mubr.f32.mxu0 %v1840
  %2686 = vmatmul.mubr.f32.gmra.mrb[0].mxu0 %v1839
  %v2687 = vpop.f32.mrb[0].mxu0
  %v2688 = vadd.f32 %v2556, %v2687
  %v2689 = vpop.f32.mrb[0].mxu0
  %v2690 = vadd.f32 %v2558, %v2689
  %2691 = vmatprep.mubr.f32.mxu0 %v1867
  %2692 = vmatmul.mubr.f32.gmra.mrb[0].mxu0 %v1866
  %v2693 = vpop.f32.mrb[0].mxu0
  %v2694 = vadd.f32 %v2562, %v2693
  %v2695 = vpop.f32.mrb[0].mxu0
  %v2696 = vadd.f32 %v2564, %v2695
  %2697 = vmatprep.mubr.f32.mxu0 %v1894
  %2698 = vmatmul.mubr.f32.gmra.mrb[0].mxu0 %v1893
  %v2699 = vpop.f32.mrb[0].mxu0
  %v2700 = vadd.f32 %v2568, %v2699
  %v2701 = vpop.f32.mrb[0].mxu0
  %v2702 = vadd.f32 %v2570, %v2701
  %2703 = vmatprep.mubr.f32.mxu0 %v1921
  %2704 = vmatmul.mubr.f32.gmra.mrb[0].mxu0 %v1920
  %v2705 = vpop.f32.mrb[0].mxu0
  %v2706 = vadd.f32 %v2574, %v2705
  %v2707 = vpop.f32.mrb[0].mxu0
  %v2708 = vadd.f32 %v2576, %v2707
  %2709 = vmatprep.mubr.f32.mxu0 %v1948
  %2710 = vmatmul.mubr.f32.gmra.mrb[0].mxu0 %v1947
  %v2711 = vpop.f32.mrb[0].mxu0
  %v2712 = vadd.f32 %v2580, %v2711
  %v2713 = vpop.f32.mrb[0].mxu0
  %v2714 = vadd.f32 %v2582, %v2713
  %2715 = vmatprep.mubr.f32.mxu0 %v1975
  %2716 = vmatmul.mubr.f32.gmra.mrb[0].mxu0 %v1974
  %v2717 = vpop.f32.mrb[0].mxu0
  %v2718 = vadd.f32 %v2586, %v2717
  %v2719 = vpop.f32.mrb[0].mxu0
  %v2720 = vadd.f32 %v2588, %v2719
  %2721 = vmatprep.mubr.f32.mxu0 %v2002
  %2722 = vmatmul.mubr.f32.gmra.mrb[0].mxu0 %v2001
  %v2723 = vpop.f32.mrb[0].mxu0
  %v2724 = vadd.f32 %v2592, %v2723
  %v2725 = vpop.f32.mrb[0].mxu0
  %v2726 = vadd.f32 %v2594, %v2725
  %2727 = vmatprep.mubr.f32.mxu0 %v2029
  %2728 = vmatmul.mubr.f32.gmra.mrb[0].mxu0 %v2028
  %v2729 = vpop.f32.mrb[0].mxu0
  %v2730 = vadd.f32 %v2598, %v2729
  %v2731 = vpop.f32.mrb[0].mxu0
  %v2732 = vadd.f32 %v2600, %v2731
  %2733 = vmatprep.mubr.f32.mxu0 %v2056
  %2734 = vmatmul.mubr.f32.gmra.mrb[0].mxu0 %v2055
  %v2735 = vpop.f32.mrb[0].mxu0
  %v2736 = vpop.f32.mrb[0].mxu0
  %2737 = vdwg.mxu0
  %2738 = vmatprep.subr.mxu0 %v2178
  %2739 = vmatpush1.msra.mxu0 %v2177
  %2740 = vmatprep.subr.mxu0 %v2180
  %2741 = vmatpush1.msra.mxu0 %v2179
  %2742 = vmatprep.subr.mxu0 %v2182
  %2743 = vmatpush1.msra.mxu0 %v2181
  %2744 = vmatprep.subr.mxu0 %v2184
  %2745 = vmatpush1.msra.mxu0 %v2183
  %2746 = vmatprep.subr.mxu0 %v2186
  %2747 = vmatpush1.msra.mxu0 %v2185
  %2748 = vmatprep.subr.mxu0 %v2188
  %2749 = vmatpush1.msra.mxu0 %v2187
  %2750 = vmatprep.subr.mxu0 %v2190
  %2751 = vmatpush1.msra.mxu0 %v2189
  %2752 = vmatprep.subr.mxu0 %v2192
  %2753 = vmatpush1.msra.mxu0 %v2191
  %2754 = vmatprep.subr.mxu0 %v2194
  %2755 = vmatpush1.msra.mxu0 %v2193
  %2756 = vmatprep.subr.mxu0 %v2196
  %2757 = vmatpush1.msra.mxu0 %v2195
  %2758 = vmatprep.subr.mxu0 %v2198
  %2759 = vmatpush1.msra.mxu0 %v2197
  %2760 = vmatprep.subr.mxu0 %v2200
  %2761 = vmatpush1.msra.mxu0 %v2199
  %2762 = vmatprep.subr.mxu0 %v2202
  %2763 = vmatpush1.msra.mxu0 %v2201
  %2764 = vmatprep.subr.mxu0 %v2204
  %2765 = vmatpush1.msra.mxu0 %v2203
  %2766 = vmatprep.subr.mxu0 %v2206
  %2767 = vmatpush1.msra.mxu0 %v2205
  %2768 = vmatprep.subr.mxu0 %v2208
  %2769 = vmatpush1.msra.mxu0 %v2207
  %2770 = vmatprep.subr.mxu0 %v2210
  %2771 = vmatpush1.msra.mxu0 %v2209
  %2772 = vmatprep.subr.mxu0 %v2212
  %2773 = vmatpush1.msra.mxu0 %v2211
  %2774 = vmatprep.subr.mxu0 0.0
  %2775 = vmatpush1.msra.mxu0 0.0
  %2776 = vmatprep.subr.mxu0 0.0
  %2777 = vmatpush1.msra.mxu0 0.0
  %2778 = vmatprep.subr.mxu0 0.0
  %2779 = vmatpush1.msra.mxu0 0.0
  %2780 = vmatprep.subr.mxu0 0.0
  %2781 = vmatpush1.msra.mxu0 0.0
  %2782 = vmatprep.subr.mxu0 0.0
  %2783 = vmatpush1.msra.mxu0 0.0
  %2784 = vmatprep.subr.mxu0 0.0
  %2785 = vmatpush1.msra.mxu0 0.0
  %2786 = vmatprep.subr.mxu0 0.0
  %2787 = vmatpush1.msra.mxu0 0.0
  %2788 = vmatprep.subr.mxu0 0.0
  %2789 = vmatpush1.msra.mxu0 0.0
  %2790 = vmatprep.subr.mxu0 0.0
  %2791 = vmatpush1.msra.mxu0 0.0
  %2792 = vmatprep.subr.mxu0 0.0
  %2793 = vmatpush1.msra.mxu0 0.0
  %2794 = vmatprep.subr.mxu0 0.0
  %2795 = vmatpush1.msra.mxu0 0.0
  %2796 = vmatprep.subr.mxu0 0.0
  %2797 = vmatpush1.msra.mxu0 0.0
  %2798 = vmatprep.subr.mxu0 0.0
  %2799 = vmatpush1.msra.mxu0 0.0
  %2800 = vmatprep.subr.mxu0 0.0
  %2801 = vmatpush1.msra.mxu0 0.0
  %2802 = vmatprep.mubr.f32.mxu0 %v2607
  %2803 = vmatmul.mubr.f32.gmra.mrb[0].mxu0 %v1787
  %v2804 = vpop.f32.mrb[0].mxu0
  %v2805 = vadd.f32 %v2676, %v2804
  %v2806 = vpop.f32.mrb[0].mxu0
  %v2807 = vadd.f32 %v2678, %v2806
  %2808 = vmatprep.mubr.f32.mxu0 %v2316
  %2809 = vmatmul.mubr.f32.gmra.mrb[0].mxu0 %v1814
  %v2810 = vpop.f32.mrb[0].mxu0
  %v2811 = vadd.f32 %v2682, %v2810
  %v2812 = vpop.f32.mrb[0].mxu0
  %v2813 = vadd.f32 %v2684, %v2812
  %2814 = vmatprep.mubr.f32.mxu0 %v2319
  %2815 = vmatmul.mubr.f32.gmra.mrb[0].mxu0 %v1841
  %v2816 = vpop.f32.mrb[0].mxu0
  %v2817 = vadd.f32 %v2688, %v2816
  %v2818 = vpop.f32.mrb[0].mxu0
  %v2819 = vadd.f32 %v2690, %v2818
  %2820 = vmatprep.mubr.f32.mxu0 %v2322
  %2821 = vmatmul.mubr.f32.gmra.mrb[0].mxu0 %v1868
  %v2822 = vpop.f32.mrb[0].mxu0
  %v2823 = vadd.f32 %v2694, %v2822
  %v2824 = vpop.f32.mrb[0].mxu0
  %v2825 = vadd.f32 %v2696, %v2824
  %2826 = vmatprep.mubr.f32.mxu0 %v2325
  %2827 = vmatmul.mubr.f32.gmra.mrb[0].mxu0 %v1895
  %v2828 = vpop.f32.mrb[0].mxu0
  %v2829 = vadd.f32 %v2700, %v2828
  %v2830 = vpop.f32.mrb[0].mxu0
  %v2831 = vadd.f32 %v2702, %v2830
  %2832 = vmatprep.mubr.f32.mxu0 %v2328
  %2833 = vmatmul.mubr.f32.gmra.mrb[0].mxu0 %v1922
  %v2834 = vpop.f32.mrb[0].mxu0
  %v2835 = vadd.f32 %v2706, %v2834
  %v2836 = vpop.f32.mrb[0].mxu0
  %v2837 = vadd.f32 %v2708, %v2836
  %2838 = vmatprep.mubr.f32.mxu0 %v2331
  %2839 = vmatmul.mubr.f32.gmra.mrb[0].mxu0 %v1949
  %v2840 = vpop.f32.mrb[0].mxu0
  %v2841 = vadd.f32 %v2712, %v2840
  %v2842 = vpop.f32.mrb[0].mxu0
  %v2843 = vadd.f32 %v2714, %v2842
  %2844 = vmatprep.mubr.f32.mxu0 %v2334
  %2845 = vmatmul.mubr.f32.gmra.mrb[0].mxu0 %v1976
  %v2846 = vpop.f32.mrb[0].mxu0
  %v2847 = vadd.f32 %v2718, %v2846
  %v2848 = vpop.f32.mrb[0].mxu0
  %v2849 = vadd.f32 %v2720, %v2848
  %2850 = vmatprep.mubr.f32.mxu0 %v2337
  %2851 = vmatmul.mubr.f32.gmra.mrb[0].mxu0 %v2003
  %v2852 = vpop.f32.mrb[0].mxu0
  %v2853 = vadd.f32 %v2724, %v2852
  %v2854 = vpop.f32.mrb[0].mxu0
  %v2855 = vadd.f32 %v2726, %v2854
  %2856 = vmatprep.mubr.f32.mxu0 %v2340
  %2857 = vmatmul.mubr.f32.gmra.mrb[0].mxu0 %v2030
  %v2858 = vpop.f32.mrb[0].mxu0
  %v2859 = vadd.f32 %v2730, %v2858
  %v2860 = vpop.f32.mrb[0].mxu0
  %v2861 = vadd.f32 %v2732, %v2860
  %2862 = vmatprep.mubr.f32.mxu0 %v2343
  %2863 = vmatmul.mubr.f32.gmra.mrb[0].mxu0 %v2057
  %v2864 = vpop.f32.mrb[0].mxu0
  %v2865 = vpop.f32.mrb[0].mxu0
  %2866 = vdwg.mxu0
  %s2867 = scalar_lea.vmem %s2, 1600
  %v2868 = vld [vmem:[%s2867] sm:$0xff]
  %v2869 = vld [vmem:[%s2867 + $0x8] sm:$0xff]
  %v2870 = vld [vmem:[%s2867 + $0x10] sm:$0xff]
  %v2871 = vld [vmem:[%s2867 + $0x18] sm:$0xff]
  %v2872 = vld [vmem:[%s2867 + $0x20] sm:$0xff]
  %v2873 = vld [vmem:[%s2867 + $0x28] sm:$0xff]
  %v2874 = vld [vmem:[%s2867 + $0x30] sm:$0xff]
  %v2875 = vld [vmem:[%s2867 + $0x38] sm:$0xff]
  %v2876 = vld [vmem:[%s2867 + $0x40] sm:$0xff]
  %v2877 = vld [vmem:[%s2867 + $0x48] sm:$0xff]
  %v2878 = vld [vmem:[%s2867 + $0x50] sm:$0xff]
  %v2879 = vld [vmem:[%s2867 + $0x58] sm:$0xff]
  %v2880 = vld [vmem:[%s2867 + $0x60] sm:$0xff]
  %v2881 = vld [vmem:[%s2867 + $0x68] sm:$0xff]
  %v2882 = vld [vmem:[%s2867 + $0x70] sm:$0xff]
  %v2883 = vld [vmem:[%s2867 + $0x78] sm:$0xff]
  %v2884 = vld [vmem:[%s2867 + $0x80] sm:$0xff]
  %v2885 = vld [vmem:[%s2867 + $0x88] sm:$0xff]
  %v2886 = vld [vmem:[%s2867 + $0x90] sm:$0xff]
  %v2887 = vld [vmem:[%s2867 + $0x98] sm:$0xff]
  %v2888 = vld [vmem:[%s2867 + $0xa0] sm:$0xff]
  %v2889 = vld [vmem:[%s2867 + $0xa8] sm:$0xff]
  %v2890 = vld [vmem:[%s2867 + $0xb0] sm:$0xff]
  %v2891 = vld [vmem:[%s2867 + $0xb8] sm:$0xff]
  %v2892 = vld [vmem:[%s2867 + $0xc0] sm:$0xff]
  %v2893 = vld [vmem:[%s2867 + $0xc8] sm:$0xff]
  %v2894 = vld [vmem:[%s2867 + $0xd0] sm:$0xff]
  %v2895 = vld [vmem:[%s2867 + $0xd8] sm:$0xff]
  %v2896 = vld [vmem:[%s2867 + $0xe0] sm:$0xff]
  %v2897 = vld [vmem:[%s2867 + $0xe8] sm:$0xff]
  %v2898 = vld [vmem:[%s2867 + $0xf0] sm:$0xff]
  %v2899 = vld [vmem:[%s2867 + $0xf8] sm:$0xff]
  %v2900 = vld [vmem:[%s2867 + $0x100] sm:$0xff]
  %v2901 = vld [vmem:[%s2867 + $0x108] sm:$0xff]
  %v2902 = vld [vmem:[%s2867 + $0x110] sm:$0xff]
  %v2903 = vld [vmem:[%s2867 + $0x118] sm:$0xff]
  %v2904 = vld [vmem:[%s2867 + $0x120] sm:$0xff]
  %v2905 = vld [vmem:[%s2867 + $0x128] sm:$0xff]
  %v2906 = vld [vmem:[%s2867 + $0x130] sm:$0xff]
  %v2907 = vld [vmem:[%s2867 + $0x138] sm:$0xff]
  %v2908 = vld [vmem:[%s2867 + $0x140] sm:$0xff]
  %v2909 = vld [vmem:[%s2867 + $0x148] sm:$0xff]
  %v2910 = vld [vmem:[%s2867 + $0x150] sm:$0xff]
  %v2911 = vld [vmem:[%s2867 + $0x158] sm:$0xff]
  %v2912 = vld [vmem:[%s2867 + $0x160] sm:$0xff]
  %v2913 = vld [vmem:[%s2867 + $0x168] sm:$0xff]
  %v2914 = vld [vmem:[%s2867 + $0x170] sm:$0xff]
  %v2915 = vld [vmem:[%s2867 + $0x178] sm:$0xff]
  %v2916 = vld [vmem:[%s2867 + $0x180] sm:$0xff]
  %v2917 = vld [vmem:[%s2867 + $0x188] sm:$0xff]
  %v2918 = vld [vmem:[%s2867 + $0x190] sm:$0xff]
  %v2919 = vld [vmem:[%s2867 + $0x198] sm:$0xff]
  %v2920 = vld [vmem:[%s2867 + $0x1a0] sm:$0xff]
  %v2921 = vld [vmem:[%s2867 + $0x1a8] sm:$0xff]
  %v2922 = vld [vmem:[%s2867 + $0x1b0] sm:$0xff]
  %v2923 = vld [vmem:[%s2867 + $0x1b8] sm:$0xff]
  %v2924 = vld [vmem:[%s2867 + $0x1c0] sm:$0xff]
  %v2925 = vld [vmem:[%s2867 + $0x1c8] sm:$0xff]
  %v2926 = vld [vmem:[%s2867 + $0x1d0] sm:$0xff]
  %v2927 = vld [vmem:[%s2867 + $0x1d8] sm:$0xff]
  %v2928 = vld [vmem:[%s2867 + $0x1e0] sm:$0xff]
  %v2929 = vld [vmem:[%s2867 + $0x1e8] sm:$0xff]
  %v2930 = vld [vmem:[%s2867 + $0x1f0] sm:$0xff]
  %v2931 = vld [vmem:[%s2867 + $0x1f8] sm:$0xff]
  %v2932 = vld [vmem:[%s2867 + $0x200] sm:$0xff]
  %v2933 = vld [vmem:[%s2867 + $0x208] sm:$0xff]
  %v2934 = vld [vmem:[%s2867 + $0x210] sm:$0xff]
  %v2935 = vld [vmem:[%s2867 + $0x218] sm:$0xff]
  %v2936 = vld [vmem:[%s2867 + $0x220] sm:$0xff]
  %v2937 = vld [vmem:[%s2867 + $0x228] sm:$0xff]
  %v2938 = vld [vmem:[%s2867 + $0x230] sm:$0xff]
  %v2939 = vld [vmem:[%s2867 + $0x238] sm:$0xff]
  %v2940 = vld [vmem:[%s2867 + $0x240] sm:$0xff]
  %v2941 = vld [vmem:[%s2867 + $0x248] sm:$0xff]
  %v2942 = vld [vmem:[%s2867 + $0x250] sm:$0xff]
  %v2943 = vld [vmem:[%s2867 + $0x258] sm:$0xff]
  %v2944 = vld [vmem:[%s2867 + $0x260] sm:$0xff]
  %v2945 = vld [vmem:[%s2867 + $0x268] sm:$0xff]
  %v2946 = vld [vmem:[%s2867 + $0x270] sm:$0xff]
  %v2947 = vld [vmem:[%s2867 + $0x278] sm:$0xff]
  %v2948 = vld [vmem:[%s2867 + $0x280] sm:$0xff]
  %v2949 = vld [vmem:[%s2867 + $0x288] sm:$0xff]
  %v2950 = vld [vmem:[%s2867 + $0x290] sm:$0xff]
  %v2951 = vld [vmem:[%s2867 + $0x298] sm:$0xff]
  %v2952 = vld [vmem:[%s2867 + $0x2a0] sm:$0xff]
  %v2953 = vld [vmem:[%s2867 + $0x2a8] sm:$0xff]
  %v2954 = vld [vmem:[%s2867 + $0x2b0] sm:$0xff]
  %v2955 = vld [vmem:[%s2867 + $0x2b8] sm:$0xff]
  %v2956 = vld [vmem:[%s2867 + $0x2c0] sm:$0xff]
  %v2957 = vld [vmem:[%s2867 + $0x2c8] sm:$0xff]
  %v2958 = vld [vmem:[%s2867 + $0x2d0] sm:$0xff]
  %v2959 = vld [vmem:[%s2867 + $0x2d8] sm:$0xff]
  %v2960 = vld [vmem:[%s2867 + $0x2e0] sm:$0xff]
  %v2961 = vld [vmem:[%s2867 + $0x2e8] sm:$0xff]
  %v2962 = vld [vmem:[%s2867 + $0x2f0] sm:$0xff]
  %v2963 = vld [vmem:[%s2867 + $0x2f8] sm:$0xff]
  %v2964 = vld [vmem:[%s2867 + $0x300] sm:$0xff]
  %v2965 = vld [vmem:[%s2867 + $0x308] sm:$0xff]
  %v2966 = vld [vmem:[%s2867 + $0x310] sm:$0xff]
  %v2967 = vld [vmem:[%s2867 + $0x318] sm:$0xff]
  %v2969 = vsel %vm2314, %v2112, 0
  %2971 = vmatprep.subr.mxu0 %v2869
  %2972 = vmatpush1.msra.mxu0 %v2868
  %2973 = vmatprep.subr.mxu0 %v2871
  %2974 = vmatpush1.msra.mxu0 %v2870
  %2975 = vmatprep.subr.mxu0 %v2873
  %2976 = vmatpush1.msra.mxu0 %v2872
  %2977 = vmatprep.subr.mxu0 %v2875
  %2978 = vmatpush1.msra.mxu0 %v2874
  %2979 = vmatprep.subr.mxu0 %v2877
  %2980 = vmatpush1.msra.mxu0 %v2876
  %2981 = vmatprep.subr.mxu0 %v2879
  %2982 = vmatpush1.msra.mxu0 %v2878
  %2983 = vmatprep.subr.mxu0 %v2881
  %2984 = vmatpush1.msra.mxu0 %v2880
  %2985 = vmatprep.subr.mxu0 %v2883
  %2986 = vmatpush1.msra.mxu0 %v2882
  %2987 = vmatprep.subr.mxu0 %v2885
  %2988 = vmatpush1.msra.mxu0 %v2884
  %2989 = vmatprep.subr.mxu0 %v2887
  %2990 = vmatpush1.msra.mxu0 %v2886
  %2991 = vmatprep.subr.mxu0 %v2889
  %2992 = vmatpush1.msra.mxu0 %v2888
  %2993 = vmatprep.subr.mxu0 %v2891
  %2994 = vmatpush1.msra.mxu0 %v2890
  %2995 = vmatprep.subr.mxu0 %v2893
  %2996 = vmatpush1.msra.mxu0 %v2892
  %2997 = vmatprep.subr.mxu0 %v2895
  %2998 = vmatpush1.msra.mxu0 %v2894
  %2999 = vmatprep.subr.mxu0 %v2897
  %3000 = vmatpush1.msra.mxu0 %v2896
  %3001 = vmatprep.subr.mxu0 %v2899
  %3002 = vmatpush1.msra.mxu0 %v2898
  %3003 = vmatprep.subr.mxu0 %v2901
  %3004 = vmatpush1.msra.mxu0 %v2900
  %3005 = vmatprep.subr.mxu0 %v2903
  %3006 = vmatpush1.msra.mxu0 %v2902
  %3007 = vmatprep.subr.mxu0 %v2905
  %3008 = vmatpush1.msra.mxu0 %v2904
  %3009 = vmatprep.subr.mxu0 %v2907
  %3010 = vmatpush1.msra.mxu0 %v2906
  %3011 = vmatprep.subr.mxu0 %v2909
  %3012 = vmatpush1.msra.mxu0 %v2908
  %3013 = vmatprep.subr.mxu0 %v2911
  %3014 = vmatpush1.msra.mxu0 %v2910
  %3015 = vmatprep.subr.mxu0 %v2913
  %3016 = vmatpush1.msra.mxu0 %v2912
  %3017 = vmatprep.subr.mxu0 %v2915
  %3018 = vmatpush1.msra.mxu0 %v2914
  %3019 = vmatprep.subr.mxu0 %v2917
  %3020 = vmatpush1.msra.mxu0 %v2916
  %3021 = vmatprep.subr.mxu0 %v2919
  %3022 = vmatpush1.msra.mxu0 %v2918
  %3023 = vmatprep.subr.mxu0 %v2921
  %3024 = vmatpush1.msra.mxu0 %v2920
  %3025 = vmatprep.subr.mxu0 %v2923
  %3026 = vmatpush1.msra.mxu0 %v2922
  %3027 = vmatprep.subr.mxu0 %v2925
  %3028 = vmatpush1.msra.mxu0 %v2924
  %3029 = vmatprep.subr.mxu0 %v2927
  %3030 = vmatpush1.msra.mxu0 %v2926
  %3031 = vmatprep.subr.mxu0 %v2929
  %3032 = vmatpush1.msra.mxu0 %v2928
  %3033 = vmatprep.subr.mxu0 %v2931
  %3034 = vmatpush1.msra.mxu0 %v2930
  %3035 = vmatprep.mubr.f32.mxu0 %v1840
  %3036 = vmatmul.mubr.f32.gmra.mrb[0].mxu0 %v1839
  %v3037 = vpop.f32.mrb[0].mxu0
  %v3038 = vadd.f32 0.0, %v3037
  %v3039 = vpop.f32.mrb[0].mxu0
  %v3040 = vadd.f32 0.0, %v3039
  %3041 = vmatprep.mubr.f32.mxu0 %v1867
  %3042 = vmatmul.mubr.f32.gmra.mrb[0].mxu0 %v1866
  %v3043 = vpop.f32.mrb[0].mxu0
  %v3044 = vadd.f32 0.0, %v3043
  %v3045 = vpop.f32.mrb[0].mxu0
  %v3046 = vadd.f32 0.0, %v3045
  %3047 = vmatprep.mubr.f32.mxu0 %v1894
  %3048 = vmatmul.mubr.f32.gmra.mrb[0].mxu0 %v1893
  %v3049 = vpop.f32.mrb[0].mxu0
  %v3050 = vadd.f32 0.0, %v3049
  %v3051 = vpop.f32.mrb[0].mxu0
  %v3052 = vadd.f32 0.0, %v3051
  %3053 = vmatprep.mubr.f32.mxu0 %v1921
  %3054 = vmatmul.mubr.f32.gmra.mrb[0].mxu0 %v1920
  %v3055 = vpop.f32.mrb[0].mxu0
  %v3056 = vadd.f32 0.0, %v3055
  %v3057 = vpop.f32.mrb[0].mxu0
  %v3058 = vadd.f32 0.0, %v3057
  %3059 = vmatprep.mubr.f32.mxu0 %v1948
  %3060 = vmatmul.mubr.f32.gmra.mrb[0].mxu0 %v1947
  %v3061 = vpop.f32.mrb[0].mxu0
  %v3062 = vadd.f32 0.0, %v3061
  %v3063 = vpop.f32.mrb[0].mxu0
  %v3064 = vadd.f32 0.0, %v3063
  %3065 = vmatprep.mubr.f32.mxu0 %v1975
  %3066 = vmatmul.mubr.f32.gmra.mrb[0].mxu0 %v1974
  %v3067 = vpop.f32.mrb[0].mxu0
  %v3068 = vadd.f32 0.0, %v3067
  %v3069 = vpop.f32.mrb[0].mxu0
  %v3070 = vadd.f32 0.0, %v3069
  %3071 = vmatprep.mubr.f32.mxu0 %v2002
  %3072 = vmatmul.mubr.f32.gmra.mrb[0].mxu0 %v2001
  %v3073 = vpop.f32.mrb[0].mxu0
  %v3074 = vadd.f32 0.0, %v3073
  %v3075 = vpop.f32.mrb[0].mxu0
  %v3076 = vadd.f32 0.0, %v3075
  %3077 = vmatprep.mubr.f32.mxu0 %v2029
  %3078 = vmatmul.mubr.f32.gmra.mrb[0].mxu0 %v2028
  %v3079 = vpop.f32.mrb[0].mxu0
  %v3080 = vadd.f32 0.0, %v3079
  %v3081 = vpop.f32.mrb[0].mxu0
  %v3082 = vadd.f32 0.0, %v3081
  %3083 = vmatprep.mubr.f32.mxu0 %v2056
  %3084 = vmatmul.mubr.f32.gmra.mrb[0].mxu0 %v2055
  %v3085 = vpop.f32.mrb[0].mxu0
  %v3086 = vadd.f32 0.0, %v3085
  %v3087 = vpop.f32.mrb[0].mxu0
  %v3088 = vadd.f32 0.0, %v3087
  %3089 = vmatprep.mubr.f32.mxu0 %v2083
  %3090 = vmatmul.mubr.f32.gmra.mrb[0].mxu0 %v2082
  %v3091 = vpop.f32.mrb[0].mxu0
  %v3092 = vadd.f32 0.0, %v3091
  %v3093 = vpop.f32.mrb[0].mxu0
  %v3094 = vadd.f32 0.0, %v3093
  %3095 = vmatprep.mubr.f32.mxu0 %v2110
  %3096 = vmatmul.mubr.f32.gmra.mrb[0].mxu0 %v2109
  %v3097 = vpop.f32.mrb[0].mxu0
  %v3098 = vpop.f32.mrb[0].mxu0
  %3099 = vdwg.mxu0
  %3100 = vmatprep.subr.mxu0 %v2933
  %3101 = vmatpush1.msra.mxu0 %v2932
  %3102 = vmatprep.subr.mxu0 %v2935
  %3103 = vmatpush1.msra.mxu0 %v2934
  %3104 = vmatprep.subr.mxu0 %v2937
  %3105 = vmatpush1.msra.mxu0 %v2936
  %3106 = vmatprep.subr.mxu0 %v2939
  %3107 = vmatpush1.msra.mxu0 %v2938
  %3108 = vmatprep.subr.mxu0 %v2941
  %3109 = vmatpush1.msra.mxu0 %v2940
  %3110 = vmatprep.subr.mxu0 %v2943
  %3111 = vmatpush1.msra.mxu0 %v2942
  %3112 = vmatprep.subr.mxu0 %v2945
  %3113 = vmatpush1.msra.mxu0 %v2944
  %3114 = vmatprep.subr.mxu0 %v2947
  %3115 = vmatpush1.msra.mxu0 %v2946
  %3116 = vmatprep.subr.mxu0 %v2949
  %3117 = vmatpush1.msra.mxu0 %v2948
  %3118 = vmatprep.subr.mxu0 %v2951
  %3119 = vmatpush1.msra.mxu0 %v2950
  %3120 = vmatprep.subr.mxu0 %v2953
  %3121 = vmatpush1.msra.mxu0 %v2952
  %3122 = vmatprep.subr.mxu0 %v2955
  %3123 = vmatpush1.msra.mxu0 %v2954
  %3124 = vmatprep.subr.mxu0 %v2957
  %3125 = vmatpush1.msra.mxu0 %v2956
  %3126 = vmatprep.subr.mxu0 %v2959
  %3127 = vmatpush1.msra.mxu0 %v2958
  %3128 = vmatprep.subr.mxu0 %v2961
  %3129 = vmatpush1.msra.mxu0 %v2960
  %3130 = vmatprep.subr.mxu0 %v2963
  %3131 = vmatpush1.msra.mxu0 %v2962
  %3132 = vmatprep.subr.mxu0 %v2965
  %3133 = vmatpush1.msra.mxu0 %v2964
  %3134 = vmatprep.subr.mxu0 %v2967
  %3135 = vmatpush1.msra.mxu0 %v2966
  %3136 = vmatprep.subr.mxu0 0.0
  %3137 = vmatpush1.msra.mxu0 0.0
  %3138 = vmatprep.subr.mxu0 0.0
  %3139 = vmatpush1.msra.mxu0 0.0
  %3140 = vmatprep.subr.mxu0 0.0
  %3141 = vmatpush1.msra.mxu0 0.0
  %3142 = vmatprep.subr.mxu0 0.0
  %3143 = vmatpush1.msra.mxu0 0.0
  %3144 = vmatprep.subr.mxu0 0.0
  %3145 = vmatpush1.msra.mxu0 0.0
  %3146 = vmatprep.subr.mxu0 0.0
  %3147 = vmatpush1.msra.mxu0 0.0
  %3148 = vmatprep.subr.mxu0 0.0
  %3149 = vmatpush1.msra.mxu0 0.0
  %3150 = vmatprep.subr.mxu0 0.0
  %3151 = vmatpush1.msra.mxu0 0.0
  %3152 = vmatprep.subr.mxu0 0.0
  %3153 = vmatpush1.msra.mxu0 0.0
  %3154 = vmatprep.subr.mxu0 0.0
  %3155 = vmatpush1.msra.mxu0 0.0
  %3156 = vmatprep.subr.mxu0 0.0
  %3157 = vmatpush1.msra.mxu0 0.0
  %3158 = vmatprep.subr.mxu0 0.0
  %3159 = vmatpush1.msra.mxu0 0.0
  %3160 = vmatprep.subr.mxu0 0.0
  %3161 = vmatpush1.msra.mxu0 0.0
  %3162 = vmatprep.subr.mxu0 0.0
  %3163 = vmatpush1.msra.mxu0 0.0
  %3164 = vmatprep.mubr.f32.mxu0 %v2319
  %3165 = vmatmul.mubr.f32.gmra.mrb[0].mxu0 %v1841
  %v3166 = vpop.f32.mrb[0].mxu0
  %v3167 = vadd.f32 %v3038, %v3166
  %v3168 = vpop.f32.mrb[0].mxu0
  %v3169 = vadd.f32 %v3040, %v3168
  %3170 = vmatprep.mubr.f32.mxu0 %v2322
  %3171 = vmatmul.mubr.f32.gmra.mrb[0].mxu0 %v1868
  %v3172 = vpop.f32.mrb[0].mxu0
  %v3173 = vadd.f32 %v3044, %v3172
  %v3174 = vpop.f32.mrb[0].mxu0
  %v3175 = vadd.f32 %v3046, %v3174
  %3176 = vmatprep.mubr.f32.mxu0 %v2325
  %3177 = vmatmul.mubr.f32.gmra.mrb[0].mxu0 %v1895
  %v3178 = vpop.f32.mrb[0].mxu0
  %v3179 = vadd.f32 %v3050, %v3178
  %v3180 = vpop.f32.mrb[0].mxu0
  %v3181 = vadd.f32 %v3052, %v3180
  %3182 = vmatprep.mubr.f32.mxu0 %v2328
  %3183 = vmatmul.mubr.f32.gmra.mrb[0].mxu0 %v1922
  %v3184 = vpop.f32.mrb[0].mxu0
  %v3185 = vadd.f32 %v3056, %v3184
  %v3186 = vpop.f32.mrb[0].mxu0
  %v3187 = vadd.f32 %v3058, %v3186
  %3188 = vmatprep.mubr.f32.mxu0 %v2331
  %3189 = vmatmul.mubr.f32.gmra.mrb[0].mxu0 %v1949
  %v3190 = vpop.f32.mrb[0].mxu0
  %v3191 = vadd.f32 %v3062, %v3190
  %v3192 = vpop.f32.mrb[0].mxu0
  %v3193 = vadd.f32 %v3064, %v3192
  %3194 = vmatprep.mubr.f32.mxu0 %v2334
  %3195 = vmatmul.mubr.f32.gmra.mrb[0].mxu0 %v1976
  %v3196 = vpop.f32.mrb[0].mxu0
  %v3197 = vadd.f32 %v3068, %v3196
  %v3198 = vpop.f32.mrb[0].mxu0
  %v3199 = vadd.f32 %v3070, %v3198
  %3200 = vmatprep.mubr.f32.mxu0 %v2337
  %3201 = vmatmul.mubr.f32.gmra.mrb[0].mxu0 %v2003
  %v3202 = vpop.f32.mrb[0].mxu0
  %v3203 = vadd.f32 %v3074, %v3202
  %v3204 = vpop.f32.mrb[0].mxu0
  %v3205 = vadd.f32 %v3076, %v3204
  %3206 = vmatprep.mubr.f32.mxu0 %v2340
  %3207 = vmatmul.mubr.f32.gmra.mrb[0].mxu0 %v2030
  %v3208 = vpop.f32.mrb[0].mxu0
  %v3209 = vadd.f32 %v3080, %v3208
  %v3210 = vpop.f32.mrb[0].mxu0
  %v3211 = vadd.f32 %v3082, %v3210
  %3212 = vmatprep.mubr.f32.mxu0 %v2343
  %3213 = vmatmul.mubr.f32.gmra.mrb[0].mxu0 %v2057
  %v3214 = vpop.f32.mrb[0].mxu0
  %v3215 = vadd.f32 %v3086, %v3214
  %v3216 = vpop.f32.mrb[0].mxu0
  %v3217 = vadd.f32 %v3088, %v3216
  %3218 = vmatprep.mubr.f32.mxu0 %v2346
  %3219 = vmatmul.mubr.f32.gmra.mrb[0].mxu0 %v2084
  %v3220 = vpop.f32.mrb[0].mxu0
  %v3221 = vadd.f32 %v3092, %v3220
  %v3222 = vpop.f32.mrb[0].mxu0
  %v3223 = vadd.f32 %v3094, %v3222
  %3224 = vmatprep.mubr.f32.mxu0 %v2969
  %3225 = vmatmul.mubr.f32.gmra.mrb[0].mxu0 %v2111
  %v3226 = vpop.f32.mrb[0].mxu0
  %v3227 = vpop.f32.mrb[0].mxu0
  %3228 = vdwg.mxu0
  %v3229 = vadd.f32 %v2805, %v3167
  %v3230 = vadd.f32 %v2807, %v3169
  %v3231 = vadd.f32 %v2811, %v3173
  %v3232 = vadd.f32 %v2813, %v3175
  %v3233 = vadd.f32 %v2817, %v3179
  %v3234 = vadd.f32 %v2819, %v3181
  %v3235 = vadd.f32 %v2823, %v3185
  %v3236 = vadd.f32 %v2825, %v3187
  %v3237 = vadd.f32 %v2829, %v3191
  %v3238 = vadd.f32 %v2831, %v3193
  %v3239 = vadd.f32 %v2835, %v3197
  %v3240 = vadd.f32 %v2837, %v3199
  %v3241 = vadd.f32 %v2841, %v3203
  %v3242 = vadd.f32 %v2843, %v3205
  %v3243 = vadd.f32 %v2847, %v3209
  %v3244 = vadd.f32 %v2849, %v3211
  %v3245 = vadd.f32 %v2853, %v3215
  %v3246 = vadd.f32 %v2855, %v3217
  %v3247 = vadd.f32 %v2859, %v3221
  %v3248 = vadd.f32 %v2861, %v3223
  %v3250 = vlaneseq
  %v3251 = vshrl.u32 %v3250, 7
  %v3252 = vsub.s32 0, %v3251
  %v3253 = vrot.slane %v26, %v3252
  %v3254 = vlaneseq
  %v3255 = vshrl.u32 %v3254, 7
  %v3256 = vsub.s32 4, %v3255
  %v3257 = vrot.slane %v26, %v3256
  %v3260 = vlaneseq
  %v3261 = vshrl.u32 %v3260, 7
  %v3262 = vsub.s32 0, %v3261
  %v3263 = vrot.slane %v3253, %v3262
  %v3264 = vlaneseq
  %v3265 = vshrl.u32 %v3264, 7
  %v3266 = vsub.s32 0, %v3265
  %v3267 = vrot.slane %v3257, %v3266
  %v3268 = vadd.f32 %v3229, %v3263
  %v3269 = vadd.f32 %v3230, %v3267
  %v3270 = vadd.f32 %v3231, %v3263
  %v3271 = vadd.f32 %v3232, %v3267
  %v3272 = vadd.f32 %v3233, %v3263
  %v3273 = vadd.f32 %v3234, %v3267
  %v3274 = vadd.f32 %v3235, %v3263
  %v3275 = vadd.f32 %v3236, %v3267
  %v3276 = vadd.f32 %v3237, %v3263
  %v3277 = vadd.f32 %v3238, %v3267
  %v3278 = vadd.f32 %v3239, %v3263
  %v3279 = vadd.f32 %v3240, %v3267
  %v3280 = vadd.f32 %v3241, %v3263
  %v3281 = vadd.f32 %v3242, %v3267
  %v3282 = vadd.f32 %v3243, %v3263
  %v3283 = vadd.f32 %v3244, %v3267
  %v3284 = vadd.f32 %v3245, %v3263
  %v3285 = vadd.f32 %v3246, %v3267
  %v3286 = vadd.f32 %v3247, %v3263
  %v3287 = vadd.f32 %v3248, %v3267
  %v3288 = vmax.f32 %v3268, 0.0
  %v3289 = vmax.f32 %v3269, 0.0
  %v3290 = vmax.f32 %v3270, 0.0
  %v3291 = vmax.f32 %v3271, 0.0
  %v3292 = vmax.f32 %v3272, 0.0
  %v3293 = vmax.f32 %v3273, 0.0
  %v3294 = vmax.f32 %v3274, 0.0
  %v3295 = vmax.f32 %v3275, 0.0
  %v3296 = vmax.f32 %v3276, 0.0
  %v3297 = vmax.f32 %v3277, 0.0
  %v3298 = vmax.f32 %v3278, 0.0
  %v3299 = vmax.f32 %v3279, 0.0
  %v3300 = vmax.f32 %v3280, 0.0
  %v3301 = vmax.f32 %v3281, 0.0
  %v3302 = vmax.f32 %v3282, 0.0
  %v3303 = vmax.f32 %v3283, 0.0
  %v3304 = vmax.f32 %v3284, 0.0
  %v3305 = vmax.f32 %v3285, 0.0
  %v3306 = vmax.f32 %v3286, 0.0
  %v3307 = vmax.f32 %v3287, 0.0
  %v3308 = vmax.f32 %v3288, %v3290
  %v3309 = vmax.f32 %v3289, %v3291
  %3312 = vrot.lane.b32.xlu0 %v3308, 112
  %v3313 = vpop.permute.xlu0 %3312
  %3314 = vrot.lane.b32.xlu0 %v3309, 112
  %v3315 = vpop.permute.xlu0 %3314
  %v3316 = vsel %vm1777, %v3313, %v3315
  %v3319 = vmax.f32 %v3308, %v3316
  %v3320 = vmax.f32 %v3309, %v3315
  %v3321 = vmax.f32 %v3292, %v3294
  %v3322 = vmax.f32 %v3293, %v3295
  %3325 = vrot.lane.b32.xlu0 %v3321, 112
  %v3326 = vpop.permute.xlu0 %3325
  %3327 = vrot.lane.b32.xlu0 %v3322, 112
  %v3328 = vpop.permute.xlu0 %3327
  %v3329 = vsel %vm1777, %v3326, %v3328
  %v3332 = vmax.f32 %v3321, %v3329
  %v3333 = vmax.f32 %v3322, %v3328
  %v3334 = vmax.f32 %v3296, %v3298
  %v3335 = vmax.f32 %v3297, %v3299
  %3338 = vrot.lane.b32.xlu0 %v3334, 112
  %v3339 = vpop.permute.xlu0 %3338
  %3340 = vrot.lane.b32.xlu0 %v3335, 112
  %v3341 = vpop.permute.xlu0 %3340
  %v3342 = vsel %vm1777, %v3339, %v3341
  %v3345 = vmax.f32 %v3334, %v3342
  %v3346 = vmax.f32 %v3335, %v3341
  %v3347 = vmax.f32 %v3300, %v3302
  %v3348 = vmax.f32 %v3301, %v3303
  %3351 = vrot.lane.b32.xlu0 %v3347, 112
  %v3352 = vpop.permute.xlu0 %3351
  %3353 = vrot.lane.b32.xlu0 %v3348, 112
  %v3354 = vpop.permute.xlu0 %3353
  %v3355 = vsel %vm1777, %v3352, %v3354
  %v3358 = vmax.f32 %v3347, %v3355
  %v3359 = vmax.f32 %v3348, %v3354
  %v3360 = vmax.f32 %v3304, %v3306
  %v3361 = vmax.f32 %v3305, %v3307
  %3364 = vrot.lane.b32.xlu0 %v3360, 112
  %v3365 = vpop.permute.xlu0 %3364
  %3366 = vrot.lane.b32.xlu0 %v3361, 112
  %v3367 = vpop.permute.xlu0 %3366
  %v3368 = vsel %vm1777, %v3365, %v3367
  %v3371 = vmax.f32 %v3360, %v3368
  %v3372 = vmax.f32 %v3361, %v3367
  %v3373 = vld [vmem:[%s3] sm:$0xff]
  %v3374 = vld [vmem:[%s3 + $0x8] sm:$0xff]
  %v3375 = vld [vmem:[%s3 + $0x10] sm:$0xff]
  %v3376 = vld [vmem:[%s3 + $0x18] sm:$0xff]
  %v3377 = vld [vmem:[%s3 + $0x20] sm:$0xff]
  %v3378 = vld [vmem:[%s3 + $0x28] sm:$0xff]
  %v3379 = vld [vmem:[%s3 + $0x30] sm:$0xff]
  %v3380 = vld [vmem:[%s3 + $0x38] sm:$0xff]
  %v3381 = vld [vmem:[%s3 + $0x40] sm:$0xff]
  %v3382 = vld [vmem:[%s3 + $0x48] sm:$0xff]
  %v3383 = vld [vmem:[%s3 + $0x50] sm:$0xff]
  %v3384 = vld [vmem:[%s3 + $0x58] sm:$0xff]
  %v3385 = vld [vmem:[%s3 + $0x60] sm:$0xff]
  %v3386 = vld [vmem:[%s3 + $0x68] sm:$0xff]
  %v3387 = vld [vmem:[%s3 + $0x70] sm:$0xff]
  %v3388 = vld [vmem:[%s3 + $0x78] sm:$0xff]
  %v3389 = vld [vmem:[%s3 + $0x80] sm:$0xff]
  %v3390 = vld [vmem:[%s3 + $0x88] sm:$0xff]
  %v3391 = vld [vmem:[%s3 + $0x90] sm:$0xff]
  %v3392 = vld [vmem:[%s3 + $0x98] sm:$0xff]
  %s3393 = scalar_lea.vmem %s3, 160
  %v3394 = vld [vmem:[%s3393] sm:$0xff]
  %v3395 = vld [vmem:[%s3393 + $0x8] sm:$0xff]
  %v3396 = vld [vmem:[%s3393 + $0x10] sm:$0xff]
  %v3397 = vld [vmem:[%s3393 + $0x18] sm:$0xff]
  %v3398 = vld [vmem:[%s3393 + $0x20] sm:$0xff]
  %v3399 = vld [vmem:[%s3393 + $0x28] sm:$0xff]
  %v3400 = vld [vmem:[%s3393 + $0x30] sm:$0xff]
  %v3401 = vld [vmem:[%s3393 + $0x38] sm:$0xff]
  %v3402 = vld [vmem:[%s3393 + $0x40] sm:$0xff]
  %v3403 = vld [vmem:[%s3393 + $0x48] sm:$0xff]
  %v3404 = vld [vmem:[%s3393 + $0x50] sm:$0xff]
  %v3405 = vld [vmem:[%s3393 + $0x58] sm:$0xff]
  %v3406 = vld [vmem:[%s3393 + $0x60] sm:$0xff]
  %v3407 = vld [vmem:[%s3393 + $0x68] sm:$0xff]
  %v3408 = vld [vmem:[%s3393 + $0x70] sm:$0xff]
  %v3409 = vld [vmem:[%s3393 + $0x78] sm:$0xff]
  %v3410 = vld [vmem:[%s3393 + $0x80] sm:$0xff]
  %v3411 = vld [vmem:[%s3393 + $0x88] sm:$0xff]
  %v3412 = vld [vmem:[%s3393 + $0x90] sm:$0xff]
  %v3413 = vld [vmem:[%s3393 + $0x98] sm:$0xff]
  %vm3414 = vcmask 261120
  %v3416 = vsel %vm3414, %v3333, 0
  %v3419 = vsel %vm3414, %v3346, 0
  %v3422 = vsel %vm3414, %v3359, 0
  %3424 = vmatprep.subr.mxu0 0.0
  %3425 = vmatpush1.msra.mxu0 %v3394
  %3426 = vmatprep.subr.mxu0 0.0
  %3427 = vmatpush1.msra.mxu0 %v3395
  %3428 = vmatprep.subr.mxu0 0.0
  %3429 = vmatpush1.msra.mxu0 %v3396
  %3430 = vmatprep.subr.mxu0 0.0
  %3431 = vmatpush1.msra.mxu0 %v3397
  %3432 = vmatprep.subr.mxu0 0.0
  %3433 = vmatpush1.msra.mxu0 %v3398
  %3434 = vmatprep.subr.mxu0 0.0
  %3435 = vmatpush1.msra.mxu0 %v3399
  %3436 = vmatprep.subr.mxu0 0.0
  %3437 = vmatpush1.msra.mxu0 %v3400
  %3438 = vmatprep.subr.mxu0 0.0
  %3439 = vmatpush1.msra.mxu0 %v3401
  %3440 = vmatprep.subr.mxu0 0.0
  %3441 = vmatpush1.msra.mxu0 %v3402
  %3442 = vmatprep.subr.mxu0 0.0
  %3443 = vmatpush1.msra.mxu0 %v3403
  %3444 = vmatprep.subr.mxu0 0.0
  %3445 = vmatpush1.msra.mxu0 %v3404
  %3446 = vmatprep.subr.mxu0 0.0
  %3447 = vmatpush1.msra.mxu0 %v3405
  %3448 = vmatprep.subr.mxu0 0.0
  %3449 = vmatpush1.msra.mxu0 %v3406
  %3450 = vmatprep.subr.mxu0 0.0
  %3451 = vmatpush1.msra.mxu0 %v3407
  %3452 = vmatprep.subr.mxu0 0.0
  %3453 = vmatpush1.msra.mxu0 %v3408
  %3454 = vmatprep.subr.mxu0 0.0
  %3455 = vmatpush1.msra.mxu0 %v3409
  %3456 = vmatprep.subr.mxu0 0.0
  %3457 = vmatpush1.msra.mxu0 %v3410
  %3458 = vmatprep.subr.mxu0 0.0
  %3459 = vmatpush1.msra.mxu0 %v3411
  %3460 = vmatprep.subr.mxu0 0.0
  %3461 = vmatpush1.msra.mxu0 %v3412
  %3462 = vmatprep.subr.mxu0 0.0
  %3463 = vmatpush1.msra.mxu0 %v3413
  %3464 = vmatprep.subr.mxu0 0.0
  %3465 = vmatpush1.msra.mxu0 0.0
  %3466 = vmatprep.subr.mxu0 0.0
  %3467 = vmatpush1.msra.mxu0 0.0
  %3468 = vmatprep.subr.mxu0 0.0
  %3469 = vmatpush1.msra.mxu0 0.0
  %3470 = vmatprep.subr.mxu0 0.0
  %3471 = vmatpush1.msra.mxu0 0.0
  %3472 = vmatprep.subr.mxu0 0.0
  %3473 = vmatpush1.msra.mxu0 0.0
  %3474 = vmatprep.subr.mxu0 0.0
  %3475 = vmatpush1.msra.mxu0 0.0
  %3476 = vmatprep.subr.mxu0 0.0
  %3477 = vmatpush1.msra.mxu0 0.0
  %3478 = vmatprep.subr.mxu0 0.0
  %3479 = vmatpush1.msra.mxu0 0.0
  %3480 = vmatprep.subr.mxu0 0.0
  %3481 = vmatpush1.msra.mxu0 0.0
  %3482 = vmatprep.subr.mxu0 0.0
  %3483 = vmatpush1.msra.mxu0 0.0
  %3484 = vmatprep.subr.mxu0 0.0
  %3485 = vmatpush1.msra.mxu0 0.0
  %3486 = vmatprep.subr.mxu0 0.0
  %3487 = vmatpush1.msra.mxu0 0.0
  %3488 = vmatprep.mubr.f32.mxu0 %v3416
  %3489 = vmatmul.mubr.f32.gmra.mrb[0].mxu0 %v3332
  %v3490 = vpop.f32.mrb[0].mxu0
  %v3491 = vadd.f32 0.0, %v3490
  %v3492 = vpop.f32.mrb[0].mxu0
  %3493 = vmatprep.mubr.f32.mxu0 %v3419
  %3494 = vmatmul.mubr.f32.gmra.mrb[0].mxu0 %v3345
  %v3495 = vpop.f32.mrb[0].mxu0
  %v3496 = vadd.f32 0.0, %v3495
  %v3497 = vpop.f32.mrb[0].mxu0
  %3498 = vmatprep.mubr.f32.mxu0 %v3422
  %3499 = vmatmul.mubr.f32.gmra.mrb[0].mxu0 %v3358
  %v3500 = vpop.f32.mrb[0].mxu0
  %v3501 = vadd.f32 0.0, %v3500
  %v3502 = vpop.f32.mrb[0].mxu0
  %3503 = vdwg.mxu0
  %v3505 = vsel %vm3414, %v3320, 0
  %3507 = vmatprep.subr.mxu0 0.0
  %3508 = vmatpush1.msra.mxu0 %v3373
  %3509 = vmatprep.subr.mxu0 0.0
  %3510 = vmatpush1.msra.mxu0 %v3374
  %3511 = vmatprep.subr.mxu0 0.0
  %3512 = vmatpush1.msra.mxu0 %v3375
  %3513 = vmatprep.subr.mxu0 0.0
  %3514 = vmatpush1.msra.mxu0 %v3376
  %3515 = vmatprep.subr.mxu0 0.0
  %3516 = vmatpush1.msra.mxu0 %v3377
  %3517 = vmatprep.subr.mxu0 0.0
  %3518 = vmatpush1.msra.mxu0 %v3378
  %3519 = vmatprep.subr.mxu0 0.0
  %3520 = vmatpush1.msra.mxu0 %v3379
  %3521 = vmatprep.subr.mxu0 0.0
  %3522 = vmatpush1.msra.mxu0 %v3380
  %3523 = vmatprep.subr.mxu0 0.0
  %3524 = vmatpush1.msra.mxu0 %v3381
  %3525 = vmatprep.subr.mxu0 0.0
  %3526 = vmatpush1.msra.mxu0 %v3382
  %3527 = vmatprep.subr.mxu0 0.0
  %3528 = vmatpush1.msra.mxu0 %v3383
  %3529 = vmatprep.subr.mxu0 0.0
  %3530 = vmatpush1.msra.mxu0 %v3384
  %3531 = vmatprep.subr.mxu0 0.0
  %3532 = vmatpush1.msra.mxu0 %v3385
  %3533 = vmatprep.subr.mxu0 0.0
  %3534 = vmatpush1.msra.mxu0 %v3386
  %3535 = vmatprep.subr.mxu0 0.0
  %3536 = vmatpush1.msra.mxu0 %v3387
  %3537 = vmatprep.subr.mxu0 0.0
  %3538 = vmatpush1.msra.mxu0 %v3388
  %3539 = vmatprep.subr.mxu0 0.0
  %3540 = vmatpush1.msra.mxu0 %v3389
  %3541 = vmatprep.subr.mxu0 0.0
  %3542 = vmatpush1.msra.mxu0 %v3390
  %3543 = vmatprep.subr.mxu0 0.0
  %3544 = vmatpush1.msra.mxu0 %v3391
  %3545 = vmatprep.subr.mxu0 0.0
  %3546 = vmatpush1.msra.mxu0 %v3392
  %3547 = vmatprep.subr.mxu0 0.0
  %3548 = vmatpush1.msra.mxu0 0.0
  %3549 = vmatprep.subr.mxu0 0.0
  %3550 = vmatpush1.msra.mxu0 0.0
  %3551 = vmatprep.subr.mxu0 0.0
  %3552 = vmatpush1.msra.mxu0 0.0
  %3553 = vmatprep.subr.mxu0 0.0
  %3554 = vmatpush1.msra.mxu0 0.0
  %3555 = vmatprep.subr.mxu0 0.0
  %3556 = vmatpush1.msra.mxu0 0.0
  %3557 = vmatprep.subr.mxu0 0.0
  %3558 = vmatpush1.msra.mxu0 0.0
  %3559 = vmatprep.subr.mxu0 0.0
  %3560 = vmatpush1.msra.mxu0 0.0
  %3561 = vmatprep.subr.mxu0 0.0
  %3562 = vmatpush1.msra.mxu0 0.0
  %3563 = vmatprep.subr.mxu0 0.0
  %3564 = vmatpush1.msra.mxu0 0.0
  %3565 = vmatprep.subr.mxu0 0.0
  %3566 = vmatpush1.msra.mxu0 0.0
  %3567 = vmatprep.subr.mxu0 0.0
  %3568 = vmatpush1.msra.mxu0 0.0
  %3569 = vmatprep.subr.mxu0 0.0
  %3570 = vmatpush1.msra.mxu0 0.0
  %3571 = vmatprep.mubr.f32.mxu0 %v3505
  %3572 = vmatmul.mubr.f32.gmra.mrb[0].mxu0 %v3319
  %v3573 = vpop.f32.mrb[0].mxu0
  %v3574 = vadd.f32 %v3491, %v3573
  %v3575 = vpop.f32.mrb[0].mxu0
  %3576 = vmatprep.mubr.f32.mxu0 %v3416
  %3577 = vmatmul.mubr.f32.gmra.mrb[0].mxu0 %v3332
  %v3578 = vpop.f32.mrb[0].mxu0
  %v3579 = vadd.f32 %v3496, %v3578
  %v3580 = vpop.f32.mrb[0].mxu0
  %3581 = vmatprep.mubr.f32.mxu0 %v3419
  %3582 = vmatmul.mubr.f32.gmra.mrb[0].mxu0 %v3345
  %v3583 = vpop.f32.mrb[0].mxu0
  %v3584 = vadd.f32 %v3501, %v3583
  %v3585 = vpop.f32.mrb[0].mxu0
  %3586 = vdwg.mxu0
  %s3587 = scalar_lea.vmem %s3, 320
  %v3588 = vld [vmem:[%s3587] sm:$0xff]
  %v3589 = vld [vmem:[%s3587 + $0x8] sm:$0xff]
  %v3590 = vld [vmem:[%s3587 + $0x10] sm:$0xff]
  %v3591 = vld [vmem:[%s3587 + $0x18] sm:$0xff]
  %v3592 = vld [vmem:[%s3587 + $0x20] sm:$0xff]
  %v3593 = vld [vmem:[%s3587 + $0x28] sm:$0xff]
  %v3594 = vld [vmem:[%s3587 + $0x30] sm:$0xff]
  %v3595 = vld [vmem:[%s3587 + $0x38] sm:$0xff]
  %v3596 = vld [vmem:[%s3587 + $0x40] sm:$0xff]
  %v3597 = vld [vmem:[%s3587 + $0x48] sm:$0xff]
  %v3598 = vld [vmem:[%s3587 + $0x50] sm:$0xff]
  %v3599 = vld [vmem:[%s3587 + $0x58] sm:$0xff]
  %v3600 = vld [vmem:[%s3587 + $0x60] sm:$0xff]
  %v3601 = vld [vmem:[%s3587 + $0x68] sm:$0xff]
  %v3602 = vld [vmem:[%s3587 + $0x70] sm:$0xff]
  %v3603 = vld [vmem:[%s3587 + $0x78] sm:$0xff]
  %v3604 = vld [vmem:[%s3587 + $0x80] sm:$0xff]
  %v3605 = vld [vmem:[%s3587 + $0x88] sm:$0xff]
  %v3606 = vld [vmem:[%s3587 + $0x90] sm:$0xff]
  %v3607 = vld [vmem:[%s3587 + $0x98] sm:$0xff]
  %v3609 = vsel %vm3414, %v3372, 0
  %3611 = vmatprep.subr.mxu0 0.0
  %3612 = vmatpush1.msra.mxu0 %v3588
  %3613 = vmatprep.subr.mxu0 0.0
  %3614 = vmatpush1.msra.mxu0 %v3589
  %3615 = vmatprep.subr.mxu0 0.0
  %3616 = vmatpush1.msra.mxu0 %v3590
  %3617 = vmatprep.subr.mxu0 0.0
  %3618 = vmatpush1.msra.mxu0 %v3591
  %3619 = vmatprep.subr.mxu0 0.0
  %3620 = vmatpush1.msra.mxu0 %v3592
  %3621 = vmatprep.subr.mxu0 0.0
  %3622 = vmatpush1.msra.mxu0 %v3593
  %3623 = vmatprep.subr.mxu0 0.0
  %3624 = vmatpush1.msra.mxu0 %v3594
  %3625 = vmatprep.subr.mxu0 0.0
  %3626 = vmatpush1.msra.mxu0 %v3595
  %3627 = vmatprep.subr.mxu0 0.0
  %3628 = vmatpush1.msra.mxu0 %v3596
  %3629 = vmatprep.subr.mxu0 0.0
  %3630 = vmatpush1.msra.mxu0 %v3597
  %3631 = vmatprep.subr.mxu0 0.0
  %3632 = vmatpush1.msra.mxu0 %v3598
  %3633 = vmatprep.subr.mxu0 0.0
  %3634 = vmatpush1.msra.mxu0 %v3599
  %3635 = vmatprep.subr.mxu0 0.0
  %3636 = vmatpush1.msra.mxu0 %v3600
  %3637 = vmatprep.subr.mxu0 0.0
  %3638 = vmatpush1.msra.mxu0 %v3601
  %3639 = vmatprep.subr.mxu0 0.0
  %3640 = vmatpush1.msra.mxu0 %v3602
  %3641 = vmatprep.subr.mxu0 0.0
  %3642 = vmatpush1.msra.mxu0 %v3603
  %3643 = vmatprep.subr.mxu0 0.0
  %3644 = vmatpush1.msra.mxu0 %v3604
  %3645 = vmatprep.subr.mxu0 0.0
  %3646 = vmatpush1.msra.mxu0 %v3605
  %3647 = vmatprep.subr.mxu0 0.0
  %3648 = vmatpush1.msra.mxu0 %v3606
  %3649 = vmatprep.subr.mxu0 0.0
  %3650 = vmatpush1.msra.mxu0 %v3607
  %3651 = vmatprep.subr.mxu0 0.0
  %3652 = vmatpush1.msra.mxu0 0.0
  %3653 = vmatprep.subr.mxu0 0.0
  %3654 = vmatpush1.msra.mxu0 0.0
  %3655 = vmatprep.subr.mxu0 0.0
  %3656 = vmatpush1.msra.mxu0 0.0
  %3657 = vmatprep.subr.mxu0 0.0
  %3658 = vmatpush1.msra.mxu0 0.0
  %3659 = vmatprep.subr.mxu0 0.0
  %3660 = vmatpush1.msra.mxu0 0.0
  %3661 = vmatprep.subr.mxu0 0.0
  %3662 = vmatpush1.msra.mxu0 0.0
  %3663 = vmatprep.subr.mxu0 0.0
  %3664 = vmatpush1.msra.mxu0 0.0
  %3665 = vmatprep.subr.mxu0 0.0
  %3666 = vmatpush1.msra.mxu0 0.0
  %3667 = vmatprep.subr.mxu0 0.0
  %3668 = vmatpush1.msra.mxu0 0.0
  %3669 = vmatprep.subr.mxu0 0.0
  %3670 = vmatpush1.msra.mxu0 0.0
  %3671 = vmatprep.subr.mxu0 0.0
  %3672 = vmatpush1.msra.mxu0 0.0
  %3673 = vmatprep.subr.mxu0 0.0
  %3674 = vmatpush1.msra.mxu0 0.0
  %3675 = vmatprep.mubr.f32.mxu0 %v3419
  %3676 = vmatmul.mubr.f32.gmra.mrb[0].mxu0 %v3345
  %v3677 = vpop.f32.mrb[0].mxu0
  %v3678 = vadd.f32 0.0, %v3677
  %v3679 = vpop.f32.mrb[0].mxu0
  %3680 = vmatprep.mubr.f32.mxu0 %v3422
  %3681 = vmatmul.mubr.f32.gmra.mrb[0].mxu0 %v3358
  %v3682 = vpop.f32.mrb[0].mxu0
  %v3683 = vadd.f32 0.0, %v3682
  %v3684 = vpop.f32.mrb[0].mxu0
  %3685 = vmatprep.mubr.f32.mxu0 %v3609
  %3686 = vmatmul.mubr.f32.gmra.mrb[0].mxu0 %v3371
  %v3687 = vpop.f32.mrb[0].mxu0
  %v3688 = vadd.f32 0.0, %v3687
  %v3689 = vpop.f32.mrb[0].mxu0
  %3690 = vdwg.mxu0
  %v3691 = vadd.f32 %v3574, %v3678
  %v3692 = vadd.f32 %v3579, %v3683
  %v3693 = vadd.f32 %v3584, %v3688
  %v3694 = vlaneseq
  %v3695 = vshrl.u32 %v3694, 7
  %v3696 = vsub.s32 1, %v3695
  %v3697 = vrot.slane %v26, %v3696
  %v3698 = vadd.f32 %v3691, %v3697
  %v3699 = vadd.f32 %v3692, %v3697
  %v3700 = vadd.f32 %v3693, %v3697
  %v3701 = vmax.f32 %v3698, 0.0
  %v3702 = vmax.f32 %v3699, 0.0
  %v3703 = vmax.f32 %v3700, 0.0
  %v3704 = vld [vmem:[%s4] sm:$0xff]
  %v3705 = vld [vmem:[%s4 + $0x8] sm:$0xff]
  %v3706 = vld [vmem:[%s4 + $0x10] sm:$0xff]
  %v3707 = vld [vmem:[%s4 + $0x18] sm:$0xff]
  %v3708 = vld [vmem:[%s4 + $0x20] sm:$0xff]
  %v3709 = vld [vmem:[%s4 + $0x28] sm:$0xff]
  %s3710 = scalar_lea.vmem %s4, 48
  %v3711 = vld [vmem:[%s3710] sm:$0xff]
  %v3712 = vld [vmem:[%s3710 + $0x8] sm:$0xff]
  %v3713 = vld [vmem:[%s3710 + $0x10] sm:$0xff]
  %v3714 = vld [vmem:[%s3710 + $0x18] sm:$0xff]
  %v3715 = vld [vmem:[%s3710 + $0x20] sm:$0xff]
  %v3716 = vld [vmem:[%s3710 + $0x28] sm:$0xff]
  %vm3717 = vcmask 392192
  %v3719 = vsel %vm3717, %v3702, 0
  %3721 = vmatprep.subr.mxu0 0.0
  %3722 = vmatpush1.msra.mxu0 %v3711
  %3723 = vmatprep.subr.mxu0 0.0
  %3724 = vmatpush1.msra.mxu0 %v3712
  %3725 = vmatprep.subr.mxu0 0.0
  %3726 = vmatpush1.msra.mxu0 %v3713
  %3727 = vmatprep.subr.mxu0 0.0
  %3728 = vmatpush1.msra.mxu0 %v3714
  %3729 = vmatprep.subr.mxu0 0.0
  %3730 = vmatpush1.msra.mxu0 %v3715
  %3731 = vmatprep.subr.mxu0 0.0
  %3732 = vmatpush1.msra.mxu0 %v3716
  %3733 = vmatprep.subr.mxu0 0.0
  %3734 = vmatpush1.msra.mxu0 0.0
  %3735 = vmatprep.subr.mxu0 0.0
  %3736 = vmatpush1.msra.mxu0 0.0
  %3737 = vmatprep.subr.mxu0 0.0
  %3738 = vmatpush1.msra.mxu0 0.0
  %3739 = vmatprep.subr.mxu0 0.0
  %3740 = vmatpush1.msra.mxu0 0.0
  %3741 = vmatprep.subr.mxu0 0.0
  %3742 = vmatpush1.msra.mxu0 0.0
  %3743 = vmatprep.subr.mxu0 0.0
  %3744 = vmatpush1.msra.mxu0 0.0
  %3745 = vmatprep.subr.mxu0 0.0
  %3746 = vmatpush1.msra.mxu0 0.0
  %3747 = vmatprep.subr.mxu0 0.0
  %3748 = vmatpush1.msra.mxu0 0.0
  %3749 = vmatprep.subr.mxu0 0.0
  %3750 = vmatpush1.msra.mxu0 0.0
  %3751 = vmatprep.subr.mxu0 0.0
  %3752 = vmatpush1.msra.mxu0 0.0
  %3753 = vmatprep.subr.mxu0 0.0
  %3754 = vmatpush1.msra.mxu0 0.0
  %3755 = vmatprep.subr.mxu0 0.0
  %3756 = vmatpush1.msra.mxu0 0.0
  %3757 = vmatprep.subr.mxu0 0.0
  %3758 = vmatpush1.msra.mxu0 0.0
  %3759 = vmatprep.subr.mxu0 0.0
  %3760 = vmatpush1.msra.mxu0 0.0
  %3761 = vmatprep.subr.mxu0 0.0
  %3762 = vmatpush1.msra.mxu0 0.0
  %3763 = vmatprep.subr.mxu0 0.0
  %3764 = vmatpush1.msra.mxu0 0.0
  %3765 = vmatprep.subr.mxu0 0.0
  %3766 = vmatpush1.msra.mxu0 0.0
  %3767 = vmatprep.subr.mxu0 0.0
  %3768 = vmatpush1.msra.mxu0 0.0
  %3769 = vmatprep.subr.mxu0 0.0
  %3770 = vmatpush1.msra.mxu0 0.0
  %3771 = vmatprep.subr.mxu0 0.0
  %3772 = vmatpush1.msra.mxu0 0.0
  %3773 = vmatprep.subr.mxu0 0.0
  %3774 = vmatpush1.msra.mxu0 0.0
  %3775 = vmatprep.subr.mxu0 0.0
  %3776 = vmatpush1.msra.mxu0 0.0
  %3777 = vmatprep.subr.mxu0 0.0
  %3778 = vmatpush1.msra.mxu0 0.0
  %3779 = vmatprep.subr.mxu0 0.0
  %3780 = vmatpush1.msra.mxu0 0.0
  %3781 = vmatprep.subr.mxu0 0.0
  %3782 = vmatpush1.msra.mxu0 0.0
  %3783 = vmatprep.subr.mxu0 0.0
  %3784 = vmatpush1.msra.mxu0 0.0
  %3785 = vmatprep.mubr.f32.mxu0 0.0
  %3786 = vmatmul.mubr.f32.gmra.mrb[0].mxu0 %v3719
  %v3787 = vpop.f32.mrb[0].mxu0
  %v3788 = vadd.f32 0.0, %v3787
  %v3789 = vpop.f32.mrb[0].mxu0
  %3790 = vdwg.mxu0
  %v3792 = vsel %vm3717, %v3701, 0
  %3794 = vmatprep.subr.mxu0 0.0
  %3795 = vmatpush1.msra.mxu0 %v3704
  %3796 = vmatprep.subr.mxu0 0.0
  %3797 = vmatpush1.msra.mxu0 %v3705
  %3798 = vmatprep.subr.mxu0 0.0
  %3799 = vmatpush1.msra.mxu0 %v3706
  %3800 = vmatprep.subr.mxu0 0.0
  %3801 = vmatpush1.msra.mxu0 %v3707
  %3802 = vmatprep.subr.mxu0 0.0
  %3803 = vmatpush1.msra.mxu0 %v3708
  %3804 = vmatprep.subr.mxu0 0.0
  %3805 = vmatpush1.msra.mxu0 %v3709
  %3806 = vmatprep.subr.mxu0 0.0
  %3807 = vmatpush1.msra.mxu0 0.0
  %3808 = vmatprep.subr.mxu0 0.0
  %3809 = vmatpush1.msra.mxu0 0.0
  %3810 = vmatprep.subr.mxu0 0.0
  %3811 = vmatpush1.msra.mxu0 0.0
  %3812 = vmatprep.subr.mxu0 0.0
  %3813 = vmatpush1.msra.mxu0 0.0
  %3814 = vmatprep.subr.mxu0 0.0
  %3815 = vmatpush1.msra.mxu0 0.0
  %3816 = vmatprep.subr.mxu0 0.0
  %3817 = vmatpush1.msra.mxu0 0.0
  %3818 = vmatprep.subr.mxu0 0.0
  %3819 = vmatpush1.msra.mxu0 0.0
  %3820 = vmatprep.subr.mxu0 0.0
  %3821 = vmatpush1.msra.mxu0 0.0
  %3822 = vmatprep.subr.mxu0 0.0
  %3823 = vmatpush1.msra.mxu0 0.0
  %3824 = vmatprep.subr.mxu0 0.0
  %3825 = vmatpush1.msra.mxu0 0.0
  %3826 = vmatprep.subr.mxu0 0.0
  %3827 = vmatpush1.msra.mxu0 0.0
  %3828 = vmatprep.subr.mxu0 0.0
  %3829 = vmatpush1.msra.mxu0 0.0
  %3830 = vmatprep.subr.mxu0 0.0
  %3831 = vmatpush1.msra.mxu0 0.0
  %3832 = vmatprep.subr.mxu0 0.0
  %3833 = vmatpush1.msra.mxu0 0.0
  %3834 = vmatprep.subr.mxu0 0.0
  %3835 = vmatpush1.msra.mxu0 0.0
  %3836 = vmatprep.subr.mxu0 0.0
  %3837 = vmatpush1.msra.mxu0 0.0
  %3838 = vmatprep.subr.mxu0 0.0
  %3839 = vmatpush1.msra.mxu0 0.0
  %3840 = vmatprep.subr.mxu0 0.0
  %3841 = vmatpush1.msra.mxu0 0.0
  %3842 = vmatprep.subr.mxu0 0.0
  %3843 = vmatpush1.msra.mxu0 0.0
  %3844 = vmatprep.subr.mxu0 0.0
  %3845 = vmatpush1.msra.mxu0 0.0
  %3846 = vmatprep.subr.mxu0 0.0
  %3847 = vmatpush1.msra.mxu0 0.0
  %3848 = vmatprep.subr.mxu0 0.0
  %3849 = vmatpush1.msra.mxu0 0.0
  %3850 = vmatprep.subr.mxu0 0.0
  %3851 = vmatpush1.msra.mxu0 0.0
  %3852 = vmatprep.subr.mxu0 0.0
  %3853 = vmatpush1.msra.mxu0 0.0
  %3854 = vmatprep.subr.mxu0 0.0
  %3855 = vmatpush1.msra.mxu0 0.0
  %3856 = vmatprep.subr.mxu0 0.0
  %3857 = vmatpush1.msra.mxu0 0.0
  %3858 = vmatprep.mubr.f32.mxu0 0.0
  %3859 = vmatmul.mubr.f32.gmra.mrb[0].mxu0 %v3792
  %v3860 = vpop.f32.mrb[0].mxu0
  %v3861 = vadd.f32 %v3788, %v3860
  %v3862 = vpop.f32.mrb[0].mxu0
  %3863 = vdwg.mxu0
  %s3864 = scalar_lea.vmem %s4, 96
  %v3865 = vld [vmem:[%s3864] sm:$0xff]
  %v3866 = vld [vmem:[%s3864 + $0x8] sm:$0xff]
  %v3867 = vld [vmem:[%s3864 + $0x10] sm:$0xff]
  %v3868 = vld [vmem:[%s3864 + $0x18] sm:$0xff]
  %v3869 = vld [vmem:[%s3864 + $0x20] sm:$0xff]
  %v3870 = vld [vmem:[%s3864 + $0x28] sm:$0xff]
  %v3872 = vsel %vm3717, %v3703, 0
  %3874 = vmatprep.subr.mxu0 0.0
  %3875 = vmatpush1.msra.mxu0 %v3865
  %3876 = vmatprep.subr.mxu0 0.0
  %3877 = vmatpush1.msra.mxu0 %v3866
  %3878 = vmatprep.subr.mxu0 0.0
  %3879 = vmatpush1.msra.mxu0 %v3867
  %3880 = vmatprep.subr.mxu0 0.0
  %3881 = vmatpush1.msra.mxu0 %v3868
  %3882 = vmatprep.subr.mxu0 0.0
  %3883 = vmatpush1.msra.mxu0 %v3869
  %3884 = vmatprep.subr.mxu0 0.0
  %3885 = vmatpush1.msra.mxu0 %v3870
  %3886 = vmatprep.subr.mxu0 0.0
  %3887 = vmatpush1.msra.mxu0 0.0
  %3888 = vmatprep.subr.mxu0 0.0
  %3889 = vmatpush1.msra.mxu0 0.0
  %3890 = vmatprep.subr.mxu0 0.0
  %3891 = vmatpush1.msra.mxu0 0.0
  %3892 = vmatprep.subr.mxu0 0.0
  %3893 = vmatpush1.msra.mxu0 0.0
  %3894 = vmatprep.subr.mxu0 0.0
  %3895 = vmatpush1.msra.mxu0 0.0
  %3896 = vmatprep.subr.mxu0 0.0
  %3897 = vmatpush1.msra.mxu0 0.0
  %3898 = vmatprep.subr.mxu0 0.0
  %3899 = vmatpush1.msra.mxu0 0.0
  %3900 = vmatprep.subr.mxu0 0.0
  %3901 = vmatpush1.msra.mxu0 0.0
  %3902 = vmatprep.subr.mxu0 0.0
  %3903 = vmatpush1.msra.mxu0 0.0
  %3904 = vmatprep.subr.mxu0 0.0
  %3905 = vmatpush1.msra.mxu0 0.0
  %3906 = vmatprep.subr.mxu0 0.0
  %3907 = vmatpush1.msra.mxu0 0.0
  %3908 = vmatprep.subr.mxu0 0.0
  %3909 = vmatpush1.msra.mxu0 0.0
  %3910 = vmatprep.subr.mxu0 0.0
  %3911 = vmatpush1.msra.mxu0 0.0
  %3912 = vmatprep.subr.mxu0 0.0
  %3913 = vmatpush1.msra.mxu0 0.0
  %3914 = vmatprep.subr.mxu0 0.0
  %3915 = vmatpush1.msra.mxu0 0.0
  %3916 = vmatprep.subr.mxu0 0.0
  %3917 = vmatpush1.msra.mxu0 0.0
  %3918 = vmatprep.subr.mxu0 0.0
  %3919 = vmatpush1.msra.mxu0 0.0
  %3920 = vmatprep.subr.mxu0 0.0
  %3921 = vmatpush1.msra.mxu0 0.0
  %3922 = vmatprep.subr.mxu0 0.0
  %3923 = vmatpush1.msra.mxu0 0.0
  %3924 = vmatprep.subr.mxu0 0.0
  %3925 = vmatpush1.msra.mxu0 0.0
  %3926 = vmatprep.subr.mxu0 0.0
  %3927 = vmatpush1.msra.mxu0 0.0
  %3928 = vmatprep.subr.mxu0 0.0
  %3929 = vmatpush1.msra.mxu0 0.0
  %3930 = vmatprep.subr.mxu0 0.0
  %3931 = vmatpush1.msra.mxu0 0.0
  %3932 = vmatprep.subr.mxu0 0.0
  %3933 = vmatpush1.msra.mxu0 0.0
  %3934 = vmatprep.subr.mxu0 0.0
  %3935 = vmatpush1.msra.mxu0 0.0
  %3936 = vmatprep.subr.mxu0 0.0
  %3937 = vmatpush1.msra.mxu0 0.0
  %3938 = vmatprep.mubr.f32.mxu0 0.0
  %3939 = vmatmul.mubr.f32.gmra.mrb[0].mxu0 %v3872
  %v3940 = vpop.f32.mrb[0].mxu0
  %v3941 = vadd.f32 0.0, %v3940
  %v3942 = vpop.f32.mrb[0].mxu0
  %3943 = vdwg.mxu0
  %v3944 = vadd.f32 %v3861, %v3941
  %v3945 = vlaneseq
  %v3946 = vshrl.u32 %v3945, 7
  %v3947 = vsub.s32 2, %v3946
  %v3948 = vrot.slane %v26, %v3947
  %v3949 = vadd.f32 %v3944, %v3948
  %v3950 = vmax.f32 %v3949, 0.0
  %v3951 = vld [vmem:[%s5] sm:$0xff]
  %v3952 = vld [vmem:[%s5 + $0x8] sm:$0xff]
  %v3953 = vlaneseq
  %v3954 = vshrl.u32 %v3953, 7
  %v3955 = vsub.s32 3, %v3954
  %v3956 = vrot.slane %v26, %v3955
  %v3958 = vsel %vm2314, %v3950, 0
  %3960 = vmatprep.subr.mxu0 0.0
  %3961 = vmatpush1.msra.mxu0 %v3951
  %3962 = vmatprep.subr.mxu0 0.0
  %3963 = vmatpush1.msra.mxu0 %v3952
  %3964 = vmatprep.subr.mxu0 0.0
  %3965 = vmatpush1.msra.mxu0 0.0
  %3966 = vmatprep.subr.mxu0 0.0
  %3967 = vmatpush1.msra.mxu0 0.0
  %3968 = vmatprep.subr.mxu0 0.0
  %3969 = vmatpush1.msra.mxu0 0.0
  %3970 = vmatprep.subr.mxu0 0.0
  %3971 = vmatpush1.msra.mxu0 0.0
  %3972 = vmatprep.subr.mxu0 0.0
  %3973 = vmatpush1.msra.mxu0 0.0
  %3974 = vmatprep.subr.mxu0 0.0
  %3975 = vmatpush1.msra.mxu0 0.0
  %3976 = vmatprep.subr.mxu0 0.0
  %3977 = vmatpush1.msra.mxu0 0.0
  %3978 = vmatprep.subr.mxu0 0.0
  %3979 = vmatpush1.msra.mxu0 0.0
  %3980 = vmatprep.subr.mxu0 0.0
  %3981 = vmatpush1.msra.mxu0 0.0
  %3982 = vmatprep.subr.mxu0 0.0
  %3983 = vmatpush1.msra.mxu0 0.0
  %3984 = vmatprep.subr.mxu0 0.0
  %3985 = vmatpush1.msra.mxu0 0.0
  %3986 = vmatprep.subr.mxu0 0.0
  %3987 = vmatpush1.msra.mxu0 0.0
  %3988 = vmatprep.subr.mxu0 0.0
  %3989 = vmatpush1.msra.mxu0 0.0
  %3990 = vmatprep.subr.mxu0 0.0
  %3991 = vmatpush1.msra.mxu0 0.0
  %3992 = vmatprep.subr.mxu0 0.0
  %3993 = vmatpush1.msra.mxu0 0.0
  %3994 = vmatprep.subr.mxu0 0.0
  %3995 = vmatpush1.msra.mxu0 0.0
  %3996 = vmatprep.subr.mxu0 0.0
  %3997 = vmatpush1.msra.mxu0 0.0
  %3998 = vmatprep.subr.mxu0 0.0
  %3999 = vmatpush1.msra.mxu0 0.0
  %4000 = vmatprep.subr.mxu0 0.0
  %4001 = vmatpush1.msra.mxu0 0.0
  %4002 = vmatprep.subr.mxu0 0.0
  %4003 = vmatpush1.msra.mxu0 0.0
  %4004 = vmatprep.subr.mxu0 0.0
  %4005 = vmatpush1.msra.mxu0 0.0
  %4006 = vmatprep.subr.mxu0 0.0
  %4007 = vmatpush1.msra.mxu0 0.0
  %4008 = vmatprep.subr.mxu0 0.0
  %4009 = vmatpush1.msra.mxu0 0.0
  %4010 = vmatprep.subr.mxu0 0.0
  %4011 = vmatpush1.msra.mxu0 0.0
  %4012 = vmatprep.subr.mxu0 0.0
  %4013 = vmatpush1.msra.mxu0 0.0
  %4014 = vmatprep.subr.mxu0 0.0
  %4015 = vmatpush1.msra.mxu0 0.0
  %4016 = vmatprep.subr.mxu0 0.0
  %4017 = vmatpush1.msra.mxu0 0.0
  %4018 = vmatprep.subr.mxu0 0.0
  %4019 = vmatpush1.msra.mxu0 0.0
  %4020 = vmatprep.subr.mxu0 0.0
  %4021 = vmatpush1.msra.mxu0 0.0
  %4022 = vmatprep.subr.mxu0 0.0
  %4023 = vmatpush1.msra.mxu0 0.0
  %4024 = vmatprep.mubr.f32.mxu0 0.0
  %4025 = vmatmul.mubr.f32.gmra.mrb[0].mxu0 %v3958
  %v4026 = vpop.f32.mrb[0].mxu0
  %v4027 = vadd.f32 %v3956, %v4026
  %v4028 = vpop.f32.mrb[0].mxu0
  %4029 = vdwg.mxu0
  %v4030 = vmax.f32 %v4027, 0.0
  %vm4031 = vcmask 80896
  %v4032 = vsel %vm4031, %v4030, -inf
  %4033 = vmax.xlane.f32.xlu0 %v4032
  %v4034 = vpop.xlane.xlu0 %4033
  %v4035 = vsub.f32 %v4030, %v4034
  %v4036 = vmul.f32 %v4035, 1.442695
  %v4037 = vpow.pop %v4036
  %v4038 = vsel %vm4031, %v4037, 0.0
  %4039 = vadd.xlane.f32.xlu0 %v4038
  %v4040 = vpop.xlane.xlu0 %4039
  %v4041 = vlog2.pop %v4040
  %v4042 = vmul.f32 %v4041, 0.6931472
  %v4043 = vsub.f32 %v4035, %v4042
  %4044 = vst.msk [vmem:[%s7] sm:$0xff] %vm4031, %v4043
  // Predicated region
  $region30: #{model3_forward.1} parent=0 // pred_check
    _
  $region31: #{model3_forward.1} parent=0 // pred_check_branch
    %4046 = sbr.rel (0) target = $region33
  $region32: #{model3_forward.1} parent=0 // pred_region
    _
  $region33: #{model3_forward.1} parent=0 // pred_fallthru
    _
  // Predicated region
  $region34: #{model3_forward.1} parent=0 // pred_check
    _
  $region35: #{model3_forward.1} parent=0 // pred_check_branch
    %4048 = sbr.rel (0) target = $region37
  $region36: #{model3_forward.1} parent=0 // pred_region
    _
  $region37: #{model3_forward.1} parent=0 // pred_fallthru
    _

</llo_original>
